<compile_context>
chip_gen: v7x
topology: tpu7x:2x2x1
jax: 0.10.0
libtpu: 0.0.40
codegen_flags: <defaults>
</compile_context>

<pallas_src>
import functools
import math

import jax
import jax.numpy as jnp
from jax.experimental import pallas as pl
from jax.experimental.pallas import tpu as pltpu


# Tiling targets (fall back to full extent when the dim does not divide).
_TM = 512
_TN = 512
_TK = 512
_TH = 512   # d_hidden blocking for the fused FFN kernel


def _tile(dim, target):
    return target if dim % target == 0 else dim


def _round_up(x, m):
    return (x + m - 1) // m * m


@functools.lru_cache(maxsize=None)
def _vmem_limit_bytes():
    # Per-generation VMEM limit with headroom (v7x has only 64 MiB per TC).
    try:
        cap = getattr(pltpu.get_tpu_info(), "vmem_capacity_bytes", None)
    except Exception:  # pragma: no cover - defensive
        cap = None
    if cap is None:
        return 48 * 1024 * 1024
    return min((cap * 3) // 4, 100 * 1024 * 1024)


# -----------------------------------------------------------------------------
# Pallas kernels
# -----------------------------------------------------------------------------
def _linear_kernel(x_ref, w_ref, b_ref, o_ref, acc_ref):
    # Tiled o = x @ w + b, grid (M//tm, N//tn, K//tk), f32 accumulator.
    @pl.when(pl.program_id(2) == 0)
    def _():
        acc_ref[...] = jnp.zeros_like(acc_ref)

    acc_ref[...] += jnp.dot(x_ref[...], w_ref[...],
                            preferred_element_type=jnp.float32)

    @pl.when(pl.program_id(2) == pl.num_programs(2) - 1)
    def _():
        o_ref[...] = (acc_ref[...] + b_ref[...]).astype(o_ref.dtype)


def linear(x, w, b, *, out_dtype=None):
    M, K = x.shape
    N = w.shape[1]
    out_dtype = out_dtype or x.dtype
    tm, tn, tk = _tile(M, _TM), _tile(N, _TN), _tile(K, _TK)
    grid = (M // tm, N // tn, K // tk)
    flops = 2 * M * N * K
    bytes_accessed = (M * K * x.dtype.itemsize + K * N * w.dtype.itemsize
                      + M * N * jnp.dtype(out_dtype).itemsize + N * 4)
    return pl.pallas_call(
        _linear_kernel,
        out_shape=jax.ShapeDtypeStruct((M, N), out_dtype),
        grid_spec=pltpu.PrefetchScalarGridSpec(
            num_scalar_prefetch=0,
            grid=grid,
            in_specs=[
                pl.BlockSpec((tm, tk), lambda i, j, k: (i, k)),
                pl.BlockSpec((tk, tn), lambda i, j, k: (k, j)),
                pl.BlockSpec((1, tn), lambda i, j, k: (0, j)),
            ],
            out_specs=pl.BlockSpec((tm, tn), lambda i, j, k: (i, j)),
            scratch_shapes=[pltpu.VMEM((tm, tn), jnp.float32)],
        ),
        compiler_params=pltpu.CompilerParams(
            dimension_semantics=("parallel", "parallel", "arbitrary"),
            vmem_limit_bytes=_vmem_limit_bytes(),
        ),
        cost_estimate=pl.CostEstimate(
            flops=flops, transcendentals=0, bytes_accessed=bytes_accessed),
    )(x, w, b.reshape(1, N).astype(jnp.float32))


def _proj_add_ln_kernel(x_ref, w_ref, b_ref, res_ref, g_ref, beta_ref,
                        o_ref, acc_ref):
    # o = LayerNorm(x @ w + b + res) * g + beta ; K contraction is grid-tiled.
    @pl.when(pl.program_id(1) == 0)
    def _():
        acc_ref[...] = jnp.zeros_like(acc_ref)

    acc_ref[...] += jnp.dot(x_ref[...], w_ref[...],
                            preferred_element_type=jnp.float32)

    @pl.when(pl.program_id(1) == pl.num_programs(1) - 1)
    def _():
        y = acc_ref[...] + b_ref[...] + res_ref[...].astype(jnp.float32)
        mu = jnp.mean(y, axis=-1, keepdims=True)
        var = jnp.mean((y - mu) ** 2, axis=-1, keepdims=True)
        y = (y - mu) * jax.lax.rsqrt(var + 1e-5)
        o_ref[...] = (y * g_ref[...] + beta_ref[...]).astype(o_ref.dtype)


def proj_add_ln(x, w, b, res, gamma, beta):
    M, K = x.shape
    N = w.shape[1]
    tm = _tile(M, _TM)
    tk = _tile(K, _TK)
    grid = (M // tm, K // tk)
    return pl.pallas_call(
        _proj_add_ln_kernel,
        out_shape=jax.ShapeDtypeStruct((M, N), x.dtype),
        grid_spec=pltpu.PrefetchScalarGridSpec(
            num_scalar_prefetch=0,
            grid=grid,
            in_specs=[
                pl.BlockSpec((tm, tk), lambda i, k: (i, k)),
                pl.BlockSpec((tk, N), lambda i, k: (k, 0)),
                pl.BlockSpec((1, N), lambda i, k: (0, 0)),
                pl.BlockSpec((tm, N), lambda i, k: (i, 0)),
                pl.BlockSpec((1, N), lambda i, k: (0, 0)),
                pl.BlockSpec((1, N), lambda i, k: (0, 0)),
            ],
            out_specs=pl.BlockSpec((tm, N), lambda i, k: (i, 0)),
            scratch_shapes=[pltpu.VMEM((tm, N), jnp.float32)],
        ),
        compiler_params=pltpu.CompilerParams(
            dimension_semantics=("parallel", "arbitrary"),
            vmem_limit_bytes=_vmem_limit_bytes(),
        ),
        cost_estimate=pl.CostEstimate(
            flops=2 * M * K * N + 8 * M * N, transcendentals=M,
            bytes_accessed=2 * M * K * x.dtype.itemsize
            + K * N * w.dtype.itemsize + M * N * x.dtype.itemsize),
    )(x, w, b.reshape(1, N).astype(jnp.float32), res,
      gamma.reshape(1, N).astype(jnp.float32),
      beta.reshape(1, N).astype(jnp.float32))


def _ffn_add_ln_kernel(x_ref, w1_ref, b1_ref, w2_ref, b2_ref,
                       res_ref, g_ref, beta_ref, o_ref, acc_ref):
    # o = LayerNorm(relu(x @ w1 + b1) @ w2 + b2 + res) * g + beta
    # d_hidden is grid-blocked so w1/w2 chunks never have to be fully resident.
    @pl.when(pl.program_id(1) == 0)
    def _():
        acc_ref[...] = jnp.zeros_like(acc_ref)

    h = jnp.dot(x_ref[...], w1_ref[...], preferred_element_type=jnp.float32)
    # TODO(synk): ReLU output is rounded to bf16 before the second matmul
    #             (MXU-friendly; small deviation from an f32 nn.Transformer).
    h = jnp.maximum(h + b1_ref[...], 0.0).astype(w2_ref.dtype)
    acc_ref[...] += jnp.dot(h, w2_ref[...], preferred_element_type=jnp.float32)

    @pl.when(pl.program_id(1) == pl.num_programs(1) - 1)
    def _():
        y = acc_ref[...] + b2_ref[...] + res_ref[...].astype(jnp.float32)
        mu = jnp.mean(y, axis=-1, keepdims=True)
        var = jnp.mean((y - mu) ** 2, axis=-1, keepdims=True)
        y = (y - mu) * jax.lax.rsqrt(var + 1e-5)
        o_ref[...] = (y * g_ref[...] + beta_ref[...]).astype(o_ref.dtype)


def ffn_add_ln(x, w1, b1, w2, b2, res, gamma, beta):
    M, D = x.shape
    H = w1.shape[1]
    tm = _tile(M, _TM)
    th = _tile(H, _TH)
    grid = (M // tm, H // th)
    return pl.pallas_call(
        _ffn_add_ln_kernel,
        out_shape=jax.ShapeDtypeStruct((M, D), x.dtype),
        grid_spec=pltpu.PrefetchScalarGridSpec(
            num_scalar_prefetch=0,
            grid=grid,
            in_specs=[
                pl.BlockSpec((tm, D), lambda i, h: (i, 0)),   # fetched once per i
                pl.BlockSpec((D, th), lambda i, h: (0, h)),   # w1 chunk
                pl.BlockSpec((1, th), lambda i, h: (0, h)),
                pl.BlockSpec((th, D), lambda i, h: (h, 0)),   # w2 chunk
                pl.BlockSpec((1, D), lambda i, h: (0, 0)),
                pl.BlockSpec((tm, D), lambda i, h: (i, 0)),
                pl.BlockSpec((1, D), lambda i, h: (0, 0)),
                pl.BlockSpec((1, D), lambda i, h: (0, 0)),
            ],
            out_specs=pl.BlockSpec((tm, D), lambda i, h: (i, 0)),
            scratch_shapes=[pltpu.VMEM((tm, D), jnp.float32)],
        ),
        compiler_params=pltpu.CompilerParams(
            dimension_semantics=("parallel", "arbitrary"),
            vmem_limit_bytes=_vmem_limit_bytes(),
        ),
        cost_estimate=pl.CostEstimate(
            flops=4 * M * D * H + 8 * M * D, transcendentals=M,
            bytes_accessed=2 * M * D * x.dtype.itemsize
            + 2 * D * H * w1.dtype.itemsize + M * D * x.dtype.itemsize),
    )(x, w1, b1.reshape(1, H).astype(jnp.float32),
      w2, b2.reshape(1, D).astype(jnp.float32), res,
      gamma.reshape(1, D).astype(jnp.float32),
      beta.reshape(1, D).astype(jnp.float32))


def _mha_kernel(lens_ref, q_ref, k_ref, v_ref, o_ref, *, n_head, causal,
                use_len):
    # One batch per grid step; all heads processed here (lane-dense output).
    # Mask (padding lengths + causal) is generated in-kernel: no HBM bias.
    b = pl.program_id(0)
    D = q_ref.shape[-1]
    dk = D // n_head
    Lq = q_ref.shape[1]
    Lk = k_ref.shape[1]
    q = q_ref[0]          # 1/sqrt(dk) already folded into the Q weights
    k = k_ref[0]
    v = v_ref[0]

    mask = None
    if use_len or causal:
        col = jax.lax.broadcasted_iota(jnp.int32, (Lq, Lk), 1)
        if use_len:
            mask = col < lens_ref[b]
        if causal:
            row = jax.lax.broadcasted_iota(jnp.int32, (Lq, Lk), 0)
            cmask = col <= row
            mask = cmask if mask is None else (mask & cmask)

    neg = jnp.float32(-1e30)
    for h in range(n_head):
        lo = h * dk
        qh = jax.lax.slice_in_dim(q, lo, lo + dk, axis=1)
        kh = jax.lax.slice_in_dim(k, lo, lo + dk, axis=1)
        vh = jax.lax.slice_in_dim(v, lo, lo + dk, axis=1)
        # contract dk of q with dk of k directly (no k.T / XLU transpose)
        s = jax.lax.dot_general(qh, kh, (((1,), (1,)), ((), ())),
                                preferred_element_type=jnp.float32)
        if mask is not None:
            s = jnp.where(mask, s, neg)
        s = s - jnp.max(s, axis=-1, keepdims=True)
        p = jnp.exp(s)
        # exact reciprocal (approx=False) for closer parity with torch softmax
        p = p * pl.reciprocal(jnp.sum(p, axis=-1, keepdims=True), approx=False)
        oh = jnp.dot(p.astype(vh.dtype), vh, preferred_element_type=jnp.float32)
        # store per head directly (static lane offset) -> no concat / no spills
        o_ref[0, :, lo:lo + dk] = oh.astype(o_ref.dtype)


def mha(q_arr, kv_arr, kv_lens, *, d_model, n_head, q_block, k_block, v_block,
        causal, use_len):
    # q_arr: [B, Lq, >=D] slab containing Q at last-dim block `q_block`
    # kv_arr: [B, Lk, >=2D] slab containing K/V at blocks `k_block`/`v_block`
    # kv_lens: [B] int32 valid key lengths (scalar-prefetched to SMEM)
    B, Lq = q_arr.shape[0], q_arr.shape[1]
    Lk = kv_arr.shape[1]
    D = d_model
    kernel = functools.partial(_mha_kernel, n_head=n_head, causal=causal,
                               use_len=use_len)
    return pl.pallas_call(
        kernel,
        out_shape=jax.ShapeDtypeStruct((B, Lq, D), q_arr.dtype),
        grid_spec=pltpu.PrefetchScalarGridSpec(
            num_scalar_prefetch=1,
            grid=(B,),
            in_specs=[
                pl.BlockSpec((1, Lq, D), lambda b, lens, _q=q_block: (b, 0, _q)),
                pl.BlockSpec((1, Lk, D), lambda b, lens, _k=k_block: (b, 0, _k)),
                pl.BlockSpec((1, Lk, D), lambda b, lens, _v=v_block: (b, 0, _v)),
            ],
            out_specs=pl.BlockSpec((1, Lq, D), lambda b, lens: (b, 0, 0)),
        ),
        compiler_params=pltpu.CompilerParams(
            dimension_semantics=("parallel",),
            vmem_limit_bytes=_vmem_limit_bytes(),
        ),
        cost_estimate=pl.CostEstimate(
            flops=4 * B * Lq * Lk * D,
            transcendentals=B * n_head * Lq * Lk,
            bytes_accessed=(2 * B * Lq * D + 2 * B * Lk * D)
            * q_arr.dtype.itemsize + B * 4),
    )(kv_lens, q_arr, kv_arr, kv_arr)


# -----------------------------------------------------------------------------
# Model glue (plain JAX around the Pallas hot paths)
# -----------------------------------------------------------------------------
def self_attention_block(x, p, lens, n_head, gamma, beta, *, causal, use_len):
    # fused QKV projection -> attention (slab consumed directly) -> fused
    # (out-proj + residual + LN)
    B, L, D = x.shape
    x2 = x.reshape(B * L, D)
    qkv = linear(x2, p["wqkv"], p["bqkv"]).reshape(B, L, 3 * D)   # [B,L,3D]
    ctx = mha(qkv, qkv, lens, d_model=D, n_head=n_head,
              q_block=0, k_block=1, v_block=2, causal=causal, use_len=use_len)
    out = proj_add_ln(ctx.reshape(B * L, D), p["wo"], p["bo"], x2, gamma, beta)
    return out.reshape(B, L, D)


def cross_attention_block(x_q, x_kv, p, lens, n_head, gamma, beta, *, use_len):
    B, Lq, D = x_q.shape
    Lk = x_kv.shape[1]
    xq2 = x_q.reshape(B * Lq, D)
    q = linear(xq2, p["wq"], p["bq"]).reshape(B, Lq, D)
    kv = linear(x_kv.reshape(B * Lk, D), p["wkv"], p["bkv"]).reshape(B, Lk, 2 * D)
    ctx = mha(q, kv, lens, d_model=D, n_head=n_head,
              q_block=0, k_block=0, v_block=1, causal=False, use_len=use_len)
    out = proj_add_ln(ctx.reshape(B * Lq, D), p["wo"], p["bo"], xq2, gamma, beta)
    return out.reshape(B, Lq, D)


def encoder_layer(x, p, src_lens, n_head, use_len):
    B, L, D = x.shape
    x = self_attention_block(x, p["attn"], src_lens, n_head, p["n1_g"],
                             p["n1_b"], causal=False, use_len=use_len)
    x2 = x.reshape(B * L, D)
    y = ffn_add_ln(x2, p["w1"], p["b1"], p["w2"], p["b2"], x2,
                   p["n2_g"], p["n2_b"])
    return y.reshape(B, L, D)


def decoder_layer(x, enc, p, tgt_lens, src_lens, n_head, tgt_causal,
                  tgt_use_len, src_use_len):
    B, L, D = x.shape
    x = self_attention_block(x, p["self_attn"], tgt_lens, n_head,
                             p["n1_g"], p["n1_b"],
                             causal=tgt_causal, use_len=tgt_use_len)
    x = cross_attention_block(x, enc, p["cross_attn"], src_lens, n_head,
                              p["n2_g"], p["n2_b"], use_len=src_use_len)
    x2 = x.reshape(B * L, D)
    y = ffn_add_ln(x2, p["w1"], p["b1"], p["w2"], p["b2"], x2,
                   p["n3_g"], p["n3_b"])
    return y.reshape(B, L, D)


def sinusoid_pe(max_len, d_model):
    pos = jnp.arange(max_len, dtype=jnp.float32)[:, None]
    i2 = jnp.arange(0, d_model, 2, dtype=jnp.float32)[None, :]
    angle = pos / jnp.power(10000.0, i2 / d_model)
    pe = jnp.zeros((max_len, d_model), jnp.float32)
    pe = pe.at[:, 0::2].set(jnp.sin(angle))
    pe = pe.at[:, 1::2].set(jnp.cos(angle))
    return pe


def transformer_forward(params, src, tgt, src_mask, tgt_mask, *, n_head,
                        tgt_vocab):
    B, Ls = src.shape
    Lt = tgt.shape[1]
    pe = params["pe"]

    # Per-batch valid key lengths derived from padding masks (contiguous-prefix
    # assumption); the causal structure is generated inside the attention
    # kernel, so no [B,Lq,Lk] bias is ever materialized / streamed from HBM.
    if src_mask is not None:
        src_lens = jnp.sum(
            src_mask.reshape(B, -1, Ls)[:, 0, :].astype(jnp.int32), axis=-1)
        src_use_len = True
    else:
        src_lens = jnp.full((B,), Ls, jnp.int32)
        src_use_len = False
    if tgt_mask is not None:
        # last row of a (causal & padding) mask equals the padding mask
        tgt_lens = jnp.sum(
            tgt_mask.reshape(B, -1, Lt)[:, -1, :].astype(jnp.int32), axis=-1)
        tgt_causal = True
        tgt_use_len = True
    else:
        tgt_lens = jnp.full((B,), Lt, jnp.int32)
        tgt_causal = False
        tgt_use_len = False

    # Encoder
    x = (jnp.take(params["src_emb"], src, axis=0) + pe[:Ls]).astype(jnp.bfloat16)
    for lp in params["enc_layers"]:
        x = encoder_layer(x, lp, src_lens, n_head, src_use_len)
    enc_out = x

    # Decoder
    y = (jnp.take(params["tgt_emb"], tgt, axis=0) + pe[:Lt]).astype(jnp.bfloat16)
    for lp in params["dec_layers"]:
        y = decoder_layer(y, enc_out, lp, tgt_lens, src_lens, n_head,
                          tgt_causal, tgt_use_len, src_use_len)

    D = y.shape[-1]
    logits = linear(y.reshape(B * Lt, D), params["out_w"], params["out_b"],
                    out_dtype=jnp.float32)
    # output vocab is padded to a multiple of 128 for lane-dense tiles
    return logits.reshape(B, Lt, -1)[:, :, :tgt_vocab]


# -----------------------------------------------------------------------------
# Deterministic parameter init (weights stored in bf16, biases/LN in f32)
# -----------------------------------------------------------------------------
def _dense(key, fan_in, fan_out):
    w = jax.random.normal(key, (fan_in, fan_out), jnp.float32) * 0.02
    b = jnp.zeros((fan_out,), jnp.float32)
    return w, b


def _self_attn_params(key, d_model, n_head):
    ks = jax.random.split(key, 4)
    wq, bq = _dense(ks[0], d_model, d_model)
    wk, bk = _dense(ks[1], d_model, d_model)
    wv, bv = _dense(ks[2], d_model, d_model)
    wo, bo = _dense(ks[3], d_model, d_model)
    scale = 1.0 / math.sqrt(d_model // n_head)   # fold 1/sqrt(dk) into Q proj
    wq = wq * scale
    bq = bq * scale
    return dict(
        wqkv=jnp.concatenate([wq, wk, wv], axis=1).astype(jnp.bfloat16),
        bqkv=jnp.concatenate([bq, bk, bv], axis=0),
        wo=wo.astype(jnp.bfloat16), bo=bo,
    )


def _cross_attn_params(key, d_model, n_head):
    ks = jax.random.split(key, 4)
    wq, bq = _dense(ks[0], d_model, d_model)
    wk, bk = _dense(ks[1], d_model, d_model)
    wv, bv = _dense(ks[2], d_model, d_model)
    wo, bo = _dense(ks[3], d_model, d_model)
    scale = 1.0 / math.sqrt(d_model // n_head)
    wq = wq * scale
    bq = bq * scale
    return dict(
        wq=wq.astype(jnp.bfloat16), bq=bq,
        wkv=jnp.concatenate([wk, wv], axis=1).astype(jnp.bfloat16),
        bkv=jnp.concatenate([bk, bv], axis=0),
        wo=wo.astype(jnp.bfloat16), bo=bo,
    )


def init_params(key, src_vocab, tgt_vocab, d_model, d_hidden, n_layers,
                max_len, n_head):
    keys = jax.random.split(key, 5 + 2 * n_layers)
    params = {
        "src_emb": (jax.random.normal(keys[0], (src_vocab, d_model), jnp.float32)
                    * 0.02).astype(jnp.bfloat16),
        "tgt_emb": (jax.random.normal(keys[1], (tgt_vocab, d_model), jnp.float32)
                    * 0.02).astype(jnp.bfloat16),
        "pe": sinusoid_pe(max_len, d_model),
    }
    # Pad the vocab projection to a multiple of 128 (lane-dense, bounded tiles).
    v_pad = _round_up(tgt_vocab, 128)
    out_w, out_b = _dense(keys[2], d_model, tgt_vocab)
    out_w = jnp.pad(out_w, ((0, 0), (0, v_pad - tgt_vocab)))
    out_b = jnp.pad(out_b, ((0, v_pad - tgt_vocab),))
    params["out_w"], params["out_b"] = out_w.astype(jnp.bfloat16), out_b

    enc_layers, dec_layers = [], []
    for i in range(n_layers):
        k = jax.random.split(keys[3 + i], 3)
        w1, b1 = _dense(k[1], d_model, d_hidden)
        w2, b2 = _dense(k[2], d_hidden, d_model)
        enc_layers.append(dict(
            attn=_self_attn_params(k[0], d_model, n_head),
            n1_g=jnp.ones((d_model,)), n1_b=jnp.zeros((d_model,)),
            w1=w1.astype(jnp.bfloat16), b1=b1,
            w2=w2.astype(jnp.bfloat16), b2=b2,
            n2_g=jnp.ones((d_model,)), n2_b=jnp.zeros((d_model,)),
        ))
    for i in range(n_layers):
        k = jax.random.split(keys[3 + n_layers + i], 4)
        w1, b1 = _dense(k[2], d_model, d_hidden)
        w2, b2 = _dense(k[3], d_hidden, d_model)
        dec_layers.append(dict(
            self_attn=_self_attn_params(k[0], d_model, n_head),
            cross_attn=_cross_attn_params(k[1], d_model, n_head),
            n1_g=jnp.ones((d_model,)), n1_b=jnp.zeros((d_model,)),
            n2_g=jnp.ones((d_model,)), n2_b=jnp.zeros((d_model,)),
            w1=w1.astype(jnp.bfloat16), b1=b1,
            w2=w2.astype(jnp.bfloat16), b2=b2,
            n3_g=jnp.ones((d_model,)), n3_b=jnp.zeros((d_model,)),
        ))
    params["enc_layers"] = enc_layers
    params["dec_layers"] = dec_layers
    return params


# -----------------------------------------------------------------------------
# Main
# -----------------------------------------------------------------------------
if __name__ == "__main__":
    batch = 2
    src_len = 8
    tgt_len = 8
    d_model = 128     # keeps QKV/KV slab block offsets 128-lane aligned
    n_head = 4
    d_hidden = 256
    n_layers = 2
    src_vocab = 50
    tgt_vocab = 40
    max_len = 16

    key = jax.random.PRNGKey(0)
    k_params, k_src, k_tgt = jax.random.split(key, 3)

    params = init_params(k_params, src_vocab, tgt_vocab, d_model, d_hidden,
                         n_layers, max_len, n_head)

    src = jax.random.randint(k_src, (batch, src_len), 0, src_vocab, jnp.int32)
    tgt = jax.random.randint(k_tgt, (batch, tgt_len), 0, tgt_vocab, jnp.int32)

    # src_mask: [batch, 1, 1, src_len] (all-valid padding mask here)
    src_mask = jnp.ones((batch, 1, 1, src_len), jnp.int32)
    # tgt_mask: [batch, 1, tgt_len, tgt_len] causal mask
    causal = jnp.tril(jnp.ones((tgt_len, tgt_len), jnp.int32))
    tgt_mask = jnp.broadcast_to(causal[None, None], (batch, 1, tgt_len, tgt_len))

    fwd = jax.jit(functools.partial(transformer_forward, n_head=n_head,
                                    tgt_vocab=tgt_vocab))
    out = fwd(params, src, tgt, src_mask, tgt_mask)
    out = jax.block_until_ready(out)

    assert out.shape == (batch, tgt_len, tgt_vocab)
    assert bool(jnp.all(jnp.isfinite(out)))
    print("KERNEL_OK")
</pallas_src>

<mosaic_0001>
module attributes {stable_mosaic.version = 11 : i64} {
  func.func @_linear_kernel(%arg0: i32, %arg1: i32, %arg2: i32, %arg3: memref<16x128xbf16, #tpu.memory_space<vmem>>, %arg4: memref<128x384xbf16, #tpu.memory_space<vmem>>, %arg5: memref<1x384xf32, #tpu.memory_space<vmem>>, %arg6: memref<16x384xbf16, #tpu.memory_space<vmem>>, %arg7: memref<16x384xf32, #tpu.memory_space<vmem>>) attributes {dimension_semantics = [#tpu.dimension_semantics<parallel>, #tpu.dimension_semantics<parallel>, #tpu.dimension_semantics<arbitrary>], iteration_bounds = array<i64: 1, 1, 1>, scalar_prefetch = 0 : i64, scratch_operands = 1 : i64, tpu.core_type = #tpu.core_type<tc>, window_params = [{transform_indices = @transform_0, window_bounds = array<i64: 16, 128>}, {transform_indices = @transform_1, window_bounds = array<i64: 128, 384>}, {transform_indices = @transform_2, window_bounds = array<i64: 1, 384>}, {transform_indices = @transform_3, window_bounds = array<i64: 16, 384>}]} {
    %c0_i32 = arith.constant 0 : i32
    %0 = arith.cmpi eq, %arg2, %c0_i32 : i32
    %1 = arith.extui %0 : i1 to i32
    %c0_i32_0 = arith.constant 0 : i32
    %2 = arith.cmpi ne, %1, %c0_i32_0 : i32
    scf.if %2 {
      %cst_10 = arith.constant 0.000000e+00 : f32
      %12 = vector.broadcast %cst_10 : f32 to vector<16x384xf32>
      %c0_11 = arith.constant 0 : index
      %c0_12 = arith.constant 0 : index
      %13 = vector.load %arg7[%c0_11, %c0_12] : memref<16x384xf32, #tpu.memory_space<vmem>>, vector<16x384xf32>
      tpu.vector_store %arg7[%c0_11, %c0_12], %12 {strides = array<i32>} : memref<16x384xf32, #tpu.memory_space<vmem>>, vector<16x384xf32>,
    } else {
    }
    %c0 = arith.constant 0 : index
    %c0_1 = arith.constant 0 : index
    %3 = vector.load %arg7[%c0, %c0_1] : memref<16x384xf32, #tpu.memory_space<vmem>>, vector<16x384xf32>
    %c0_2 = arith.constant 0 : index
    %c0_3 = arith.constant 0 : index
    %4 = vector.load %arg3[%c0_2, %c0_3] : memref<16x128xbf16, #tpu.memory_space<vmem>>, vector<16x128xbf16>
    %c0_4 = arith.constant 0 : index
    %c0_5 = arith.constant 0 : index
    %5 = vector.load %arg4[%c0_4, %c0_5] : memref<128x384xbf16, #tpu.memory_space<vmem>>, vector<128x384xbf16>
    %cst = arith.constant dense<0.000000e+00> : vector<16x384xf32>
    %6 = tpu.matmul %4, %5, %cst {dimension_numbers = #tpu.dot_dimension_numbers<[1], [0], [0], [1], [0, 0, 1, 1], [], []>} : vector<16x128xbf16>, vector<128x384xbf16>, vector<16x384xf32> -> vector<16x384xf32>
    %7 = arith.addf %3, %6 : vector<16x384xf32>
    %c0_6 = arith.constant 0 : index
    %c0_7 = arith.constant 0 : index
    %8 = vector.load %arg7[%c0_6, %c0_7] : memref<16x384xf32, #tpu.memory_space<vmem>>, vector<16x384xf32>
    tpu.vector_store %arg7[%c0_6, %c0_7], %7 {strides = array<i32>} : memref<16x384xf32, #tpu.memory_space<vmem>>, vector<16x384xf32>,
    %c0_i32_8 = arith.constant 0 : i32
    %9 = arith.cmpi eq, %arg2, %c0_i32_8 : i32
    %10 = arith.extui %9 : i1 to i32
    %c0_i32_9 = arith.constant 0 : i32
    %11 = arith.cmpi ne, %10, %c0_i32_9 : i32
    scf.if %11 {
      %c0_10 = arith.constant 0 : index
      %c0_11 = arith.constant 0 : index
      %12 = vector.load %arg7[%c0_10, %c0_11] : memref<16x384xf32, #tpu.memory_space<vmem>>, vector<16x384xf32>
      %c0_12 = arith.constant 0 : index
      %c0_13 = arith.constant 0 : index
      %13 = vector.load %arg5[%c0_12, %c0_13] : memref<1x384xf32, #tpu.memory_space<vmem>>, vector<1x384xf32>
      %14 = vector.broadcast %13 : vector<1x384xf32> to vector<16x384xf32>
      %15 = arith.addf %12, %14 : vector<16x384xf32>
      %16 = arith.truncf %15 : vector<16x384xf32> to vector<16x384xbf16>
      %c0_14 = arith.constant 0 : index
      %c0_15 = arith.constant 0 : index
      %17 = vector.load %arg6[%c0_14, %c0_15] : memref<16x384xbf16, #tpu.memory_space<vmem>>, vector<16x384xbf16>
      tpu.vector_store %arg6[%c0_14, %c0_15], %16 {strides = array<i32>} : memref<16x384xbf16, #tpu.memory_space<vmem>>, vector<16x384xbf16>,
    } else {
    }
    return
  }
  func.func @transform_0(%arg0: i32, %arg1: i32, %arg2: i32) -> (i32, i32) {
    %c0_i32 = arith.constant 0 : i32
    return %arg0, %arg2 : i32, i32
  }
  func.func @transform_1(%arg0: i32, %arg1: i32, %arg2: i32) -> (i32, i32) {
    %c0_i32 = arith.constant 0 : i32
    return %arg2, %arg1 : i32, i32
  }
  func.func @transform_2(%arg0: i32, %arg1: i32, %arg2: i32) -> (i32, i32) {
    %c0_i32 = arith.constant 0 : i32
    %c0_i32_0 = arith.constant 0 : i32
    return %c0_i32, %arg1 : i32, i32
  }
  func.func @transform_3(%arg0: i32, %arg1: i32, %arg2: i32) -> (i32, i32) {
    %c0_i32 = arith.constant 0 : i32
    return %arg0, %arg1 : i32, i32
  }
}

module attributes {stable_mosaic.version = 11 : i64} {
  func.func @_proj_add_ln_kernel(%arg0: i32, %arg1: i32, %arg2: memref<16x128xbf16, #tpu.memory_space<vmem>>, %arg3: memref<128x128xbf16, #tpu.memory_space<vmem>>, %arg4: memref<1x128xf32, #tpu.memory_space<vmem>>, %arg5: memref<16x128xbf16, #tpu.memory_space<vmem>>, %arg6: memref<1x128xf32, #tpu.memory_space<vmem>>, %arg7: memref<1x128xf32, #tpu.memory_space<vmem>>, %arg8: memref<16x128xbf16, #tpu.memory_space<vmem>>, %arg9: memref<16x128xf32, #tpu.memory_space<vmem>>) attributes {dimension_semantics = [#tpu.dimension_semantics<parallel>, #tpu.dimension_semantics<arbitrary>], iteration_bounds = array<i64: 1, 1>, scalar_prefetch = 0 : i64, scratch_operands = 1 : i64, tpu.core_type = #tpu.core_type<tc>, window_params = [{transform_indices = @transform_0, window_bounds = array<i64: 16, 128>}, {transform_indices = @transform_1, window_bounds = array<i64: 128, 128>}, {pipeline_mode = #tpu.pipeline_mode<synchronous>, transform_indices = @transform_2, window_bounds = array<i64: 1, 128>}, {transform_indices = @transform_3, window_bounds = array<i64: 16, 128>}, {pipeline_mode = #tpu.pipeline_mode<synchronous>, transform_indices = @transform_4, window_bounds = array<i64: 1, 128>}, {pipeline_mode = #tpu.pipeline_mode<synchronous>, transform_indices = @transform_5, window_bounds = array<i64: 1, 128>}, {transform_indices = @transform_6, window_bounds = array<i64: 16, 128>}]} {
    %c0_i32 = arith.constant 0 : i32
    %0 = arith.cmpi eq, %arg1, %c0_i32 : i32
    %1 = arith.extui %0 : i1 to i32
    %c0_i32_0 = arith.constant 0 : i32
    %2 = arith.cmpi ne, %1, %c0_i32_0 : i32
    scf.if %2 {
      %cst_10 = arith.constant 0.000000e+00 : f32
      %12 = vector.broadcast %cst_10 : f32 to vector<16x128xf32>
      %c0_11 = arith.constant 0 : index
      %c0_12 = arith.constant 0 : index
      %13 = vector.load %arg9[%c0_11, %c0_12] : memref<16x128xf32, #tpu.memory_space<vmem>>, vector<16x128xf32>
      tpu.vector_store %arg9[%c0_11, %c0_12], %12 {strides = array<i32>} : memref<16x128xf32, #tpu.memory_space<vmem>>, vector<16x128xf32>,
    } else {
    }
    %c0 = arith.constant 0 : index
    %c0_1 = arith.constant 0 : index
    %3 = vector.load %arg9[%c0, %c0_1] : memref<16x128xf32, #tpu.memory_space<vmem>>, vector<16x128xf32>
    %c0_2 = arith.constant 0 : index
    %c0_3 = arith.constant 0 : index
    %4 = vector.load %arg2[%c0_2, %c0_3] : memref<16x128xbf16, #tpu.memory_space<vmem>>, vector<16x128xbf16>
    %c0_4 = arith.constant 0 : index
    %c0_5 = arith.constant 0 : index
    %5 = vector.load %arg3[%c0_4, %c0_5] : memref<128x128xbf16, #tpu.memory_space<vmem>>, vector<128x128xbf16>
    %cst = arith.constant dense<0.000000e+00> : vector<16x128xf32>
    %6 = tpu.matmul %4, %5, %cst {dimension_numbers = #tpu.dot_dimension_numbers<[1], [0], [0], [1], [0, 0, 1, 1], [], []>} : vector<16x128xbf16>, vector<128x128xbf16>, vector<16x128xf32> -> vector<16x128xf32>
    %7 = arith.addf %3, %6 : vector<16x128xf32>
    %c0_6 = arith.constant 0 : index
    %c0_7 = arith.constant 0 : index
    %8 = vector.load %arg9[%c0_6, %c0_7] : memref<16x128xf32, #tpu.memory_space<vmem>>, vector<16x128xf32>
    tpu.vector_store %arg9[%c0_6, %c0_7], %7 {strides = array<i32>} : memref<16x128xf32, #tpu.memory_space<vmem>>, vector<16x128xf32>,
    %c0_i32_8 = arith.constant 0 : i32
    %9 = arith.cmpi eq, %arg1, %c0_i32_8 : i32
    %10 = arith.extui %9 : i1 to i32
    %c0_i32_9 = arith.constant 0 : i32
    %11 = arith.cmpi ne, %10, %c0_i32_9 : i32
    scf.if %11 {
      %c0_10 = arith.constant 0 : index
      %c0_11 = arith.constant 0 : index
      %12 = vector.load %arg9[%c0_10, %c0_11] : memref<16x128xf32, #tpu.memory_space<vmem>>, vector<16x128xf32>
      %c0_12 = arith.constant 0 : index
      %c0_13 = arith.constant 0 : index
      %13 = vector.load %arg4[%c0_12, %c0_13] : memref<1x128xf32, #tpu.memory_space<vmem>>, vector<1x128xf32>
      %14 = vector.broadcast %13 : vector<1x128xf32> to vector<16x128xf32>
      %15 = arith.addf %12, %14 : vector<16x128xf32>
      %c0_14 = arith.constant 0 : index
      %c0_15 = arith.constant 0 : index
      %16 = vector.load %arg5[%c0_14, %c0_15] : memref<16x128xbf16, #tpu.memory_space<vmem>>, vector<16x128xbf16>
      %17 = arith.extf %16 : vector<16x128xbf16> to vector<16x128xf32>
      %18 = arith.addf %15, %17 : vector<16x128xf32>
      %cst_16 = arith.constant dense<0.000000e+00> : vector<16xf32>
      %19 = vector.multi_reduction <add>, %18, %cst_16 [1] : vector<16x128xf32> to vector<16xf32>
      %20 = vector.shape_cast %19 : vector<16xf32> to vector<16x1xf32>
      %cst_17 = arith.constant 1.280000e+02 : f32
      %21 = vector.broadcast %cst_17 : f32 to vector<16x1xf32>
      %22 = arith.divf %20, %21 : vector<16x1xf32>
      %23 = vector.broadcast %22 : vector<16x1xf32> to vector<16x128xf32>
      %24 = arith.subf %18, %23 : vector<16x128xf32>
      %25 = arith.mulf %24, %24 : vector<16x128xf32>
      %cst_18 = arith.constant dense<0.000000e+00> : vector<16xf32>
      %26 = vector.multi_reduction <add>, %25, %cst_18 [1] : vector<16x128xf32> to vector<16xf32>
      %27 = vector.shape_cast %26 : vector<16xf32> to vector<16x1xf32>
      %cst_19 = arith.constant 1.280000e+02 : f32
      %28 = vector.broadcast %cst_19 : f32 to vector<16x1xf32>
      %29 = arith.divf %27, %28 : vector<16x1xf32>
      %30 = vector.broadcast %22 : vector<16x1xf32> to vector<16x128xf32>
      %31 = arith.subf %18, %30 : vector<16x128xf32>
      %cst_20 = arith.constant 9.99999974E-6 : f32
      %32 = vector.broadcast %cst_20 : f32 to vector<16x1xf32>
      %33 = arith.addf %29, %32 : vector<16x1xf32>
      %34 = math.rsqrt %33 : vector<16x1xf32>
      %35 = vector.broadcast %34 : vector<16x1xf32> to vector<16x128xf32>
      %36 = arith.mulf %31, %35 : vector<16x128xf32>
      %c0_21 = arith.constant 0 : index
      %c0_22 = arith.constant 0 : index
      %37 = vector.load %arg6[%c0_21, %c0_22] : memref<1x128xf32, #tpu.memory_space<vmem>>, vector<1x128xf32>
      %38 = vector.broadcast %37 : vector<1x128xf32> to vector<16x128xf32>
      %39 = arith.mulf %36, %38 : vector<16x128xf32>
      %c0_23 = arith.constant 0 : index
      %c0_24 = arith.constant 0 : index
      %40 = vector.load %arg7[%c0_23, %c0_24] : memref<1x128xf32, #tpu.memory_space<vmem>>, vector<1x128xf32>
      %41 = vector.broadcast %40 : vector<1x128xf32> to vector<16x128xf32>
      %42 = arith.addf %39, %41 : vector<16x128xf32>
      %43 = arith.truncf %42 : vector<16x128xf32> to vector<16x128xbf16>
      %c0_25 = arith.constant 0 : index
      %c0_26 = arith.constant 0 : index
      %44 = vector.load %arg8[%c0_25, %c0_26] : memref<16x128xbf16, #tpu.memory_space<vmem>>, vector<16x128xbf16>
      tpu.vector_store %arg8[%c0_25, %c0_26], %43 {strides = array<i32>} : memref<16x128xbf16, #tpu.memory_space<vmem>>, vector<16x128xbf16>,
    } else {
    }
    return
  }
  func.func @transform_0(%arg0: i32, %arg1: i32) -> (i32, i32) {
    %c0_i32 = arith.constant 0 : i32
    return %arg0, %arg1 : i32, i32
  }
  func.func @transform_1(%arg0: i32, %arg1: i32) -> (i32, i32) {
    %c0_i32 = arith.constant 0 : i32
    %c0_i32_0 = arith.constant 0 : i32
    return %arg1, %c0_i32 : i32, i32
  }
  func.func @transform_2(%arg0: i32, %arg1: i32) -> (i32, i32) {
    %c0_i32 = arith.constant 0 : i32
    %c0_i32_0 = arith.constant 0 : i32
    %c0_i32_1 = arith.constant 0 : i32
    return %c0_i32, %c0_i32_0 : i32, i32
  }
  func.func @transform_3(%arg0: i32, %arg1: i32) -> (i32, i32) {
    %c0_i32 = arith.constant 0 : i32
    %c0_i32_0 = arith.constant 0 : i32
    return %arg0, %c0_i32 : i32, i32
  }
  func.func @transform_4(%arg0: i32, %arg1: i32) -> (i32, i32) {
    %c0_i32 = arith.constant 0 : i32
    %c0_i32_0 = arith.constant 0 : i32
    %c0_i32_1 = arith.constant 0 : i32
    return %c0_i32, %c0_i32_0 : i32, i32
  }
  func.func @transform_5(%arg0: i32, %arg1: i32) -> (i32, i32) {
    %c0_i32 = arith.constant 0 : i32
    %c0_i32_0 = arith.constant 0 : i32
    %c0_i32_1 = arith.constant 0 : i32
    return %c0_i32, %c0_i32_0 : i32, i32
  }
  func.func @transform_6(%arg0: i32, %arg1: i32) -> (i32, i32) {
    %c0_i32 = arith.constant 0 : i32
    %c0_i32_0 = arith.constant 0 : i32
    return %arg0, %c0_i32 : i32, i32
  }
}

module attributes {stable_mosaic.version = 11 : i64} {
  func.func @_mha_kernel(%arg0: i32, %arg1: memref<2xi32, #tpu.memory_space<smem>>, %arg2: memref<1x8x128xbf16, #tpu.memory_space<vmem>>, %arg3: memref<1x8x128xbf16, #tpu.memory_space<vmem>>, %arg4: memref<1x8x128xbf16, #tpu.memory_space<vmem>>, %arg5: memref<1x8x128xbf16, #tpu.memory_space<vmem>>) attributes {dimension_semantics = [#tpu.dimension_semantics<parallel>], iteration_bounds = array<i64: 2>, scalar_prefetch = 1 : i64, scratch_operands = 0 : i64, tpu.core_type = #tpu.core_type<tc>, window_params = [{transform_indices = @transform_0, window_bounds = array<i64: 1, 8, 128>}, {transform_indices = @transform_1, window_bounds = array<i64: 1, 8, 128>}, {transform_indices = @transform_2, window_bounds = array<i64: 1, 8, 128>}, {transform_indices = @transform_3, window_bounds = array<i64: 1, 8, 128>}]} {
    %c0 = arith.constant 0 : index
    %c0_0 = arith.constant 0 : index
    %c0_1 = arith.constant 0 : index
    %0 = vector.load %arg2[%c0, %c0_0, %c0_1] : memref<1x8x128xbf16, #tpu.memory_space<vmem>>, vector<1x8x128xbf16>
    %1 = vector.shape_cast %0 : vector<1x8x128xbf16> to vector<8x128xbf16>
    %c0_2 = arith.constant 0 : index
    %c0_3 = arith.constant 0 : index
    %c0_4 = arith.constant 0 : index
    %2 = vector.load %arg3[%c0_2, %c0_3, %c0_4] : memref<1x8x128xbf16, #tpu.memory_space<vmem>>, vector<1x8x128xbf16>
    %3 = vector.shape_cast %2 : vector<1x8x128xbf16> to vector<8x128xbf16>
    %c0_5 = arith.constant 0 : index
    %c0_6 = arith.constant 0 : index
    %c0_7 = arith.constant 0 : index
    %4 = vector.load %arg4[%c0_5, %c0_6, %c0_7] : memref<1x8x128xbf16, #tpu.memory_space<vmem>>, vector<1x8x128xbf16>
    %5 = vector.shape_cast %4 : vector<1x8x128xbf16> to vector<8x128xbf16>
    %6 = tpu.iota {dimensions = array<i32: 1>} : vector<8x8xi32>
    %7 = arith.index_cast %arg0 : i32 to index
    %8 = memref.load %arg1[%7] : memref<2xi32, #tpu.memory_space<smem>>
    %9 = vector.broadcast %8 : i32 to vector<8x8xi32>
    %10 = arith.cmpi slt, %6, %9 : vector<8x8xi32>
    %11 = tpu.iota {dimensions = array<i32: 0>} : vector<8x8xi32>
    %12 = arith.cmpi sle, %6, %11 : vector<8x8xi32>
    %13 = arith.andi %10, %12 : vector<8x8xi1>
    %14 = vector.extract_strided_slice %1 {offsets = [0, 0], sizes = [8, 32], strides = [1, 1]} : vector<8x128xbf16> to vector<8x32xbf16>
    %15 = vector.extract_strided_slice %3 {offsets = [0, 0], sizes = [8, 32], strides = [1, 1]} : vector<8x128xbf16> to vector<8x32xbf16>
    %16 = vector.extract_strided_slice %5 {offsets = [0, 0], sizes = [8, 32], strides = [1, 1]} : vector<8x128xbf16> to vector<8x32xbf16>
    %cst = arith.constant dense<0.000000e+00> : vector<8x8xf32>
    %17 = tpu.matmul %14, %15, %cst {dimension_numbers = #tpu.dot_dimension_numbers<[1], [1], [0], [0], [0, 0, 1, 0], [], []>} : vector<8x32xbf16>, vector<8x32xbf16>, vector<8x8xf32> -> vector<8x8xf32>
    %cst_8 = arith.constant -1.000000e+30 : f32
    %18 = vector.broadcast %cst_8 : f32 to vector<8x8xf32>
    %19 = arith.select %13, %17, %18 : vector<8x8xi1>, vector<8x8xf32>
    %cst_9 = arith.constant dense<0xFF800000> : vector<8xf32>
    %20 = vector.multi_reduction <maximumf>, %19, %cst_9 [1] : vector<8x8xf32> to vector<8xf32>
    %21 = vector.shape_cast %20 : vector<8xf32> to vector<8x1xf32>
    %22 = vector.broadcast %21 : vector<8x1xf32> to vector<8x8xf32>
    %23 = arith.subf %19, %22 : vector<8x8xf32>
    %24 = math.exp %23 : vector<8x8xf32>
    %cst_10 = arith.constant dense<0.000000e+00> : vector<8xf32>
    %25 = vector.multi_reduction <add>, %24, %cst_10 [1] : vector<8x8xf32> to vector<8xf32>
    %26 = vector.shape_cast %25 : vector<8xf32> to vector<8x1xf32>
    %27 = tpu.reciprocal %26 : vector<8x1xf32> -> vector<8x1xf32>
    %28 = vector.broadcast %27 : vector<8x1xf32> to vector<8x8xf32>
    %29 = arith.mulf %24, %28 : vector<8x8xf32>
    %30 = arith.truncf %29 : vector<8x8xf32> to vector<8x8xbf16>
    %cst_11 = arith.constant dense<0.000000e+00> : vector<8x32xf32>
    %31 = tpu.matmul %30, %16, %cst_11 {dimension_numbers = #tpu.dot_dimension_numbers<[1], [0], [0], [1], [0, 0, 1, 1], [], []>} : vector<8x8xbf16>, vector<8x32xbf16>, vector<8x32xf32> -> vector<8x32xf32>
    %32 = arith.truncf %31 : vector<8x32xf32> to vector<8x32xbf16>
    %c0_12 = arith.constant 0 : index
    %c0_13 = arith.constant 0 : index
    %c0_14 = arith.constant 0 : index
    %33 = vector.load %arg5[%c0_12, %c0_13, %c0_14] : memref<1x8x128xbf16, #tpu.memory_space<vmem>>, vector<1x8x32xbf16>
    %34 = vector.shape_cast %33 : vector<1x8x32xbf16> to vector<8x32xbf16>
    %35 = vector.shape_cast %32 : vector<8x32xbf16> to vector<1x8x32xbf16>
    tpu.vector_store %arg5[%c0_12, %c0_13, %c0_14], %35 {strides = array<i32>} : memref<1x8x128xbf16, #tpu.memory_space<vmem>>, vector<1x8x32xbf16>,
    %36 = vector.extract_strided_slice %1 {offsets = [0, 32], sizes = [8, 32], strides = [1, 1]} : vector<8x128xbf16> to vector<8x32xbf16>
    %37 = vector.extract_strided_slice %3 {offsets = [0, 32], sizes = [8, 32], strides = [1, 1]} : vector<8x128xbf16> to vector<8x32xbf16>
    %38 = vector.extract_strided_slice %5 {offsets = [0, 32], sizes = [8, 32], strides = [1, 1]} : vector<8x128xbf16> to vector<8x32xbf16>
    %cst_15 = arith.constant dense<0.000000e+00> : vector<8x8xf32>
    %39 = tpu.matmul %36, %37, %cst_15 {dimension_numbers = #tpu.dot_dimension_numbers<[1], [1], [0], [0], [0, 0, 1, 0], [], []>} : vector<8x32xbf16>, vector<8x32xbf16>, vector<8x8xf32> -> vector<8x8xf32>
    %cst_16 = arith.constant -1.000000e+30 : f32
    %40 = vector.broadcast %cst_16 : f32 to vector<8x8xf32>
    %41 = arith.select %13, %39, %40 : vector<8x8xi1>, vector<8x8xf32>
    %cst_17 = arith.constant dense<0xFF800000> : vector<8xf32>
    %42 = vector.multi_reduction <maximumf>, %41, %cst_17 [1] : vector<8x8xf32> to vector<8xf32>
    %43 = vector.shape_cast %42 : vector<8xf32> to vector<8x1xf32>
    %44 = vector.broadcast %43 : vector<8x1xf32> to vector<8x8xf32>
    %45 = arith.subf %41, %44 : vector<8x8xf32>
    %46 = math.exp %45 : vector<8x8xf32>
    %cst_18 = arith.constant dense<0.000000e+00> : vector<8xf32>
    %47 = vector.multi_reduction <add>, %46, %cst_18 [1] : vector<8x8xf32> to vector<8xf32>
    %48 = vector.shape_cast %47 : vector<8xf32> to vector<8x1xf32>
    %49 = tpu.reciprocal %48 : vector<8x1xf32> -> vector<8x1xf32>
    %50 = vector.broadcast %49 : vector<8x1xf32> to vector<8x8xf32>
    %51 = arith.mulf %46, %50 : vector<8x8xf32>
    %52 = arith.truncf %51 : vector<8x8xf32> to vector<8x8xbf16>
    %cst_19 = arith.constant dense<0.000000e+00> : vector<8x32xf32>
    %53 = tpu.matmul %52, %38, %cst_19 {dimension_numbers = #tpu.dot_dimension_numbers<[1], [0], [0], [1], [0, 0, 1, 1], [], []>} : vector<8x8xbf16>, vector<8x32xbf16>, vector<8x32xf32> -> vector<8x32xf32>
    %54 = arith.truncf %53 : vector<8x32xf32> to vector<8x32xbf16>
    %c0_20 = arith.constant 0 : index
    %c0_21 = arith.constant 0 : index
    %c32 = arith.constant 32 : index
    %55 = vector.load %arg5[%c0_20, %c0_21, %c32] : memref<1x8x128xbf16, #tpu.memory_space<vmem>>, vector<1x8x32xbf16>
    %56 = vector.shape_cast %55 : vector<1x8x32xbf16> to vector<8x32xbf16>
    %57 = vector.shape_cast %54 : vector<8x32xbf16> to vector<1x8x32xbf16>
    tpu.vector_store %arg5[%c0_20, %c0_21, %c32], %57 {strides = array<i32>} : memref<1x8x128xbf16, #tpu.memory_space<vmem>>, vector<1x8x32xbf16>,
    %58 = vector.extract_strided_slice %1 {offsets = [0, 64], sizes = [8, 32], strides = [1, 1]} : vector<8x128xbf16> to vector<8x32xbf16>
    %59 = vector.extract_strided_slice %3 {offsets = [0, 64], sizes = [8, 32], strides = [1, 1]} : vector<8x128xbf16> to vector<8x32xbf16>
    %60 = vector.extract_strided_slice %5 {offsets = [0, 64], sizes = [8, 32], strides = [1, 1]} : vector<8x128xbf16> to vector<8x32xbf16>
    %cst_22 = arith.constant dense<0.000000e+00> : vector<8x8xf32>
    %61 = tpu.matmul %58, %59, %cst_22 {dimension_numbers = #tpu.dot_dimension_numbers<[1], [1], [0], [0], [0, 0, 1, 0], [], []>} : vector<8x32xbf16>, vector<8x32xbf16>, vector<8x8xf32> -> vector<8x8xf32>
    %cst_23 = arith.constant -1.000000e+30 : f32
    %62 = vector.broadcast %cst_23 : f32 to vector<8x8xf32>
    %63 = arith.select %13, %61, %62 : vector<8x8xi1>, vector<8x8xf32>
    %cst_24 = arith.constant dense<0xFF800000> : vector<8xf32>
    %64 = vector.multi_reduction <maximumf>, %63, %cst_24 [1] : vector<8x8xf32> to vector<8xf32>
    %65 = vector.shape_cast %64 : vector<8xf32> to vector<8x1xf32>
    %66 = vector.broadcast %65 : vector<8x1xf32> to vector<8x8xf32>
    %67 = arith.subf %63, %66 : vector<8x8xf32>
    %68 = math.exp %67 : vector<8x8xf32>
    %cst_25 = arith.constant dense<0.000000e+00> : vector<8xf32>
    %69 = vector.multi_reduction <add>, %68, %cst_25 [1] : vector<8x8xf32> to vector<8xf32>
    %70 = vector.shape_cast %69 : vector<8xf32> to vector<8x1xf32>
    %71 = tpu.reciprocal %70 : vector<8x1xf32> -> vector<8x1xf32>
    %72 = vector.broadcast %71 : vector<8x1xf32> to vector<8x8xf32>
    %73 = arith.mulf %68, %72 : vector<8x8xf32>
    %74 = arith.truncf %73 : vector<8x8xf32> to vector<8x8xbf16>
    %cst_26 = arith.constant dense<0.000000e+00> : vector<8x32xf32>
    %75 = tpu.matmul %74, %60, %cst_26 {dimension_numbers = #tpu.dot_dimension_numbers<[1], [0], [0], [1], [0, 0, 1, 1], [], []>} : vector<8x8xbf16>, vector<8x32xbf16>, vector<8x32xf32> -> vector<8x32xf32>
    %76 = arith.truncf %75 : vector<8x32xf32> to vector<8x32xbf16>
    %c0_27 = arith.constant 0 : index
    %c0_28 = arith.constant 0 : index
    %c64 = arith.constant 64 : index
    %77 = vector.load %arg5[%c0_27, %c0_28, %c64] : memref<1x8x128xbf16, #tpu.memory_space<vmem>>, vector<1x8x32xbf16>
    %78 = vector.shape_cast %77 : vector<1x8x32xbf16> to vector<8x32xbf16>
    %79 = vector.shape_cast %76 : vector<8x32xbf16> to vector<1x8x32xbf16>
    tpu.vector_store %arg5[%c0_27, %c0_28, %c64], %79 {strides = array<i32>} : memref<1x8x128xbf16, #tpu.memory_space<vmem>>, vector<1x8x32xbf16>,
    %80 = vector.extract_strided_slice %1 {offsets = [0, 96], sizes = [8, 32], strides = [1, 1]} : vector<8x128xbf16> to vector<8x32xbf16>
    %81 = vector.extract_strided_slice %3 {offsets = [0, 96], sizes = [8, 32], strides = [1, 1]} : vector<8x128xbf16> to vector<8x32xbf16>
    %82 = vector.extract_strided_slice %5 {offsets = [0, 96], sizes = [8, 32], strides = [1, 1]} : vector<8x128xbf16> to vector<8x32xbf16>
    %cst_29 = arith.constant dense<0.000000e+00> : vector<8x8xf32>
    %83 = tpu.matmul %80, %81, %cst_29 {dimension_numbers = #tpu.dot_dimension_numbers<[1], [1], [0], [0], [0, 0, 1, 0], [], []>} : vector<8x32xbf16>, vector<8x32xbf16>, vector<8x8xf32> -> vector<8x8xf32>
    %cst_30 = arith.constant -1.000000e+30 : f32
    %84 = vector.broadcast %cst_30 : f32 to vector<8x8xf32>
    %85 = arith.select %13, %83, %84 : vector<8x8xi1>, vector<8x8xf32>
    %cst_31 = arith.constant dense<0xFF800000> : vector<8xf32>
    %86 = vector.multi_reduction <maximumf>, %85, %cst_31 [1] : vector<8x8xf32> to vector<8xf32>
    %87 = vector.shape_cast %86 : vector<8xf32> to vector<8x1xf32>
    %88 = vector.broadcast %87 : vector<8x1xf32> to vector<8x8xf32>
    %89 = arith.subf %85, %88 : vector<8x8xf32>
    %90 = math.exp %89 : vector<8x8xf32>
    %cst_32 = arith.constant dense<0.000000e+00> : vector<8xf32>
    %91 = vector.multi_reduction <add>, %90, %cst_32 [1] : vector<8x8xf32> to vector<8xf32>
    %92 = vector.shape_cast %91 : vector<8xf32> to vector<8x1xf32>
    %93 = tpu.reciprocal %92 : vector<8x1xf32> -> vector<8x1xf32>
    %94 = vector.broadcast %93 : vector<8x1xf32> to vector<8x8xf32>
    %95 = arith.mulf %90, %94 : vector<8x8xf32>
    %96 = arith.truncf %95 : vector<8x8xf32> to vector<8x8xbf16>
    %cst_33 = arith.constant dense<0.000000e+00> : vector<8x32xf32>
    %97 = tpu.matmul %96, %82, %cst_33 {dimension_numbers = #tpu.dot_dimension_numbers<[1], [0], [0], [1], [0, 0, 1, 1], [], []>} : vector<8x8xbf16>, vector<8x32xbf16>, vector<8x32xf32> -> vector<8x32xf32>
    %98 = arith.truncf %97 : vector<8x32xf32> to vector<8x32xbf16>
    %c0_34 = arith.constant 0 : index
    %c0_35 = arith.constant 0 : index
    %c96 = arith.constant 96 : index
    %99 = vector.load %arg5[%c0_34, %c0_35, %c96] : memref<1x8x128xbf16, #tpu.memory_space<vmem>>, vector<1x8x32xbf16>
    %100 = vector.shape_cast %99 : vector<1x8x32xbf16> to vector<8x32xbf16>
    %101 = vector.shape_cast %98 : vector<8x32xbf16> to vector<1x8x32xbf16>
    tpu.vector_store %arg5[%c0_34, %c0_35, %c96], %101 {strides = array<i32>} : memref<1x8x128xbf16, #tpu.memory_space<vmem>>, vector<1x8x32xbf16>,
    return
  }
  func.func @transform_0(%arg0: i32, %arg1: memref<2xi32, #tpu.memory_space<smem>>) -> (i32, i32, i32) {
    %c0_i32 = arith.constant 0 : i32
    %c0_i32_0 = arith.constant 0 : i32
    %c0_i32_1 = arith.constant 0 : i32
    return %arg0, %c0_i32, %c0_i32_0 : i32, i32, i32
  }
  func.func @transform_1(%arg0: i32, %arg1: memref<2xi32, #tpu.memory_space<smem>>) -> (i32, i32, i32) {
    %c0_i32 = arith.constant 0 : i32
    %c1_i32 = arith.constant 1 : i32
    %c0_i32_0 = arith.constant 0 : i32
    return %arg0, %c0_i32, %c1_i32 : i32, i32, i32
  }
  func.func @transform_2(%arg0: i32, %arg1: memref<2xi32, #tpu.memory_space<smem>>) -> (i32, i32, i32) {
    %c0_i32 = arith.constant 0 : i32
    %c2_i32 = arith.constant 2 : i32
    %c0_i32_0 = arith.constant 0 : i32
    return %arg0, %c0_i32, %c2_i32 : i32, i32, i32
  }
  func.func @transform_3(%arg0: i32, %arg1: memref<2xi32, #tpu.memory_space<smem>>) -> (i32, i32, i32) {
    %c0_i32 = arith.constant 0 : i32
    %c0_i32_0 = arith.constant 0 : i32
    %c0_i32_1 = arith.constant 0 : i32
    return %arg0, %c0_i32, %c0_i32_0 : i32, i32, i32
  }
}

module attributes {stable_mosaic.version = 11 : i64} {
  func.func @_linear_kernel(%arg0: i32, %arg1: i32, %arg2: i32, %arg3: memref<16x128xbf16, #tpu.memory_space<vmem>>, %arg4: memref<128x128xbf16, #tpu.memory_space<vmem>>, %arg5: memref<1x128xf32, #tpu.memory_space<vmem>>, %arg6: memref<16x128xbf16, #tpu.memory_space<vmem>>, %arg7: memref<16x128xf32, #tpu.memory_space<vmem>>) attributes {dimension_semantics = [#tpu.dimension_semantics<parallel>, #tpu.dimension_semantics<parallel>, #tpu.dimension_semantics<arbitrary>], iteration_bounds = array<i64: 1, 1, 1>, scalar_prefetch = 0 : i64, scratch_operands = 1 : i64, tpu.core_type = #tpu.core_type<tc>, window_params = [{transform_indices = @transform_0, window_bounds = array<i64: 16, 128>}, {transform_indices = @transform_1, window_bounds = array<i64: 128, 128>}, {transform_indices = @transform_2, window_bounds = array<i64: 1, 128>}, {transform_indices = @transform_3, window_bounds = array<i64: 16, 128>}]} {
    %c0_i32 = arith.constant 0 : i32
    %0 = arith.cmpi eq, %arg2, %c0_i32 : i32
    %1 = arith.extui %0 : i1 to i32
    %c0_i32_0 = arith.constant 0 : i32
    %2 = arith.cmpi ne, %1, %c0_i32_0 : i32
    scf.if %2 {
      %cst_10 = arith.constant 0.000000e+00 : f32
      %12 = vector.broadcast %cst_10 : f32 to vector<16x128xf32>
      %c0_11 = arith.constant 0 : index
      %c0_12 = arith.constant 0 : index
      %13 = vector.load %arg7[%c0_11, %c0_12] : memref<16x128xf32, #tpu.memory_space<vmem>>, vector<16x128xf32>
      tpu.vector_store %arg7[%c0_11, %c0_12], %12 {strides = array<i32>} : memref<16x128xf32, #tpu.memory_space<vmem>>, vector<16x128xf32>,
    } else {
    }
    %c0 = arith.constant 0 : index
    %c0_1 = arith.constant 0 : index
    %3 = vector.load %arg7[%c0, %c0_1] : memref<16x128xf32, #tpu.memory_space<vmem>>, vector<16x128xf32>
    %c0_2 = arith.constant 0 : index
    %c0_3 = arith.constant 0 : index
    %4 = vector.load %arg3[%c0_2, %c0_3] : memref<16x128xbf16, #tpu.memory_space<vmem>>, vector<16x128xbf16>
    %c0_4 = arith.constant 0 : index
    %c0_5 = arith.constant 0 : index
    %5 = vector.load %arg4[%c0_4, %c0_5] : memref<128x128xbf16, #tpu.memory_space<vmem>>, vector<128x128xbf16>
    %cst = arith.constant dense<0.000000e+00> : vector<16x128xf32>
    %6 = tpu.matmul %4, %5, %cst {dimension_numbers = #tpu.dot_dimension_numbers<[1], [0], [0], [1], [0, 0, 1, 1], [], []>} : vector<16x128xbf16>, vector<128x128xbf16>, vector<16x128xf32> -> vector<16x128xf32>
    %7 = arith.addf %3, %6 : vector<16x128xf32>
    %c0_6 = arith.constant 0 : index
    %c0_7 = arith.constant 0 : index
    %8 = vector.load %arg7[%c0_6, %c0_7] : memref<16x128xf32, #tpu.memory_space<vmem>>, vector<16x128xf32>
    tpu.vector_store %arg7[%c0_6, %c0_7], %7 {strides = array<i32>} : memref<16x128xf32, #tpu.memory_space<vmem>>, vector<16x128xf32>,
    %c0_i32_8 = arith.constant 0 : i32
    %9 = arith.cmpi eq, %arg2, %c0_i32_8 : i32
    %10 = arith.extui %9 : i1 to i32
    %c0_i32_9 = arith.constant 0 : i32
    %11 = arith.cmpi ne, %10, %c0_i32_9 : i32
    scf.if %11 {
      %c0_10 = arith.constant 0 : index
      %c0_11 = arith.constant 0 : index
      %12 = vector.load %arg7[%c0_10, %c0_11] : memref<16x128xf32, #tpu.memory_space<vmem>>, vector<16x128xf32>
      %c0_12 = arith.constant 0 : index
      %c0_13 = arith.constant 0 : index
      %13 = vector.load %arg5[%c0_12, %c0_13] : memref<1x128xf32, #tpu.memory_space<vmem>>, vector<1x128xf32>
      %14 = vector.broadcast %13 : vector<1x128xf32> to vector<16x128xf32>
      %15 = arith.addf %12, %14 : vector<16x128xf32>
      %16 = arith.truncf %15 : vector<16x128xf32> to vector<16x128xbf16>
      %c0_14 = arith.constant 0 : index
      %c0_15 = arith.constant 0 : index
      %17 = vector.load %arg6[%c0_14, %c0_15] : memref<16x128xbf16, #tpu.memory_space<vmem>>, vector<16x128xbf16>
      tpu.vector_store %arg6[%c0_14, %c0_15], %16 {strides = array<i32>} : memref<16x128xbf16, #tpu.memory_space<vmem>>, vector<16x128xbf16>,
    } else {
    }
    return
  }
  func.func @transform_0(%arg0: i32, %arg1: i32, %arg2: i32) -> (i32, i32) {
    %c0_i32 = arith.constant 0 : i32
    return %arg0, %arg2 : i32, i32
  }
  func.func @transform_1(%arg0: i32, %arg1: i32, %arg2: i32) -> (i32, i32) {
    %c0_i32 = arith.constant 0 : i32
    return %arg2, %arg1 : i32, i32
  }
  func.func @transform_2(%arg0: i32, %arg1: i32, %arg2: i32) -> (i32, i32) {
    %c0_i32 = arith.constant 0 : i32
    %c0_i32_0 = arith.constant 0 : i32
    return %c0_i32, %arg1 : i32, i32
  }
  func.func @transform_3(%arg0: i32, %arg1: i32, %arg2: i32) -> (i32, i32) {
    %c0_i32 = arith.constant 0 : i32
    return %arg0, %arg1 : i32, i32
  }
}

module attributes {stable_mosaic.version = 11 : i64} {
  func.func @_ffn_add_ln_kernel(%arg0: i32, %arg1: i32, %arg2: memref<16x128xbf16, #tpu.memory_space<vmem>>, %arg3: memref<128x256xbf16, #tpu.memory_space<vmem>>, %arg4: memref<1x256xf32, #tpu.memory_space<vmem>>, %arg5: memref<256x128xbf16, #tpu.memory_space<vmem>>, %arg6: memref<1x128xf32, #tpu.memory_space<vmem>>, %arg7: memref<16x128xbf16, #tpu.memory_space<vmem>>, %arg8: memref<1x128xf32, #tpu.memory_space<vmem>>, %arg9: memref<1x128xf32, #tpu.memory_space<vmem>>, %arg10: memref<16x128xbf16, #tpu.memory_space<vmem>>, %arg11: memref<16x128xf32, #tpu.memory_space<vmem>>) attributes {dimension_semantics = [#tpu.dimension_semantics<parallel>, #tpu.dimension_semantics<arbitrary>], iteration_bounds = array<i64: 1, 1>, scalar_prefetch = 0 : i64, scratch_operands = 1 : i64, tpu.core_type = #tpu.core_type<tc>, window_params = [{transform_indices = @transform_0, window_bounds = array<i64: 16, 128>}, {transform_indices = @transform_1, window_bounds = array<i64: 128, 256>}, {transform_indices = @transform_2, window_bounds = array<i64: 1, 256>}, {transform_indices = @transform_3, window_bounds = array<i64: 256, 128>}, {pipeline_mode = #tpu.pipeline_mode<synchronous>, transform_indices = @transform_4, window_bounds = array<i64: 1, 128>}, {transform_indices = @transform_5, window_bounds = array<i64: 16, 128>}, {pipeline_mode = #tpu.pipeline_mode<synchronous>, transform_indices = @transform_6, window_bounds = array<i64: 1, 128>}, {pipeline_mode = #tpu.pipeline_mode<synchronous>, transform_indices = @transform_7, window_bounds = array<i64: 1, 128>}, {transform_indices = @transform_8, window_bounds = array<i64: 16, 128>}]} {
    %c0_i32 = arith.constant 0 : i32
    %0 = arith.cmpi eq, %arg1, %c0_i32 : i32
    %1 = arith.extui %0 : i1 to i32
    %c0_i32_0 = arith.constant 0 : i32
    %2 = arith.cmpi ne, %1, %c0_i32_0 : i32
    scf.if %2 {
      %cst_16 = arith.constant 0.000000e+00 : f32
      %20 = vector.broadcast %cst_16 : f32 to vector<16x128xf32>
      %c0_17 = arith.constant 0 : index
      %c0_18 = arith.constant 0 : index
      %21 = vector.load %arg11[%c0_17, %c0_18] : memref<16x128xf32, #tpu.memory_space<vmem>>, vector<16x128xf32>
      tpu.vector_store %arg11[%c0_17, %c0_18], %20 {strides = array<i32>} : memref<16x128xf32, #tpu.memory_space<vmem>>, vector<16x128xf32>,
    } else {
    }
    %c0 = arith.constant 0 : index
    %c0_1 = arith.constant 0 : index
    %3 = vector.load %arg2[%c0, %c0_1] : memref<16x128xbf16, #tpu.memory_space<vmem>>, vector<16x128xbf16>
    %c0_2 = arith.constant 0 : index
    %c0_3 = arith.constant 0 : index
    %4 = vector.load %arg3[%c0_2, %c0_3] : memref<128x256xbf16, #tpu.memory_space<vmem>>, vector<128x256xbf16>
    %cst = arith.constant dense<0.000000e+00> : vector<16x256xf32>
    %5 = tpu.matmul %3, %4, %cst {dimension_numbers = #tpu.dot_dimension_numbers<[1], [0], [0], [1], [0, 0, 1, 1], [], []>} : vector<16x128xbf16>, vector<128x256xbf16>, vector<16x256xf32> -> vector<16x256xf32>
    %c0_4 = arith.constant 0 : index
    %c0_5 = arith.constant 0 : index
    %6 = vector.load %arg4[%c0_4, %c0_5] : memref<1x256xf32, #tpu.memory_space<vmem>>, vector<1x256xf32>
    %7 = vector.broadcast %6 : vector<1x256xf32> to vector<16x256xf32>
    %8 = arith.addf %5, %7 : vector<16x256xf32>
    %cst_6 = arith.constant 0.000000e+00 : f32
    %9 = vector.broadcast %cst_6 : f32 to vector<16x256xf32>
    %10 = arith.maximumf %8, %9 : vector<16x256xf32>
    %11 = arith.truncf %10 : vector<16x256xf32> to vector<16x256xbf16>
    %c0_7 = arith.constant 0 : index
    %c0_8 = arith.constant 0 : index
    %12 = vector.load %arg11[%c0_7, %c0_8] : memref<16x128xf32, #tpu.memory_space<vmem>>, vector<16x128xf32>
    %c0_9 = arith.constant 0 : index
    %c0_10 = arith.constant 0 : index
    %13 = vector.load %arg5[%c0_9, %c0_10] : memref<256x128xbf16, #tpu.memory_space<vmem>>, vector<256x128xbf16>
    %cst_11 = arith.constant dense<0.000000e+00> : vector<16x128xf32>
    %14 = tpu.matmul %11, %13, %cst_11 {dimension_numbers = #tpu.dot_dimension_numbers<[1], [0], [0], [1], [0, 0, 1, 1], [], []>} : vector<16x256xbf16>, vector<256x128xbf16>, vector<16x128xf32> -> vector<16x128xf32>
    %15 = arith.addf %12, %14 : vector<16x128xf32>
    %c0_12 = arith.constant 0 : index
    %c0_13 = arith.constant 0 : index
    %16 = vector.load %arg11[%c0_12, %c0_13] : memref<16x128xf32, #tpu.memory_space<vmem>>, vector<16x128xf32>
    tpu.vector_store %arg11[%c0_12, %c0_13], %15 {strides = array<i32>} : memref<16x128xf32, #tpu.memory_space<vmem>>, vector<16x128xf32>,
    %c0_i32_14 = arith.constant 0 : i32
    %17 = arith.cmpi eq, %arg1, %c0_i32_14 : i32
    %18 = arith.extui %17 : i1 to i32
    %c0_i32_15 = arith.constant 0 : i32
    %19 = arith.cmpi ne, %18, %c0_i32_15 : i32
    scf.if %19 {
      %c0_16 = arith.constant 0 : index
      %c0_17 = arith.constant 0 : index
      %20 = vector.load %arg11[%c0_16, %c0_17] : memref<16x128xf32, #tpu.memory_space<vmem>>, vector<16x128xf32>
      %c0_18 = arith.constant 0 : index
      %c0_19 = arith.constant 0 : index
      %21 = vector.load %arg6[%c0_18, %c0_19] : memref<1x128xf32, #tpu.memory_space<vmem>>, vector<1x128xf32>
      %22 = vector.broadcast %21 : vector<1x128xf32> to vector<16x128xf32>
      %23 = arith.addf %20, %22 : vector<16x128xf32>
      %c0_20 = arith.constant 0 : index
      %c0_21 = arith.constant 0 : index
      %24 = vector.load %arg7[%c0_20, %c0_21] : memref<16x128xbf16, #tpu.memory_space<vmem>>, vector<16x128xbf16>
      %25 = arith.extf %24 : vector<16x128xbf16> to vector<16x128xf32>
      %26 = arith.addf %23, %25 : vector<16x128xf32>
      %cst_22 = arith.constant dense<0.000000e+00> : vector<16xf32>
      %27 = vector.multi_reduction <add>, %26, %cst_22 [1] : vector<16x128xf32> to vector<16xf32>
      %28 = vector.shape_cast %27 : vector<16xf32> to vector<16x1xf32>
      %cst_23 = arith.constant 1.280000e+02 : f32
      %29 = vector.broadcast %cst_23 : f32 to vector<16x1xf32>
      %30 = arith.divf %28, %29 : vector<16x1xf32>
      %31 = vector.broadcast %30 : vector<16x1xf32> to vector<16x128xf32>
      %32 = arith.subf %26, %31 : vector<16x128xf32>
      %33 = arith.mulf %32, %32 : vector<16x128xf32>
      %cst_24 = arith.constant dense<0.000000e+00> : vector<16xf32>
      %34 = vector.multi_reduction <add>, %33, %cst_24 [1] : vector<16x128xf32> to vector<16xf32>
      %35 = vector.shape_cast %34 : vector<16xf32> to vector<16x1xf32>
      %cst_25 = arith.constant 1.280000e+02 : f32
      %36 = vector.broadcast %cst_25 : f32 to vector<16x1xf32>
      %37 = arith.divf %35, %36 : vector<16x1xf32>
      %38 = vector.broadcast %30 : vector<16x1xf32> to vector<16x128xf32>
      %39 = arith.subf %26, %38 : vector<16x128xf32>
      %cst_26 = arith.constant 9.99999974E-6 : f32
      %40 = vector.broadcast %cst_26 : f32 to vector<16x1xf32>
      %41 = arith.addf %37, %40 : vector<16x1xf32>
      %42 = math.rsqrt %41 : vector<16x1xf32>
      %43 = vector.broadcast %42 : vector<16x1xf32> to vector<16x128xf32>
      %44 = arith.mulf %39, %43 : vector<16x128xf32>
      %c0_27 = arith.constant 0 : index
      %c0_28 = arith.constant 0 : index
      %45 = vector.load %arg8[%c0_27, %c0_28] : memref<1x128xf32, #tpu.memory_space<vmem>>, vector<1x128xf32>
      %46 = vector.broadcast %45 : vector<1x128xf32> to vector<16x128xf32>
      %47 = arith.mulf %44, %46 : vector<16x128xf32>
      %c0_29 = arith.constant 0 : index
      %c0_30 = arith.constant 0 : index
      %48 = vector.load %arg9[%c0_29, %c0_30] : memref<1x128xf32, #tpu.memory_space<vmem>>, vector<1x128xf32>
      %49 = vector.broadcast %48 : vector<1x128xf32> to vector<16x128xf32>
      %50 = arith.addf %47, %49 : vector<16x128xf32>
      %51 = arith.truncf %50 : vector<16x128xf32> to vector<16x128xbf16>
      %c0_31 = arith.constant 0 : index
      %c0_32 = arith.constant 0 : index
      %52 = vector.load %arg10[%c0_31, %c0_32] : memref<16x128xbf16, #tpu.memory_space<vmem>>, vector<16x128xbf16>
      tpu.vector_store %arg10[%c0_31, %c0_32], %51 {strides = array<i32>} : memref<16x128xbf16, #tpu.memory_space<vmem>>, vector<16x128xbf16>,
    } else {
    }
    return
  }
  func.func @transform_0(%arg0: i32, %arg1: i32) -> (i32, i32) {
    %c0_i32 = arith.constant 0 : i32
    %c0_i32_0 = arith.constant 0 : i32
    return %arg0, %c0_i32 : i32, i32
  }
  func.func @transform_1(%arg0: i32, %arg1: i32) -> (i32, i32) {
    %c0_i32 = arith.constant 0 : i32
    %c0_i32_0 = arith.constant 0 : i32
    return %c0_i32, %arg1 : i32, i32
  }
  func.func @transform_2(%arg0: i32, %arg1: i32) -> (i32, i32) {
    %c0_i32 = arith.constant 0 : i32
    %c0_i32_0 = arith.constant 0 : i32
    return %c0_i32, %arg1 : i32, i32
  }
  func.func @transform_3(%arg0: i32, %arg1: i32) -> (i32, i32) {
    %c0_i32 = arith.constant 0 : i32
    %c0_i32_0 = arith.constant 0 : i32
    return %arg1, %c0_i32 : i32, i32
  }
  func.func @transform_4(%arg0: i32, %arg1: i32) -> (i32, i32) {
    %c0_i32 = arith.constant 0 : i32
    %c0_i32_0 = arith.constant 0 : i32
    %c0_i32_1 = arith.constant 0 : i32
    return %c0_i32, %c0_i32_0 : i32, i32
  }
  func.func @transform_5(%arg0: i32, %arg1: i32) -> (i32, i32) {
    %c0_i32 = arith.constant 0 : i32
    %c0_i32_0 = arith.constant 0 : i32
    return %arg0, %c0_i32 : i32, i32
  }
  func.func @transform_6(%arg0: i32, %arg1: i32) -> (i32, i32) {
    %c0_i32 = arith.constant 0 : i32
    %c0_i32_0 = arith.constant 0 : i32
    %c0_i32_1 = arith.constant 0 : i32
    return %c0_i32, %c0_i32_0 : i32, i32
  }
  func.func @transform_7(%arg0: i32, %arg1: i32) -> (i32, i32) {
    %c0_i32 = arith.constant 0 : i32
    %c0_i32_0 = arith.constant 0 : i32
    %c0_i32_1 = arith.constant 0 : i32
    return %c0_i32, %c0_i32_0 : i32, i32
  }
  func.func @transform_8(%arg0: i32, %arg1: i32) -> (i32, i32) {
    %c0_i32 = arith.constant 0 : i32
    %c0_i32_0 = arith.constant 0 : i32
    return %arg0, %c0_i32 : i32, i32
  }
}

module attributes {stable_mosaic.version = 11 : i64} {
  func.func @_linear_kernel(%arg0: i32, %arg1: i32, %arg2: i32, %arg3: memref<16x128xbf16, #tpu.memory_space<vmem>>, %arg4: memref<128x256xbf16, #tpu.memory_space<vmem>>, %arg5: memref<1x256xf32, #tpu.memory_space<vmem>>, %arg6: memref<16x256xbf16, #tpu.memory_space<vmem>>, %arg7: memref<16x256xf32, #tpu.memory_space<vmem>>) attributes {dimension_semantics = [#tpu.dimension_semantics<parallel>, #tpu.dimension_semantics<parallel>, #tpu.dimension_semantics<arbitrary>], iteration_bounds = array<i64: 1, 1, 1>, scalar_prefetch = 0 : i64, scratch_operands = 1 : i64, tpu.core_type = #tpu.core_type<tc>, window_params = [{transform_indices = @transform_0, window_bounds = array<i64: 16, 128>}, {transform_indices = @transform_1, window_bounds = array<i64: 128, 256>}, {transform_indices = @transform_2, window_bounds = array<i64: 1, 256>}, {transform_indices = @transform_3, window_bounds = array<i64: 16, 256>}]} {
    %c0_i32 = arith.constant 0 : i32
    %0 = arith.cmpi eq, %arg2, %c0_i32 : i32
    %1 = arith.extui %0 : i1 to i32
    %c0_i32_0 = arith.constant 0 : i32
    %2 = arith.cmpi ne, %1, %c0_i32_0 : i32
    scf.if %2 {
      %cst_10 = arith.constant 0.000000e+00 : f32
      %12 = vector.broadcast %cst_10 : f32 to vector<16x256xf32>
      %c0_11 = arith.constant 0 : index
      %c0_12 = arith.constant 0 : index
      %13 = vector.load %arg7[%c0_11, %c0_12] : memref<16x256xf32, #tpu.memory_space<vmem>>, vector<16x256xf32>
      tpu.vector_store %arg7[%c0_11, %c0_12], %12 {strides = array<i32>} : memref<16x256xf32, #tpu.memory_space<vmem>>, vector<16x256xf32>,
    } else {
    }
    %c0 = arith.constant 0 : index
    %c0_1 = arith.constant 0 : index
    %3 = vector.load %arg7[%c0, %c0_1] : memref<16x256xf32, #tpu.memory_space<vmem>>, vector<16x256xf32>
    %c0_2 = arith.constant 0 : index
    %c0_3 = arith.constant 0 : index
    %4 = vector.load %arg3[%c0_2, %c0_3] : memref<16x128xbf16, #tpu.memory_space<vmem>>, vector<16x128xbf16>
    %c0_4 = arith.constant 0 : index
    %c0_5 = arith.constant 0 : index
    %5 = vector.load %arg4[%c0_4, %c0_5] : memref<128x256xbf16, #tpu.memory_space<vmem>>, vector<128x256xbf16>
    %cst = arith.constant dense<0.000000e+00> : vector<16x256xf32>
    %6 = tpu.matmul %4, %5, %cst {dimension_numbers = #tpu.dot_dimension_numbers<[1], [0], [0], [1], [0, 0, 1, 1], [], []>} : vector<16x128xbf16>, vector<128x256xbf16>, vector<16x256xf32> -> vector<16x256xf32>
    %7 = arith.addf %3, %6 : vector<16x256xf32>
    %c0_6 = arith.constant 0 : index
    %c0_7 = arith.constant 0 : index
    %8 = vector.load %arg7[%c0_6, %c0_7] : memref<16x256xf32, #tpu.memory_space<vmem>>, vector<16x256xf32>
    tpu.vector_store %arg7[%c0_6, %c0_7], %7 {strides = array<i32>} : memref<16x256xf32, #tpu.memory_space<vmem>>, vector<16x256xf32>,
    %c0_i32_8 = arith.constant 0 : i32
    %9 = arith.cmpi eq, %arg2, %c0_i32_8 : i32
    %10 = arith.extui %9 : i1 to i32
    %c0_i32_9 = arith.constant 0 : i32
    %11 = arith.cmpi ne, %10, %c0_i32_9 : i32
    scf.if %11 {
      %c0_10 = arith.constant 0 : index
      %c0_11 = arith.constant 0 : index
      %12 = vector.load %arg7[%c0_10, %c0_11] : memref<16x256xf32, #tpu.memory_space<vmem>>, vector<16x256xf32>
      %c0_12 = arith.constant 0 : index
      %c0_13 = arith.constant 0 : index
      %13 = vector.load %arg5[%c0_12, %c0_13] : memref<1x256xf32, #tpu.memory_space<vmem>>, vector<1x256xf32>
      %14 = vector.broadcast %13 : vector<1x256xf32> to vector<16x256xf32>
      %15 = arith.addf %12, %14 : vector<16x256xf32>
      %16 = arith.truncf %15 : vector<16x256xf32> to vector<16x256xbf16>
      %c0_14 = arith.constant 0 : index
      %c0_15 = arith.constant 0 : index
      %17 = vector.load %arg6[%c0_14, %c0_15] : memref<16x256xbf16, #tpu.memory_space<vmem>>, vector<16x256xbf16>
      tpu.vector_store %arg6[%c0_14, %c0_15], %16 {strides = array<i32>} : memref<16x256xbf16, #tpu.memory_space<vmem>>, vector<16x256xbf16>,
    } else {
    }
    return
  }
  func.func @transform_0(%arg0: i32, %arg1: i32, %arg2: i32) -> (i32, i32) {
    %c0_i32 = arith.constant 0 : i32
    return %arg0, %arg2 : i32, i32
  }
  func.func @transform_1(%arg0: i32, %arg1: i32, %arg2: i32) -> (i32, i32) {
    %c0_i32 = arith.constant 0 : i32
    return %arg2, %arg1 : i32, i32
  }
  func.func @transform_2(%arg0: i32, %arg1: i32, %arg2: i32) -> (i32, i32) {
    %c0_i32 = arith.constant 0 : i32
    %c0_i32_0 = arith.constant 0 : i32
    return %c0_i32, %arg1 : i32, i32
  }
  func.func @transform_3(%arg0: i32, %arg1: i32, %arg2: i32) -> (i32, i32) {
    %c0_i32 = arith.constant 0 : i32
    return %arg0, %arg1 : i32, i32
  }
}

module attributes {stable_mosaic.version = 11 : i64} {
  func.func @_mha_kernel(%arg0: i32, %arg1: memref<2xi32, #tpu.memory_space<smem>>, %arg2: memref<1x8x128xbf16, #tpu.memory_space<vmem>>, %arg3: memref<1x8x128xbf16, #tpu.memory_space<vmem>>, %arg4: memref<1x8x128xbf16, #tpu.memory_space<vmem>>, %arg5: memref<1x8x128xbf16, #tpu.memory_space<vmem>>) attributes {dimension_semantics = [#tpu.dimension_semantics<parallel>], iteration_bounds = array<i64: 2>, scalar_prefetch = 1 : i64, scratch_operands = 0 : i64, tpu.core_type = #tpu.core_type<tc>, window_params = [{transform_indices = @transform_0, window_bounds = array<i64: 1, 8, 128>}, {transform_indices = @transform_1, window_bounds = array<i64: 1, 8, 128>}, {transform_indices = @transform_2, window_bounds = array<i64: 1, 8, 128>}, {transform_indices = @transform_3, window_bounds = array<i64: 1, 8, 128>}]} {
    %c0 = arith.constant 0 : index
    %c0_0 = arith.constant 0 : index
    %c0_1 = arith.constant 0 : index
    %0 = vector.load %arg2[%c0, %c0_0, %c0_1] : memref<1x8x128xbf16, #tpu.memory_space<vmem>>, vector<1x8x128xbf16>
    %1 = vector.shape_cast %0 : vector<1x8x128xbf16> to vector<8x128xbf16>
    %c0_2 = arith.constant 0 : index
    %c0_3 = arith.constant 0 : index
    %c0_4 = arith.constant 0 : index
    %2 = vector.load %arg3[%c0_2, %c0_3, %c0_4] : memref<1x8x128xbf16, #tpu.memory_space<vmem>>, vector<1x8x128xbf16>
    %3 = vector.shape_cast %2 : vector<1x8x128xbf16> to vector<8x128xbf16>
    %c0_5 = arith.constant 0 : index
    %c0_6 = arith.constant 0 : index
    %c0_7 = arith.constant 0 : index
    %4 = vector.load %arg4[%c0_5, %c0_6, %c0_7] : memref<1x8x128xbf16, #tpu.memory_space<vmem>>, vector<1x8x128xbf16>
    %5 = vector.shape_cast %4 : vector<1x8x128xbf16> to vector<8x128xbf16>
    %6 = tpu.iota {dimensions = array<i32: 1>} : vector<8x8xi32>
    %7 = arith.index_cast %arg0 : i32 to index
    %8 = memref.load %arg1[%7] : memref<2xi32, #tpu.memory_space<smem>>
    %9 = vector.broadcast %8 : i32 to vector<8x8xi32>
    %10 = arith.cmpi slt, %6, %9 : vector<8x8xi32>
    %11 = vector.extract_strided_slice %1 {offsets = [0, 0], sizes = [8, 32], strides = [1, 1]} : vector<8x128xbf16> to vector<8x32xbf16>
    %12 = vector.extract_strided_slice %3 {offsets = [0, 0], sizes = [8, 32], strides = [1, 1]} : vector<8x128xbf16> to vector<8x32xbf16>
    %13 = vector.extract_strided_slice %5 {offsets = [0, 0], sizes = [8, 32], strides = [1, 1]} : vector<8x128xbf16> to vector<8x32xbf16>
    %cst = arith.constant dense<0.000000e+00> : vector<8x8xf32>
    %14 = tpu.matmul %11, %12, %cst {dimension_numbers = #tpu.dot_dimension_numbers<[1], [1], [0], [0], [0, 0, 1, 0], [], []>} : vector<8x32xbf16>, vector<8x32xbf16>, vector<8x8xf32> -> vector<8x8xf32>
    %cst_8 = arith.constant -1.000000e+30 : f32
    %15 = vector.broadcast %cst_8 : f32 to vector<8x8xf32>
    %16 = arith.select %10, %14, %15 : vector<8x8xi1>, vector<8x8xf32>
    %cst_9 = arith.constant dense<0xFF800000> : vector<8xf32>
    %17 = vector.multi_reduction <maximumf>, %16, %cst_9 [1] : vector<8x8xf32> to vector<8xf32>
    %18 = vector.shape_cast %17 : vector<8xf32> to vector<8x1xf32>
    %19 = vector.broadcast %18 : vector<8x1xf32> to vector<8x8xf32>
    %20 = arith.subf %16, %19 : vector<8x8xf32>
    %21 = math.exp %20 : vector<8x8xf32>
    %cst_10 = arith.constant dense<0.000000e+00> : vector<8xf32>
    %22 = vector.multi_reduction <add>, %21, %cst_10 [1] : vector<8x8xf32> to vector<8xf32>
    %23 = vector.shape_cast %22 : vector<8xf32> to vector<8x1xf32>
    %24 = tpu.reciprocal %23 : vector<8x1xf32> -> vector<8x1xf32>
    %25 = vector.broadcast %24 : vector<8x1xf32> to vector<8x8xf32>
    %26 = arith.mulf %21, %25 : vector<8x8xf32>
    %27 = arith.truncf %26 : vector<8x8xf32> to vector<8x8xbf16>
    %cst_11 = arith.constant dense<0.000000e+00> : vector<8x32xf32>
    %28 = tpu.matmul %27, %13, %cst_11 {dimension_numbers = #tpu.dot_dimension_numbers<[1], [0], [0], [1], [0, 0, 1, 1], [], []>} : vector<8x8xbf16>, vector<8x32xbf16>, vector<8x32xf32> -> vector<8x32xf32>
    %29 = arith.truncf %28 : vector<8x32xf32> to vector<8x32xbf16>
    %c0_12 = arith.constant 0 : index
    %c0_13 = arith.constant 0 : index
    %c0_14 = arith.constant 0 : index
    %30 = vector.load %arg5[%c0_12, %c0_13, %c0_14] : memref<1x8x128xbf16, #tpu.memory_space<vmem>>, vector<1x8x32xbf16>
    %31 = vector.shape_cast %30 : vector<1x8x32xbf16> to vector<8x32xbf16>
    %32 = vector.shape_cast %29 : vector<8x32xbf16> to vector<1x8x32xbf16>
    tpu.vector_store %arg5[%c0_12, %c0_13, %c0_14], %32 {strides = array<i32>} : memref<1x8x128xbf16, #tpu.memory_space<vmem>>, vector<1x8x32xbf16>,
    %33 = vector.extract_strided_slice %1 {offsets = [0, 32], sizes = [8, 32], strides = [1, 1]} : vector<8x128xbf16> to vector<8x32xbf16>
    %34 = vector.extract_strided_slice %3 {offsets = [0, 32], sizes = [8, 32], strides = [1, 1]} : vector<8x128xbf16> to vector<8x32xbf16>
    %35 = vector.extract_strided_slice %5 {offsets = [0, 32], sizes = [8, 32], strides = [1, 1]} : vector<8x128xbf16> to vector<8x32xbf16>
    %cst_15 = arith.constant dense<0.000000e+00> : vector<8x8xf32>
    %36 = tpu.matmul %33, %34, %cst_15 {dimension_numbers = #tpu.dot_dimension_numbers<[1], [1], [0], [0], [0, 0, 1, 0], [], []>} : vector<8x32xbf16>, vector<8x32xbf16>, vector<8x8xf32> -> vector<8x8xf32>
    %cst_16 = arith.constant -1.000000e+30 : f32
    %37 = vector.broadcast %cst_16 : f32 to vector<8x8xf32>
    %38 = arith.select %10, %36, %37 : vector<8x8xi1>, vector<8x8xf32>
    %cst_17 = arith.constant dense<0xFF800000> : vector<8xf32>
    %39 = vector.multi_reduction <maximumf>, %38, %cst_17 [1] : vector<8x8xf32> to vector<8xf32>
    %40 = vector.shape_cast %39 : vector<8xf32> to vector<8x1xf32>
    %41 = vector.broadcast %40 : vector<8x1xf32> to vector<8x8xf32>
    %42 = arith.subf %38, %41 : vector<8x8xf32>
    %43 = math.exp %42 : vector<8x8xf32>
    %cst_18 = arith.constant dense<0.000000e+00> : vector<8xf32>
    %44 = vector.multi_reduction <add>, %43, %cst_18 [1] : vector<8x8xf32> to vector<8xf32>
    %45 = vector.shape_cast %44 : vector<8xf32> to vector<8x1xf32>
    %46 = tpu.reciprocal %45 : vector<8x1xf32> -> vector<8x1xf32>
    %47 = vector.broadcast %46 : vector<8x1xf32> to vector<8x8xf32>
    %48 = arith.mulf %43, %47 : vector<8x8xf32>
    %49 = arith.truncf %48 : vector<8x8xf32> to vector<8x8xbf16>
    %cst_19 = arith.constant dense<0.000000e+00> : vector<8x32xf32>
    %50 = tpu.matmul %49, %35, %cst_19 {dimension_numbers = #tpu.dot_dimension_numbers<[1], [0], [0], [1], [0, 0, 1, 1], [], []>} : vector<8x8xbf16>, vector<8x32xbf16>, vector<8x32xf32> -> vector<8x32xf32>
    %51 = arith.truncf %50 : vector<8x32xf32> to vector<8x32xbf16>
    %c0_20 = arith.constant 0 : index
    %c0_21 = arith.constant 0 : index
    %c32 = arith.constant 32 : index
    %52 = vector.load %arg5[%c0_20, %c0_21, %c32] : memref<1x8x128xbf16, #tpu.memory_space<vmem>>, vector<1x8x32xbf16>
    %53 = vector.shape_cast %52 : vector<1x8x32xbf16> to vector<8x32xbf16>
    %54 = vector.shape_cast %51 : vector<8x32xbf16> to vector<1x8x32xbf16>
    tpu.vector_store %arg5[%c0_20, %c0_21, %c32], %54 {strides = array<i32>} : memref<1x8x128xbf16, #tpu.memory_space<vmem>>, vector<1x8x32xbf16>,
    %55 = vector.extract_strided_slice %1 {offsets = [0, 64], sizes = [8, 32], strides = [1, 1]} : vector<8x128xbf16> to vector<8x32xbf16>
    %56 = vector.extract_strided_slice %3 {offsets = [0, 64], sizes = [8, 32], strides = [1, 1]} : vector<8x128xbf16> to vector<8x32xbf16>
    %57 = vector.extract_strided_slice %5 {offsets = [0, 64], sizes = [8, 32], strides = [1, 1]} : vector<8x128xbf16> to vector<8x32xbf16>
    %cst_22 = arith.constant dense<0.000000e+00> : vector<8x8xf32>
    %58 = tpu.matmul %55, %56, %cst_22 {dimension_numbers = #tpu.dot_dimension_numbers<[1], [1], [0], [0], [0, 0, 1, 0], [], []>} : vector<8x32xbf16>, vector<8x32xbf16>, vector<8x8xf32> -> vector<8x8xf32>
    %cst_23 = arith.constant -1.000000e+30 : f32
    %59 = vector.broadcast %cst_23 : f32 to vector<8x8xf32>
    %60 = arith.select %10, %58, %59 : vector<8x8xi1>, vector<8x8xf32>
    %cst_24 = arith.constant dense<0xFF800000> : vector<8xf32>
    %61 = vector.multi_reduction <maximumf>, %60, %cst_24 [1] : vector<8x8xf32> to vector<8xf32>
    %62 = vector.shape_cast %61 : vector<8xf32> to vector<8x1xf32>
    %63 = vector.broadcast %62 : vector<8x1xf32> to vector<8x8xf32>
    %64 = arith.subf %60, %63 : vector<8x8xf32>
    %65 = math.exp %64 : vector<8x8xf32>
    %cst_25 = arith.constant dense<0.000000e+00> : vector<8xf32>
    %66 = vector.multi_reduction <add>, %65, %cst_25 [1] : vector<8x8xf32> to vector<8xf32>
    %67 = vector.shape_cast %66 : vector<8xf32> to vector<8x1xf32>
    %68 = tpu.reciprocal %67 : vector<8x1xf32> -> vector<8x1xf32>
    %69 = vector.broadcast %68 : vector<8x1xf32> to vector<8x8xf32>
    %70 = arith.mulf %65, %69 : vector<8x8xf32>
    %71 = arith.truncf %70 : vector<8x8xf32> to vector<8x8xbf16>
    %cst_26 = arith.constant dense<0.000000e+00> : vector<8x32xf32>
    %72 = tpu.matmul %71, %57, %cst_26 {dimension_numbers = #tpu.dot_dimension_numbers<[1], [0], [0], [1], [0, 0, 1, 1], [], []>} : vector<8x8xbf16>, vector<8x32xbf16>, vector<8x32xf32> -> vector<8x32xf32>
    %73 = arith.truncf %72 : vector<8x32xf32> to vector<8x32xbf16>
    %c0_27 = arith.constant 0 : index
    %c0_28 = arith.constant 0 : index
    %c64 = arith.constant 64 : index
    %74 = vector.load %arg5[%c0_27, %c0_28, %c64] : memref<1x8x128xbf16, #tpu.memory_space<vmem>>, vector<1x8x32xbf16>
    %75 = vector.shape_cast %74 : vector<1x8x32xbf16> to vector<8x32xbf16>
    %76 = vector.shape_cast %73 : vector<8x32xbf16> to vector<1x8x32xbf16>
    tpu.vector_store %arg5[%c0_27, %c0_28, %c64], %76 {strides = array<i32>} : memref<1x8x128xbf16, #tpu.memory_space<vmem>>, vector<1x8x32xbf16>,
    %77 = vector.extract_strided_slice %1 {offsets = [0, 96], sizes = [8, 32], strides = [1, 1]} : vector<8x128xbf16> to vector<8x32xbf16>
    %78 = vector.extract_strided_slice %3 {offsets = [0, 96], sizes = [8, 32], strides = [1, 1]} : vector<8x128xbf16> to vector<8x32xbf16>
    %79 = vector.extract_strided_slice %5 {offsets = [0, 96], sizes = [8, 32], strides = [1, 1]} : vector<8x128xbf16> to vector<8x32xbf16>
    %cst_29 = arith.constant dense<0.000000e+00> : vector<8x8xf32>
    %80 = tpu.matmul %77, %78, %cst_29 {dimension_numbers = #tpu.dot_dimension_numbers<[1], [1], [0], [0], [0, 0, 1, 0], [], []>} : vector<8x32xbf16>, vector<8x32xbf16>, vector<8x8xf32> -> vector<8x8xf32>
    %cst_30 = arith.constant -1.000000e+30 : f32
    %81 = vector.broadcast %cst_30 : f32 to vector<8x8xf32>
    %82 = arith.select %10, %80, %81 : vector<8x8xi1>, vector<8x8xf32>
    %cst_31 = arith.constant dense<0xFF800000> : vector<8xf32>
    %83 = vector.multi_reduction <maximumf>, %82, %cst_31 [1] : vector<8x8xf32> to vector<8xf32>
    %84 = vector.shape_cast %83 : vector<8xf32> to vector<8x1xf32>
    %85 = vector.broadcast %84 : vector<8x1xf32> to vector<8x8xf32>
    %86 = arith.subf %82, %85 : vector<8x8xf32>
    %87 = math.exp %86 : vector<8x8xf32>
    %cst_32 = arith.constant dense<0.000000e+00> : vector<8xf32>
    %88 = vector.multi_reduction <add>, %87, %cst_32 [1] : vector<8x8xf32> to vector<8xf32>
    %89 = vector.shape_cast %88 : vector<8xf32> to vector<8x1xf32>
    %90 = tpu.reciprocal %89 : vector<8x1xf32> -> vector<8x1xf32>
    %91 = vector.broadcast %90 : vector<8x1xf32> to vector<8x8xf32>
    %92 = arith.mulf %87, %91 : vector<8x8xf32>
    %93 = arith.truncf %92 : vector<8x8xf32> to vector<8x8xbf16>
    %cst_33 = arith.constant dense<0.000000e+00> : vector<8x32xf32>
    %94 = tpu.matmul %93, %79, %cst_33 {dimension_numbers = #tpu.dot_dimension_numbers<[1], [0], [0], [1], [0, 0, 1, 1], [], []>} : vector<8x8xbf16>, vector<8x32xbf16>, vector<8x32xf32> -> vector<8x32xf32>
    %95 = arith.truncf %94 : vector<8x32xf32> to vector<8x32xbf16>
    %c0_34 = arith.constant 0 : index
    %c0_35 = arith.constant 0 : index
    %c96 = arith.constant 96 : index
    %96 = vector.load %arg5[%c0_34, %c0_35, %c96] : memref<1x8x128xbf16, #tpu.memory_space<vmem>>, vector<1x8x32xbf16>
    %97 = vector.shape_cast %96 : vector<1x8x32xbf16> to vector<8x32xbf16>
    %98 = vector.shape_cast %95 : vector<8x32xbf16> to vector<1x8x32xbf16>
    tpu.vector_store %arg5[%c0_34, %c0_35, %c96], %98 {strides = array<i32>} : memref<1x8x128xbf16, #tpu.memory_space<vmem>>, vector<1x8x32xbf16>,
    return
  }
  func.func @transform_0(%arg0: i32, %arg1: memref<2xi32, #tpu.memory_space<smem>>) -> (i32, i32, i32) {
    %c0_i32 = arith.constant 0 : i32
    %c0_i32_0 = arith.constant 0 : i32
    %c0_i32_1 = arith.constant 0 : i32
    return %arg0, %c0_i32, %c0_i32_0 : i32, i32, i32
  }
  func.func @transform_1(%arg0: i32, %arg1: memref<2xi32, #tpu.memory_space<smem>>) -> (i32, i32, i32) {
    %c0_i32 = arith.constant 0 : i32
    %c1_i32 = arith.constant 1 : i32
    %c0_i32_0 = arith.constant 0 : i32
    return %arg0, %c0_i32, %c1_i32 : i32, i32, i32
  }
  func.func @transform_2(%arg0: i32, %arg1: memref<2xi32, #tpu.memory_space<smem>>) -> (i32, i32, i32) {
    %c0_i32 = arith.constant 0 : i32
    %c2_i32 = arith.constant 2 : i32
    %c0_i32_0 = arith.constant 0 : i32
    return %arg0, %c0_i32, %c2_i32 : i32, i32, i32
  }
  func.func @transform_3(%arg0: i32, %arg1: memref<2xi32, #tpu.memory_space<smem>>) -> (i32, i32, i32) {
    %c0_i32 = arith.constant 0 : i32
    %c0_i32_0 = arith.constant 0 : i32
    %c0_i32_1 = arith.constant 0 : i32
    return %arg0, %c0_i32, %c0_i32_0 : i32, i32, i32
  }
}

module attributes {stable_mosaic.version = 11 : i64} {
  func.func @_mha_kernel(%arg0: i32, %arg1: memref<2xi32, #tpu.memory_space<smem>>, %arg2: memref<1x8x128xbf16, #tpu.memory_space<vmem>>, %arg3: memref<1x8x128xbf16, #tpu.memory_space<vmem>>, %arg4: memref<1x8x128xbf16, #tpu.memory_space<vmem>>, %arg5: memref<1x8x128xbf16, #tpu.memory_space<vmem>>) attributes {dimension_semantics = [#tpu.dimension_semantics<parallel>], iteration_bounds = array<i64: 2>, scalar_prefetch = 1 : i64, scratch_operands = 0 : i64, tpu.core_type = #tpu.core_type<tc>, window_params = [{transform_indices = @transform_0, window_bounds = array<i64: 1, 8, 128>}, {transform_indices = @transform_1, window_bounds = array<i64: 1, 8, 128>}, {transform_indices = @transform_2, window_bounds = array<i64: 1, 8, 128>}, {transform_indices = @transform_3, window_bounds = array<i64: 1, 8, 128>}]} {
    %c0 = arith.constant 0 : index
    %c0_0 = arith.constant 0 : index
    %c0_1 = arith.constant 0 : index
    %0 = vector.load %arg2[%c0, %c0_0, %c0_1] : memref<1x8x128xbf16, #tpu.memory_space<vmem>>, vector<1x8x128xbf16>
    %1 = vector.shape_cast %0 : vector<1x8x128xbf16> to vector<8x128xbf16>
    %c0_2 = arith.constant 0 : index
    %c0_3 = arith.constant 0 : index
    %c0_4 = arith.constant 0 : index
    %2 = vector.load %arg3[%c0_2, %c0_3, %c0_4] : memref<1x8x128xbf16, #tpu.memory_space<vmem>>, vector<1x8x128xbf16>
    %3 = vector.shape_cast %2 : vector<1x8x128xbf16> to vector<8x128xbf16>
    %c0_5 = arith.constant 0 : index
    %c0_6 = arith.constant 0 : index
    %c0_7 = arith.constant 0 : index
    %4 = vector.load %arg4[%c0_5, %c0_6, %c0_7] : memref<1x8x128xbf16, #tpu.memory_space<vmem>>, vector<1x8x128xbf16>
    %5 = vector.shape_cast %4 : vector<1x8x128xbf16> to vector<8x128xbf16>
    %6 = tpu.iota {dimensions = array<i32: 1>} : vector<8x8xi32>
    %7 = arith.index_cast %arg0 : i32 to index
    %8 = memref.load %arg1[%7] : memref<2xi32, #tpu.memory_space<smem>>
    %9 = vector.broadcast %8 : i32 to vector<8x8xi32>
    %10 = arith.cmpi slt, %6, %9 : vector<8x8xi32>
    %11 = vector.extract_strided_slice %1 {offsets = [0, 0], sizes = [8, 32], strides = [1, 1]} : vector<8x128xbf16> to vector<8x32xbf16>
    %12 = vector.extract_strided_slice %3 {offsets = [0, 0], sizes = [8, 32], strides = [1, 1]} : vector<8x128xbf16> to vector<8x32xbf16>
    %13 = vector.extract_strided_slice %5 {offsets = [0, 0], sizes = [8, 32], strides = [1, 1]} : vector<8x128xbf16> to vector<8x32xbf16>
    %cst = arith.constant dense<0.000000e+00> : vector<8x8xf32>
    %14 = tpu.matmul %11, %12, %cst {dimension_numbers = #tpu.dot_dimension_numbers<[1], [1], [0], [0], [0, 0, 1, 0], [], []>} : vector<8x32xbf16>, vector<8x32xbf16>, vector<8x8xf32> -> vector<8x8xf32>
    %cst_8 = arith.constant -1.000000e+30 : f32
    %15 = vector.broadcast %cst_8 : f32 to vector<8x8xf32>
    %16 = arith.select %10, %14, %15 : vector<8x8xi1>, vector<8x8xf32>
    %cst_9 = arith.constant dense<0xFF800000> : vector<8xf32>
    %17 = vector.multi_reduction <maximumf>, %16, %cst_9 [1] : vector<8x8xf32> to vector<8xf32>
    %18 = vector.shape_cast %17 : vector<8xf32> to vector<8x1xf32>
    %19 = vector.broadcast %18 : vector<8x1xf32> to vector<8x8xf32>
    %20 = arith.subf %16, %19 : vector<8x8xf32>
    %21 = math.exp %20 : vector<8x8xf32>
    %cst_10 = arith.constant dense<0.000000e+00> : vector<8xf32>
    %22 = vector.multi_reduction <add>, %21, %cst_10 [1] : vector<8x8xf32> to vector<8xf32>
    %23 = vector.shape_cast %22 : vector<8xf32> to vector<8x1xf32>
    %24 = tpu.reciprocal %23 : vector<8x1xf32> -> vector<8x1xf32>
    %25 = vector.broadcast %24 : vector<8x1xf32> to vector<8x8xf32>
    %26 = arith.mulf %21, %25 : vector<8x8xf32>
    %27 = arith.truncf %26 : vector<8x8xf32> to vector<8x8xbf16>
    %cst_11 = arith.constant dense<0.000000e+00> : vector<8x32xf32>
    %28 = tpu.matmul %27, %13, %cst_11 {dimension_numbers = #tpu.dot_dimension_numbers<[1], [0], [0], [1], [0, 0, 1, 1], [], []>} : vector<8x8xbf16>, vector<8x32xbf16>, vector<8x32xf32> -> vector<8x32xf32>
    %29 = arith.truncf %28 : vector<8x32xf32> to vector<8x32xbf16>
    %c0_12 = arith.constant 0 : index
    %c0_13 = arith.constant 0 : index
    %c0_14 = arith.constant 0 : index
    %30 = vector.load %arg5[%c0_12, %c0_13, %c0_14] : memref<1x8x128xbf16, #tpu.memory_space<vmem>>, vector<1x8x32xbf16>
    %31 = vector.shape_cast %30 : vector<1x8x32xbf16> to vector<8x32xbf16>
    %32 = vector.shape_cast %29 : vector<8x32xbf16> to vector<1x8x32xbf16>
    tpu.vector_store %arg5[%c0_12, %c0_13, %c0_14], %32 {strides = array<i32>} : memref<1x8x128xbf16, #tpu.memory_space<vmem>>, vector<1x8x32xbf16>,
    %33 = vector.extract_strided_slice %1 {offsets = [0, 32], sizes = [8, 32], strides = [1, 1]} : vector<8x128xbf16> to vector<8x32xbf16>
    %34 = vector.extract_strided_slice %3 {offsets = [0, 32], sizes = [8, 32], strides = [1, 1]} : vector<8x128xbf16> to vector<8x32xbf16>
    %35 = vector.extract_strided_slice %5 {offsets = [0, 32], sizes = [8, 32], strides = [1, 1]} : vector<8x128xbf16> to vector<8x32xbf16>
    %cst_15 = arith.constant dense<0.000000e+00> : vector<8x8xf32>
    %36 = tpu.matmul %33, %34, %cst_15 {dimension_numbers = #tpu.dot_dimension_numbers<[1], [1], [0], [0], [0, 0, 1, 0], [], []>} : vector<8x32xbf16>, vector<8x32xbf16>, vector<8x8xf32> -> vector<8x8xf32>
    %cst_16 = arith.constant -1.000000e+30 : f32
    %37 = vector.broadcast %cst_16 : f32 to vector<8x8xf32>
    %38 = arith.select %10, %36, %37 : vector<8x8xi1>, vector<8x8xf32>
    %cst_17 = arith.constant dense<0xFF800000> : vector<8xf32>
    %39 = vector.multi_reduction <maximumf>, %38, %cst_17 [1] : vector<8x8xf32> to vector<8xf32>
    %40 = vector.shape_cast %39 : vector<8xf32> to vector<8x1xf32>
    %41 = vector.broadcast %40 : vector<8x1xf32> to vector<8x8xf32>
    %42 = arith.subf %38, %41 : vector<8x8xf32>
    %43 = math.exp %42 : vector<8x8xf32>
    %cst_18 = arith.constant dense<0.000000e+00> : vector<8xf32>
    %44 = vector.multi_reduction <add>, %43, %cst_18 [1] : vector<8x8xf32> to vector<8xf32>
    %45 = vector.shape_cast %44 : vector<8xf32> to vector<8x1xf32>
    %46 = tpu.reciprocal %45 : vector<8x1xf32> -> vector<8x1xf32>
    %47 = vector.broadcast %46 : vector<8x1xf32> to vector<8x8xf32>
    %48 = arith.mulf %43, %47 : vector<8x8xf32>
    %49 = arith.truncf %48 : vector<8x8xf32> to vector<8x8xbf16>
    %cst_19 = arith.constant dense<0.000000e+00> : vector<8x32xf32>
    %50 = tpu.matmul %49, %35, %cst_19 {dimension_numbers = #tpu.dot_dimension_numbers<[1], [0], [0], [1], [0, 0, 1, 1], [], []>} : vector<8x8xbf16>, vector<8x32xbf16>, vector<8x32xf32> -> vector<8x32xf32>
    %51 = arith.truncf %50 : vector<8x32xf32> to vector<8x32xbf16>
    %c0_20 = arith.constant 0 : index
    %c0_21 = arith.constant 0 : index
    %c32 = arith.constant 32 : index
    %52 = vector.load %arg5[%c0_20, %c0_21, %c32] : memref<1x8x128xbf16, #tpu.memory_space<vmem>>, vector<1x8x32xbf16>
    %53 = vector.shape_cast %52 : vector<1x8x32xbf16> to vector<8x32xbf16>
    %54 = vector.shape_cast %51 : vector<8x32xbf16> to vector<1x8x32xbf16>
    tpu.vector_store %arg5[%c0_20, %c0_21, %c32], %54 {strides = array<i32>} : memref<1x8x128xbf16, #tpu.memory_space<vmem>>, vector<1x8x32xbf16>,
    %55 = vector.extract_strided_slice %1 {offsets = [0, 64], sizes = [8, 32], strides = [1, 1]} : vector<8x128xbf16> to vector<8x32xbf16>
    %56 = vector.extract_strided_slice %3 {offsets = [0, 64], sizes = [8, 32], strides = [1, 1]} : vector<8x128xbf16> to vector<8x32xbf16>
    %57 = vector.extract_strided_slice %5 {offsets = [0, 64], sizes = [8, 32], strides = [1, 1]} : vector<8x128xbf16> to vector<8x32xbf16>
    %cst_22 = arith.constant dense<0.000000e+00> : vector<8x8xf32>
    %58 = tpu.matmul %55, %56, %cst_22 {dimension_numbers = #tpu.dot_dimension_numbers<[1], [1], [0], [0], [0, 0, 1, 0], [], []>} : vector<8x32xbf16>, vector<8x32xbf16>, vector<8x8xf32> -> vector<8x8xf32>
    %cst_23 = arith.constant -1.000000e+30 : f32
    %59 = vector.broadcast %cst_23 : f32 to vector<8x8xf32>
    %60 = arith.select %10, %58, %59 : vector<8x8xi1>, vector<8x8xf32>
    %cst_24 = arith.constant dense<0xFF800000> : vector<8xf32>
    %61 = vector.multi_reduction <maximumf>, %60, %cst_24 [1] : vector<8x8xf32> to vector<8xf32>
    %62 = vector.shape_cast %61 : vector<8xf32> to vector<8x1xf32>
    %63 = vector.broadcast %62 : vector<8x1xf32> to vector<8x8xf32>
    %64 = arith.subf %60, %63 : vector<8x8xf32>
    %65 = math.exp %64 : vector<8x8xf32>
    %cst_25 = arith.constant dense<0.000000e+00> : vector<8xf32>
    %66 = vector.multi_reduction <add>, %65, %cst_25 [1] : vector<8x8xf32> to vector<8xf32>
    %67 = vector.shape_cast %66 : vector<8xf32> to vector<8x1xf32>
    %68 = tpu.reciprocal %67 : vector<8x1xf32> -> vector<8x1xf32>
    %69 = vector.broadcast %68 : vector<8x1xf32> to vector<8x8xf32>
    %70 = arith.mulf %65, %69 : vector<8x8xf32>
    %71 = arith.truncf %70 : vector<8x8xf32> to vector<8x8xbf16>
    %cst_26 = arith.constant dense<0.000000e+00> : vector<8x32xf32>
    %72 = tpu.matmul %71, %57, %cst_26 {dimension_numbers = #tpu.dot_dimension_numbers<[1], [0], [0], [1], [0, 0, 1, 1], [], []>} : vector<8x8xbf16>, vector<8x32xbf16>, vector<8x32xf32> -> vector<8x32xf32>
    %73 = arith.truncf %72 : vector<8x32xf32> to vector<8x32xbf16>
    %c0_27 = arith.constant 0 : index
    %c0_28 = arith.constant 0 : index
    %c64 = arith.constant 64 : index
    %74 = vector.load %arg5[%c0_27, %c0_28, %c64] : memref<1x8x128xbf16, #tpu.memory_space<vmem>>, vector<1x8x32xbf16>
    %75 = vector.shape_cast %74 : vector<1x8x32xbf16> to vector<8x32xbf16>
    %76 = vector.shape_cast %73 : vector<8x32xbf16> to vector<1x8x32xbf16>
    tpu.vector_store %arg5[%c0_27, %c0_28, %c64], %76 {strides = array<i32>} : memref<1x8x128xbf16, #tpu.memory_space<vmem>>, vector<1x8x32xbf16>,
    %77 = vector.extract_strided_slice %1 {offsets = [0, 96], sizes = [8, 32], strides = [1, 1]} : vector<8x128xbf16> to vector<8x32xbf16>
    %78 = vector.extract_strided_slice %3 {offsets = [0, 96], sizes = [8, 32], strides = [1, 1]} : vector<8x128xbf16> to vector<8x32xbf16>
    %79 = vector.extract_strided_slice %5 {offsets = [0, 96], sizes = [8, 32], strides = [1, 1]} : vector<8x128xbf16> to vector<8x32xbf16>
    %cst_29 = arith.constant dense<0.000000e+00> : vector<8x8xf32>
    %80 = tpu.matmul %77, %78, %cst_29 {dimension_numbers = #tpu.dot_dimension_numbers<[1], [1], [0], [0], [0, 0, 1, 0], [], []>} : vector<8x32xbf16>, vector<8x32xbf16>, vector<8x8xf32> -> vector<8x8xf32>
    %cst_30 = arith.constant -1.000000e+30 : f32
    %81 = vector.broadcast %cst_30 : f32 to vector<8x8xf32>
    %82 = arith.select %10, %80, %81 : vector<8x8xi1>, vector<8x8xf32>
    %cst_31 = arith.constant dense<0xFF800000> : vector<8xf32>
    %83 = vector.multi_reduction <maximumf>, %82, %cst_31 [1] : vector<8x8xf32> to vector<8xf32>
    %84 = vector.shape_cast %83 : vector<8xf32> to vector<8x1xf32>
    %85 = vector.broadcast %84 : vector<8x1xf32> to vector<8x8xf32>
    %86 = arith.subf %82, %85 : vector<8x8xf32>
    %87 = math.exp %86 : vector<8x8xf32>
    %cst_32 = arith.constant dense<0.000000e+00> : vector<8xf32>
    %88 = vector.multi_reduction <add>, %87, %cst_32 [1] : vector<8x8xf32> to vector<8xf32>
    %89 = vector.shape_cast %88 : vector<8xf32> to vector<8x1xf32>
    %90 = tpu.reciprocal %89 : vector<8x1xf32> -> vector<8x1xf32>
    %91 = vector.broadcast %90 : vector<8x1xf32> to vector<8x8xf32>
    %92 = arith.mulf %87, %91 : vector<8x8xf32>
    %93 = arith.truncf %92 : vector<8x8xf32> to vector<8x8xbf16>
    %cst_33 = arith.constant dense<0.000000e+00> : vector<8x32xf32>
    %94 = tpu.matmul %93, %79, %cst_33 {dimension_numbers = #tpu.dot_dimension_numbers<[1], [0], [0], [1], [0, 0, 1, 1], [], []>} : vector<8x8xbf16>, vector<8x32xbf16>, vector<8x32xf32> -> vector<8x32xf32>
    %95 = arith.truncf %94 : vector<8x32xf32> to vector<8x32xbf16>
    %c0_34 = arith.constant 0 : index
    %c0_35 = arith.constant 0 : index
    %c96 = arith.constant 96 : index
    %96 = vector.load %arg5[%c0_34, %c0_35, %c96] : memref<1x8x128xbf16, #tpu.memory_space<vmem>>, vector<1x8x32xbf16>
    %97 = vector.shape_cast %96 : vector<1x8x32xbf16> to vector<8x32xbf16>
    %98 = vector.shape_cast %95 : vector<8x32xbf16> to vector<1x8x32xbf16>
    tpu.vector_store %arg5[%c0_34, %c0_35, %c96], %98 {strides = array<i32>} : memref<1x8x128xbf16, #tpu.memory_space<vmem>>, vector<1x8x32xbf16>,
    return
  }
  func.func @transform_0(%arg0: i32, %arg1: memref<2xi32, #tpu.memory_space<smem>>) -> (i32, i32, i32) {
    %c0_i32 = arith.constant 0 : i32
    %c0_i32_0 = arith.constant 0 : i32
    %c0_i32_1 = arith.constant 0 : i32
    return %arg0, %c0_i32, %c0_i32_0 : i32, i32, i32
  }
  func.func @transform_1(%arg0: i32, %arg1: memref<2xi32, #tpu.memory_space<smem>>) -> (i32, i32, i32) {
    %c0_i32 = arith.constant 0 : i32
    %c0_i32_0 = arith.constant 0 : i32
    %c0_i32_1 = arith.constant 0 : i32
    return %arg0, %c0_i32, %c0_i32_0 : i32, i32, i32
  }
  func.func @transform_2(%arg0: i32, %arg1: memref<2xi32, #tpu.memory_space<smem>>) -> (i32, i32, i32) {
    %c0_i32 = arith.constant 0 : i32
    %c1_i32 = arith.constant 1 : i32
    %c0_i32_0 = arith.constant 0 : i32
    return %arg0, %c0_i32, %c1_i32 : i32, i32, i32
  }
  func.func @transform_3(%arg0: i32, %arg1: memref<2xi32, #tpu.memory_space<smem>>) -> (i32, i32, i32) {
    %c0_i32 = arith.constant 0 : i32
    %c0_i32_0 = arith.constant 0 : i32
    %c0_i32_1 = arith.constant 0 : i32
    return %arg0, %c0_i32, %c0_i32_0 : i32, i32, i32
  }
}

module attributes {stable_mosaic.version = 11 : i64} {
  func.func @_linear_kernel(%arg0: i32, %arg1: i32, %arg2: i32, %arg3: memref<16x128xbf16, #tpu.memory_space<vmem>>, %arg4: memref<128x128xbf16, #tpu.memory_space<vmem>>, %arg5: memref<1x128xf32, #tpu.memory_space<vmem>>, %arg6: memref<16x128xf32, #tpu.memory_space<vmem>>, %arg7: memref<16x128xf32, #tpu.memory_space<vmem>>) attributes {dimension_semantics = [#tpu.dimension_semantics<parallel>, #tpu.dimension_semantics<parallel>, #tpu.dimension_semantics<arbitrary>], iteration_bounds = array<i64: 1, 1, 1>, scalar_prefetch = 0 : i64, scratch_operands = 1 : i64, tpu.core_type = #tpu.core_type<tc>, window_params = [{transform_indices = @transform_0, window_bounds = array<i64: 16, 128>}, {transform_indices = @transform_1, window_bounds = array<i64: 128, 128>}, {transform_indices = @transform_2, window_bounds = array<i64: 1, 128>}, {transform_indices = @transform_3, window_bounds = array<i64: 16, 128>}]} {
    %c0_i32 = arith.constant 0 : i32
    %0 = arith.cmpi eq, %arg2, %c0_i32 : i32
    %1 = arith.extui %0 : i1 to i32
    %c0_i32_0 = arith.constant 0 : i32
    %2 = arith.cmpi ne, %1, %c0_i32_0 : i32
    scf.if %2 {
      %cst_10 = arith.constant 0.000000e+00 : f32
      %12 = vector.broadcast %cst_10 : f32 to vector<16x128xf32>
      %c0_11 = arith.constant 0 : index
      %c0_12 = arith.constant 0 : index
      %13 = vector.load %arg7[%c0_11, %c0_12] : memref<16x128xf32, #tpu.memory_space<vmem>>, vector<16x128xf32>
      tpu.vector_store %arg7[%c0_11, %c0_12], %12 {strides = array<i32>} : memref<16x128xf32, #tpu.memory_space<vmem>>, vector<16x128xf32>,
    } else {
    }
    %c0 = arith.constant 0 : index
    %c0_1 = arith.constant 0 : index
    %3 = vector.load %arg7[%c0, %c0_1] : memref<16x128xf32, #tpu.memory_space<vmem>>, vector<16x128xf32>
    %c0_2 = arith.constant 0 : index
    %c0_3 = arith.constant 0 : index
    %4 = vector.load %arg3[%c0_2, %c0_3] : memref<16x128xbf16, #tpu.memory_space<vmem>>, vector<16x128xbf16>
    %c0_4 = arith.constant 0 : index
    %c0_5 = arith.constant 0 : index
    %5 = vector.load %arg4[%c0_4, %c0_5] : memref<128x128xbf16, #tpu.memory_space<vmem>>, vector<128x128xbf16>
    %cst = arith.constant dense<0.000000e+00> : vector<16x128xf32>
    %6 = tpu.matmul %4, %5, %cst {dimension_numbers = #tpu.dot_dimension_numbers<[1], [0], [0], [1], [0, 0, 1, 1], [], []>} : vector<16x128xbf16>, vector<128x128xbf16>, vector<16x128xf32> -> vector<16x128xf32>
    %7 = arith.addf %3, %6 : vector<16x128xf32>
    %c0_6 = arith.constant 0 : index
    %c0_7 = arith.constant 0 : index
    %8 = vector.load %arg7[%c0_6, %c0_7] : memref<16x128xf32, #tpu.memory_space<vmem>>, vector<16x128xf32>
    tpu.vector_store %arg7[%c0_6, %c0_7], %7 {strides = array<i32>} : memref<16x128xf32, #tpu.memory_space<vmem>>, vector<16x128xf32>,
    %c0_i32_8 = arith.constant 0 : i32
    %9 = arith.cmpi eq, %arg2, %c0_i32_8 : i32
    %10 = arith.extui %9 : i1 to i32
    %c0_i32_9 = arith.constant 0 : i32
    %11 = arith.cmpi ne, %10, %c0_i32_9 : i32
    scf.if %11 {
      %c0_10 = arith.constant 0 : index
      %c0_11 = arith.constant 0 : index
      %12 = vector.load %arg7[%c0_10, %c0_11] : memref<16x128xf32, #tpu.memory_space<vmem>>, vector<16x128xf32>
      %c0_12 = arith.constant 0 : index
      %c0_13 = arith.constant 0 : index
      %13 = vector.load %arg5[%c0_12, %c0_13] : memref<1x128xf32, #tpu.memory_space<vmem>>, vector<1x128xf32>
      %14 = vector.broadcast %13 : vector<1x128xf32> to vector<16x128xf32>
      %15 = arith.addf %12, %14 : vector<16x128xf32>
      %c0_14 = arith.constant 0 : index
      %c0_15 = arith.constant 0 : index
      %16 = vector.load %arg6[%c0_14, %c0_15] : memref<16x128xf32, #tpu.memory_space<vmem>>, vector<16x128xf32>
      tpu.vector_store %arg6[%c0_14, %c0_15], %15 {strides = array<i32>} : memref<16x128xf32, #tpu.memory_space<vmem>>, vector<16x128xf32>,
    } else {
    }
    return
  }
  func.func @transform_0(%arg0: i32, %arg1: i32, %arg2: i32) -> (i32, i32) {
    %c0_i32 = arith.constant 0 : i32
    return %arg0, %arg2 : i32, i32
  }
  func.func @transform_1(%arg0: i32, %arg1: i32, %arg2: i32) -> (i32, i32) {
    %c0_i32 = arith.constant 0 : i32
    return %arg2, %arg1 : i32, i32
  }
  func.func @transform_2(%arg0: i32, %arg1: i32, %arg2: i32) -> (i32, i32) {
    %c0_i32 = arith.constant 0 : i32
    %c0_i32_0 = arith.constant 0 : i32
    return %c0_i32, %arg1 : i32, i32
  }
  func.func @transform_3(%arg0: i32, %arg1: i32, %arg2: i32) -> (i32, i32) {
    %c0_i32 = arith.constant 0 : i32
    return %arg0, %arg1 : i32, i32
  }
}

</mosaic_0001>

<llo_original>
// kernel: transformer_forward.36
$region0: #{transformer_forward.36}
  #allocation0 [shape = 'u32[]', space=smem, size = 0x4, offset = 0x4, fixed_abs, tag = 'smem constant byte address 0x4 - core index']
  #allocation1 [shape = 'u32[144,128]{1,0:T(1,128)}', space=vmem, size = 0x12000, scoped, tag = 'internal scratch']
  #allocation2 [shape = 'f32[16,128]{1,0:T(8,128)}', space=vmem, size = 0x2000, scoped, tag = 'scratch operand']
  %s0 = inlined_call_operand.vmem [shape: bf16[16,128], index: 0, kind: input, shape index: {}]
  %s1 = inlined_call_operand.vmem [shape: bf16[128,128], index: 1, kind: input, shape index: {}]
  %s2 = inlined_call_operand.vmem [shape: f32[1,128], index: 2, kind: input, shape index: {}]
  %s3 = inlined_call_operand.vmem [shape: bf16[16,128], index: 3, kind: output, shape index: {}]
  %s4 = sld [smem:[#allocation0]]
  $region30: #{transformer_forward.36} parent=0
    _
  %s6 = ssub.s32 1, %s4
  %s7 = scalar_select 0, %s6, %s4
  // Predicated region
  $region2: #{transformer_forward.36} parent=0 // pred_check
    _
  $region3: #{transformer_forward.36} parent=0 // pred_check_branch
    %9 = sbr.rel (0) target = $region5
  $region4: #{transformer_forward.36} parent=0 // pred_region
    _
  $region5: #{transformer_forward.36} parent=0 // pred_fallthru
    _
  // Predicated region
  $region6: #{transformer_forward.36} parent=0 // pred_check
    _
  $region7: #{transformer_forward.36} parent=0 // pred_check_branch
    %11 = sbr.rel (0) target = $region9
  $region8: #{transformer_forward.36} parent=0 // pred_region
    _
  $region9: #{transformer_forward.36} parent=0 // pred_fallthru
    _
  // Predicated region
  $region10: #{transformer_forward.36} parent=0 // pred_check
    _
  $region11: #{transformer_forward.36} parent=0 // pred_check_branch
    %13 = sbr.rel (0) target = $region13
  $region12: #{transformer_forward.36} parent=0 // pred_region
    _
  $region13: #{transformer_forward.36} parent=0 // pred_fallthru
    _
  %p15 = scmp.eq.s32.totalorder 0, 0
  // Predicated region
  $region14: #{transformer_forward.36} parent=0 // pred_check
    %p16 = pneg %p15
  $region15: #{transformer_forward.36} parent=0 // pred_check_branch
    %18 = sbr.rel (%p16) target = $region17
  $region16: #{transformer_forward.36} parent=0 // pred_region
    %19 = vst [vmem:[#allocation2] sm:$0xff] 0.0
    %20 = vst [vmem:[#allocation2 + $0x8] sm:$0xff] 0.0
  $region17: #{transformer_forward.36} parent=0 // pred_fallthru
    _
  %v21 = vld [vmem:[#allocation2] sm:$0xff]
  %v22 = vld [vmem:[#allocation2 + $0x8] sm:$0xff]
  %v23 = vld [vmem:[%s0] sm:$0xf]
  %v24 = vld [vmem:[%s0 + $0x4] sm:$0xf]
  %v25 = vld [vmem:[%s1] sm:$0xf]
  %v26 = vld [vmem:[%s1 + $0x4] sm:$0xf]
  %v27 = vld [vmem:[%s1 + $0x8] sm:$0xf]
  %v28 = vld [vmem:[%s1 + $0xc] sm:$0xf]
  %v29 = vld [vmem:[%s1 + $0x10] sm:$0xf]
  %v30 = vld [vmem:[%s1 + $0x14] sm:$0xf]
  %v31 = vld [vmem:[%s1 + $0x18] sm:$0xf]
  %v32 = vld [vmem:[%s1 + $0x1c] sm:$0xf]
  %v33 = vld [vmem:[%s1 + $0x20] sm:$0xf]
  %v34 = vld [vmem:[%s1 + $0x24] sm:$0xf]
  %v35 = vld [vmem:[%s1 + $0x28] sm:$0xf]
  %v36 = vld [vmem:[%s1 + $0x2c] sm:$0xf]
  %v37 = vld [vmem:[%s1 + $0x30] sm:$0xf]
  %v38 = vld [vmem:[%s1 + $0x34] sm:$0xf]
  %v39 = vld [vmem:[%s1 + $0x38] sm:$0xf]
  %v40 = vld [vmem:[%s1 + $0x3c] sm:$0xf]
  %v43 = vunpack.c.l.b16 %v23
  %v44 = vunpack.c.l.b16 %v24
  %v45 = vpack.c.b16 %v44, %v43
  %v63 = vunpack.c.l.b16 %v25
  %v64 = vunpack.c.l.b16 %v26
  %v65 = vunpack.c.l.b16 %v27
  %v66 = vunpack.c.l.b16 %v28
  %v67 = vunpack.c.l.b16 %v29
  %v68 = vunpack.c.l.b16 %v30
  %v69 = vunpack.c.l.b16 %v31
  %v70 = vunpack.c.l.b16 %v32
  %v71 = vunpack.c.l.b16 %v33
  %v72 = vunpack.c.l.b16 %v34
  %v73 = vunpack.c.l.b16 %v35
  %v74 = vunpack.c.l.b16 %v36
  %v75 = vunpack.c.l.b16 %v37
  %v76 = vunpack.c.l.b16 %v38
  %v77 = vunpack.c.l.b16 %v39
  %v78 = vunpack.c.l.b16 %v40
  %v79 = vpack.c.b16 %v64, %v63
  %v80 = vpack.c.b16 %v66, %v65
  %v81 = vpack.c.b16 %v68, %v67
  %v82 = vpack.c.b16 %v70, %v69
  %v83 = vpack.c.b16 %v72, %v71
  %v84 = vpack.c.b16 %v74, %v73
  %v85 = vpack.c.b16 %v76, %v75
  %v86 = vpack.c.b16 %v78, %v77
  %95 = vmatprep.subr.bf16.mxu0 0
  %96 = vmatpush1.bf16.msra.mxu0 %v79
  %97 = vmatprep.subr.bf16.mxu0 0
  %98 = vmatpush1.bf16.msra.mxu0 %v80
  %99 = vmatprep.subr.bf16.mxu0 0
  %100 = vmatpush1.bf16.msra.mxu0 %v81
  %101 = vmatprep.subr.bf16.mxu0 0
  %102 = vmatpush1.bf16.msra.mxu0 %v82
  %103 = vmatprep.subr.bf16.mxu0 0
  %104 = vmatpush1.bf16.msra.mxu0 %v83
  %105 = vmatprep.subr.bf16.mxu0 0
  %106 = vmatpush1.bf16.msra.mxu0 %v84
  %107 = vmatprep.subr.bf16.mxu0 0
  %108 = vmatpush1.bf16.msra.mxu0 %v85
  %109 = vmatprep.subr.bf16.mxu0 0
  %110 = vmatpush1.bf16.msra.mxu0 %v86
  %111 = vmatprep.subr.bf16.mxu0 0
  %112 = vmatpush1.bf16.msra.mxu0 0
  %113 = vmatprep.subr.bf16.mxu0 0
  %114 = vmatpush1.bf16.msra.mxu0 0
  %115 = vmatprep.subr.bf16.mxu0 0
  %116 = vmatpush1.bf16.msra.mxu0 0
  %117 = vmatprep.subr.bf16.mxu0 0
  %118 = vmatpush1.bf16.msra.mxu0 0
  %119 = vmatprep.subr.bf16.mxu0 0
  %120 = vmatpush1.bf16.msra.mxu0 0
  %121 = vmatprep.subr.bf16.mxu0 0
  %122 = vmatpush1.bf16.msra.mxu0 0
  %123 = vmatprep.subr.bf16.mxu0 0
  %124 = vmatpush1.bf16.msra.mxu0 0
  %125 = vmatprep.subr.bf16.mxu0 0
  %126 = vmatpush1.bf16.msra.mxu0 0
  %127 = vmatprep.mubr.bf16.mxu0 0
  %128 = vmatmul.mubr.bf16.gmra.mrb[0].mxu0 %v45
  %v129 = vpop.f32.mrb[0].mxu0
  %v130 = vadd.f32 0.0, %v129
  %v131 = vpop.f32.mrb[0].mxu0
  %v132 = vpop.f32.mrb[0].mxu0
  %v133 = vadd.f32 0.0, %v132
  %v134 = vpop.f32.mrb[0].mxu0
  %135 = vdwg.mxu0
  %v136 = vadd.f32 %v21, %v130
  %v137 = vadd.f32 %v22, %v133
  %138 = vst [vmem:[#allocation2] sm:$0xff] %v136
  %139 = vst [vmem:[#allocation2 + $0x8] sm:$0xff] %v137
  // Predicated region
  $region18: #{transformer_forward.36} parent=0 // pred_check
    %p140 = pneg %p15
  $region19: #{transformer_forward.36} parent=0 // pred_check_branch
    %142 = sbr.rel (%p140) target = $region21
  $region20: #{transformer_forward.36} parent=0 // pred_region
    %v143 = vld [vmem:[#allocation2] sm:$0xff]
    %v144 = vld [vmem:[#allocation2 + $0x8] sm:$0xff]
    %v145 = vld [vmem:[%s2] sm:$0x1]
    %v147 = vlaneseq
    %v148 = vshrl.u32 %v147, 7
    %v149 = vsub.s32 0, %v148
    %v150 = vrot.slane %v145, %v149
    %v152 = vadd.f32 %v143, %v150
    %v153 = vadd.f32 %v144, %v150
    %v154 = vpack.c.bf16 %v153, %v152
    %v156 = vunpack.c.l.b16 %v154
    %v157 = vunpack.c.h.b16 %v154
    %v158 = vpack.c.b16 %v156, %v156
    %v159 = vpack.c.b16 %v157, %v157
    %162 = vst [vmem:[%s3] sm:$0xf] %v158
    %163 = vst [vmem:[%s3 + $0x4] sm:$0xf] %v159
  $region21: #{transformer_forward.36} parent=0 // pred_fallthru
    _
  // Predicated region
  $region22: #{transformer_forward.36} parent=0 // pred_check
    _
  $region23: #{transformer_forward.36} parent=0 // pred_check_branch
    %165 = sbr.rel (0) target = $region25
  $region24: #{transformer_forward.36} parent=0 // pred_region
    _
  $region25: #{transformer_forward.36} parent=0 // pred_fallthru
    _
  // Predicated region
  $region26: #{transformer_forward.36} parent=0 // pred_check
    _
  $region27: #{transformer_forward.36} parent=0 // pred_check_branch
    %167 = sbr.rel (0) target = $region29
  $region28: #{transformer_forward.36} parent=0 // pred_region
    _
  $region29: #{transformer_forward.36} parent=0 // pred_fallthru
    _

// kernel: transformer_forward.33
$region0: #{transformer_forward.33}
  #allocation0 [shape = 'u32[]', space=smem, size = 0x4, offset = 0x4, fixed_abs, tag = 'smem constant byte address 0x4 - core index']
  #allocation1 [shape = 'u32[144,128]{1,0:T(1,128)}', space=vmem, size = 0x12000, scoped, tag = 'internal scratch']
  #allocation2 [shape = 'f32[16,384]{1,0:T(8,128)}', space=vmem, size = 0x6000, scoped, tag = 'scratch operand']
  %s0 = inlined_call_operand.vmem [shape: bf16[16,128], index: 0, kind: input, shape index: {}]
  %s1 = inlined_call_operand.vmem [shape: bf16[128,384], index: 1, kind: input, shape index: {}]
  %s2 = inlined_call_operand.vmem [shape: f32[1,384], index: 2, kind: input, shape index: {}]
  %s3 = inlined_call_operand.vmem [shape: bf16[16,384], index: 3, kind: output, shape index: {}]
  %s4 = sld [smem:[#allocation0]]
  $region30: #{transformer_forward.33} parent=0
    _
  %s6 = ssub.s32 1, %s4
  %s7 = scalar_select 0, %s6, %s4
  // Predicated region
  $region2: #{transformer_forward.33} parent=0 // pred_check
    _
  $region3: #{transformer_forward.33} parent=0 // pred_check_branch
    %9 = sbr.rel (0) target = $region5
  $region4: #{transformer_forward.33} parent=0 // pred_region
    _
  $region5: #{transformer_forward.33} parent=0 // pred_fallthru
    _
  // Predicated region
  $region6: #{transformer_forward.33} parent=0 // pred_check
    _
  $region7: #{transformer_forward.33} parent=0 // pred_check_branch
    %11 = sbr.rel (0) target = $region9
  $region8: #{transformer_forward.33} parent=0 // pred_region
    _
  $region9: #{transformer_forward.33} parent=0 // pred_fallthru
    _
  // Predicated region
  $region10: #{transformer_forward.33} parent=0 // pred_check
    _
  $region11: #{transformer_forward.33} parent=0 // pred_check_branch
    %13 = sbr.rel (0) target = $region13
  $region12: #{transformer_forward.33} parent=0 // pred_region
    _
  $region13: #{transformer_forward.33} parent=0 // pred_fallthru
    _
  %p15 = scmp.eq.s32.totalorder 0, 0
  // Predicated region
  $region14: #{transformer_forward.33} parent=0 // pred_check
    %p16 = pneg %p15
  $region15: #{transformer_forward.33} parent=0 // pred_check_branch
    %18 = sbr.rel (%p16) target = $region17
  $region16: #{transformer_forward.33} parent=0 // pred_region
    %19 = vst [vmem:[#allocation2] sm:$0xff] 0.0
    %20 = vst [vmem:[#allocation2 + $0x8] sm:$0xff] 0.0
    %21 = vst [vmem:[#allocation2 + $0x10] sm:$0xff] 0.0
    %22 = vst [vmem:[#allocation2 + $0x18] sm:$0xff] 0.0
    %23 = vst [vmem:[#allocation2 + $0x20] sm:$0xff] 0.0
    %24 = vst [vmem:[#allocation2 + $0x28] sm:$0xff] 0.0
  $region17: #{transformer_forward.33} parent=0 // pred_fallthru
    _
  %v25 = vld [vmem:[#allocation2] sm:$0xff]
  %v26 = vld [vmem:[#allocation2 + $0x8] sm:$0xff]
  %v27 = vld [vmem:[#allocation2 + $0x10] sm:$0xff]
  %v28 = vld [vmem:[#allocation2 + $0x18] sm:$0xff]
  %v29 = vld [vmem:[#allocation2 + $0x20] sm:$0xff]
  %v30 = vld [vmem:[#allocation2 + $0x28] sm:$0xff]
  %v31 = vld [vmem:[%s0] sm:$0xf]
  %v32 = vld [vmem:[%s0 + $0x4] sm:$0xf]
  %v33 = vld [vmem:[%s1] sm:$0xff]
  %v34 = vld [vmem:[%s1 + $0x8] sm:$0xf]
  %v35 = vld [vmem:[%s1 + $0xc] sm:$0xff]
  %v36 = vld [vmem:[%s1 + $0x14] sm:$0xf]
  %v37 = vld [vmem:[%s1 + $0x18] sm:$0xff]
  %v38 = vld [vmem:[%s1 + $0x20] sm:$0xf]
  %v39 = vld [vmem:[%s1 + $0x24] sm:$0xff]
  %v40 = vld [vmem:[%s1 + $0x2c] sm:$0xf]
  %v41 = vld [vmem:[%s1 + $0x30] sm:$0xff]
  %v42 = vld [vmem:[%s1 + $0x38] sm:$0xf]
  %v43 = vld [vmem:[%s1 + $0x3c] sm:$0xff]
  %v44 = vld [vmem:[%s1 + $0x44] sm:$0xf]
  %v45 = vld [vmem:[%s1 + $0x48] sm:$0xff]
  %v46 = vld [vmem:[%s1 + $0x50] sm:$0xf]
  %v47 = vld [vmem:[%s1 + $0x54] sm:$0xff]
  %v48 = vld [vmem:[%s1 + $0x5c] sm:$0xf]
  %v49 = vld [vmem:[%s1 + $0x60] sm:$0xff]
  %v50 = vld [vmem:[%s1 + $0x68] sm:$0xf]
  %v51 = vld [vmem:[%s1 + $0x6c] sm:$0xff]
  %v52 = vld [vmem:[%s1 + $0x74] sm:$0xf]
  %v53 = vld [vmem:[%s1 + $0x78] sm:$0xff]
  %v54 = vld [vmem:[%s1 + $0x80] sm:$0xf]
  %v55 = vld [vmem:[%s1 + $0x84] sm:$0xff]
  %v56 = vld [vmem:[%s1 + $0x8c] sm:$0xf]
  %v57 = vld [vmem:[%s1 + $0x90] sm:$0xff]
  %v58 = vld [vmem:[%s1 + $0x98] sm:$0xf]
  %v59 = vld [vmem:[%s1 + $0x9c] sm:$0xff]
  %v60 = vld [vmem:[%s1 + $0xa4] sm:$0xf]
  %v61 = vld [vmem:[%s1 + $0xa8] sm:$0xff]
  %v62 = vld [vmem:[%s1 + $0xb0] sm:$0xf]
  %v63 = vld [vmem:[%s1 + $0xb4] sm:$0xff]
  %v64 = vld [vmem:[%s1 + $0xbc] sm:$0xf]
  %v67 = vunpack.c.l.b16 %v31
  %v68 = vunpack.c.l.b16 %v32
  %v69 = vpack.c.b16 %v68, %v67
  %v103 = vunpack.c.l.b16 %v33
  %v104 = vunpack.c.h.b16 %v33
  %v105 = vunpack.c.l.b16 %v34
  %v106 = vunpack.c.l.b16 %v35
  %v107 = vunpack.c.h.b16 %v35
  %v108 = vunpack.c.l.b16 %v36
  %v109 = vunpack.c.l.b16 %v37
  %v110 = vunpack.c.h.b16 %v37
  %v111 = vunpack.c.l.b16 %v38
  %v112 = vunpack.c.l.b16 %v39
  %v113 = vunpack.c.h.b16 %v39
  %v114 = vunpack.c.l.b16 %v40
  %v115 = vunpack.c.l.b16 %v41
  %v116 = vunpack.c.h.b16 %v41
  %v117 = vunpack.c.l.b16 %v42
  %v118 = vunpack.c.l.b16 %v43
  %v119 = vunpack.c.h.b16 %v43
  %v120 = vunpack.c.l.b16 %v44
  %v121 = vunpack.c.l.b16 %v45
  %v122 = vunpack.c.h.b16 %v45
  %v123 = vunpack.c.l.b16 %v46
  %v124 = vunpack.c.l.b16 %v47
  %v125 = vunpack.c.h.b16 %v47
  %v126 = vunpack.c.l.b16 %v48
  %v127 = vunpack.c.l.b16 %v49
  %v128 = vunpack.c.h.b16 %v49
  %v129 = vunpack.c.l.b16 %v50
  %v130 = vunpack.c.l.b16 %v51
  %v131 = vunpack.c.h.b16 %v51
  %v132 = vunpack.c.l.b16 %v52
  %v133 = vunpack.c.l.b16 %v53
  %v134 = vunpack.c.h.b16 %v53
  %v135 = vunpack.c.l.b16 %v54
  %v136 = vunpack.c.l.b16 %v55
  %v137 = vunpack.c.h.b16 %v55
  %v138 = vunpack.c.l.b16 %v56
  %v139 = vunpack.c.l.b16 %v57
  %v140 = vunpack.c.h.b16 %v57
  %v141 = vunpack.c.l.b16 %v58
  %v142 = vunpack.c.l.b16 %v59
  %v143 = vunpack.c.h.b16 %v59
  %v144 = vunpack.c.l.b16 %v60
  %v145 = vunpack.c.l.b16 %v61
  %v146 = vunpack.c.h.b16 %v61
  %v147 = vunpack.c.l.b16 %v62
  %v148 = vunpack.c.l.b16 %v63
  %v149 = vunpack.c.h.b16 %v63
  %v150 = vunpack.c.l.b16 %v64
  %v151 = vpack.c.b16 %v106, %v103
  %v152 = vpack.c.b16 %v107, %v104
  %v153 = vpack.c.b16 %v108, %v105
  %v154 = vpack.c.b16 %v112, %v109
  %v155 = vpack.c.b16 %v113, %v110
  %v156 = vpack.c.b16 %v114, %v111
  %v157 = vpack.c.b16 %v118, %v115
  %v158 = vpack.c.b16 %v119, %v116
  %v159 = vpack.c.b16 %v120, %v117
  %v160 = vpack.c.b16 %v124, %v121
  %v161 = vpack.c.b16 %v125, %v122
  %v162 = vpack.c.b16 %v126, %v123
  %v163 = vpack.c.b16 %v130, %v127
  %v164 = vpack.c.b16 %v131, %v128
  %v165 = vpack.c.b16 %v132, %v129
  %v166 = vpack.c.b16 %v136, %v133
  %v167 = vpack.c.b16 %v137, %v134
  %v168 = vpack.c.b16 %v138, %v135
  %v169 = vpack.c.b16 %v142, %v139
  %v170 = vpack.c.b16 %v143, %v140
  %v171 = vpack.c.b16 %v144, %v141
  %v172 = vpack.c.b16 %v148, %v145
  %v173 = vpack.c.b16 %v149, %v146
  %v174 = vpack.c.b16 %v150, %v147
  %199 = vmatprep.subr.bf16.mxu0 %v152
  %200 = vmatpush1.bf16.msra.mxu0 %v151
  %201 = vmatprep.subr.bf16.mxu0 %v155
  %202 = vmatpush1.bf16.msra.mxu0 %v154
  %203 = vmatprep.subr.bf16.mxu0 %v158
  %204 = vmatpush1.bf16.msra.mxu0 %v157
  %205 = vmatprep.subr.bf16.mxu0 %v161
  %206 = vmatpush1.bf16.msra.mxu0 %v160
  %207 = vmatprep.subr.bf16.mxu0 %v164
  %208 = vmatpush1.bf16.msra.mxu0 %v163
  %209 = vmatprep.subr.bf16.mxu0 %v167
  %210 = vmatpush1.bf16.msra.mxu0 %v166
  %211 = vmatprep.subr.bf16.mxu0 %v170
  %212 = vmatpush1.bf16.msra.mxu0 %v169
  %213 = vmatprep.subr.bf16.mxu0 %v173
  %214 = vmatpush1.bf16.msra.mxu0 %v172
  %215 = vmatprep.subr.bf16.mxu0 0
  %216 = vmatpush1.bf16.msra.mxu0 0
  %217 = vmatprep.subr.bf16.mxu0 0
  %218 = vmatpush1.bf16.msra.mxu0 0
  %219 = vmatprep.subr.bf16.mxu0 0
  %220 = vmatpush1.bf16.msra.mxu0 0
  %221 = vmatprep.subr.bf16.mxu0 0
  %222 = vmatpush1.bf16.msra.mxu0 0
  %223 = vmatprep.subr.bf16.mxu0 0
  %224 = vmatpush1.bf16.msra.mxu0 0
  %225 = vmatprep.subr.bf16.mxu0 0
  %226 = vmatpush1.bf16.msra.mxu0 0
  %227 = vmatprep.subr.bf16.mxu0 0
  %228 = vmatpush1.bf16.msra.mxu0 0
  %229 = vmatprep.subr.bf16.mxu0 0
  %230 = vmatpush1.bf16.msra.mxu0 0
  %231 = vmatprep.mubr.bf16.mxu0 0
  %232 = vmatmul.mubr.bf16.gmra.mrb[0].mxu0 %v69
  %v233 = vpop.f32.mrb[0].mxu0
  %v234 = vadd.f32 0.0, %v233
  %v235 = vpop.f32.mrb[0].mxu0
  %v236 = vadd.f32 0.0, %v235
  %v237 = vpop.f32.mrb[0].mxu0
  %v238 = vadd.f32 0.0, %v237
  %v239 = vpop.f32.mrb[0].mxu0
  %v240 = vadd.f32 0.0, %v239
  %241 = vdwg.mxu0
  %242 = vmatprep.subr.bf16.mxu0 0
  %243 = vmatpush1.bf16.msra.mxu0 %v153
  %244 = vmatprep.subr.bf16.mxu0 0
  %245 = vmatpush1.bf16.msra.mxu0 %v156
  %246 = vmatprep.subr.bf16.mxu0 0
  %247 = vmatpush1.bf16.msra.mxu0 %v159
  %248 = vmatprep.subr.bf16.mxu0 0
  %249 = vmatpush1.bf16.msra.mxu0 %v162
  %250 = vmatprep.subr.bf16.mxu0 0
  %251 = vmatpush1.bf16.msra.mxu0 %v165
  %252 = vmatprep.subr.bf16.mxu0 0
  %253 = vmatpush1.bf16.msra.mxu0 %v168
  %254 = vmatprep.subr.bf16.mxu0 0
  %255 = vmatpush1.bf16.msra.mxu0 %v171
  %256 = vmatprep.subr.bf16.mxu0 0
  %257 = vmatpush1.bf16.msra.mxu0 %v174
  %258 = vmatprep.subr.bf16.mxu0 0
  %259 = vmatpush1.bf16.msra.mxu0 0
  %260 = vmatprep.subr.bf16.mxu0 0
  %261 = vmatpush1.bf16.msra.mxu0 0
  %262 = vmatprep.subr.bf16.mxu0 0
  %263 = vmatpush1.bf16.msra.mxu0 0
  %264 = vmatprep.subr.bf16.mxu0 0
  %265 = vmatpush1.bf16.msra.mxu0 0
  %266 = vmatprep.subr.bf16.mxu0 0
  %267 = vmatpush1.bf16.msra.mxu0 0
  %268 = vmatprep.subr.bf16.mxu0 0
  %269 = vmatpush1.bf16.msra.mxu0 0
  %270 = vmatprep.subr.bf16.mxu0 0
  %271 = vmatpush1.bf16.msra.mxu0 0
  %272 = vmatprep.subr.bf16.mxu0 0
  %273 = vmatpush1.bf16.msra.mxu0 0
  %274 = vmatprep.mubr.bf16.mxu0 0
  %275 = vmatmul.mubr.bf16.gmra.mrb[0].mxu0 %v69
  %v276 = vpop.f32.mrb[0].mxu0
  %v277 = vadd.f32 0.0, %v276
  %v278 = vpop.f32.mrb[0].mxu0
  %v279 = vpop.f32.mrb[0].mxu0
  %v280 = vadd.f32 0.0, %v279
  %v281 = vpop.f32.mrb[0].mxu0
  %282 = vdwg.mxu0
  %v283 = vadd.f32 %v25, %v234
  %v284 = vadd.f32 %v26, %v236
  %v285 = vadd.f32 %v27, %v277
  %v286 = vadd.f32 %v28, %v238
  %v287 = vadd.f32 %v29, %v240
  %v288 = vadd.f32 %v30, %v280
  %289 = vst [vmem:[#allocation2] sm:$0xff] %v283
  %290 = vst [vmem:[#allocation2 + $0x8] sm:$0xff] %v284
  %291 = vst [vmem:[#allocation2 + $0x10] sm:$0xff] %v285
  %292 = vst [vmem:[#allocation2 + $0x18] sm:$0xff] %v286
  %293 = vst [vmem:[#allocation2 + $0x20] sm:$0xff] %v287
  %294 = vst [vmem:[#allocation2 + $0x28] sm:$0xff] %v288
  // Predicated region
  $region18: #{transformer_forward.33} parent=0 // pred_check
    %p295 = pneg %p15
  $region19: #{transformer_forward.33} parent=0 // pred_check_branch
    %297 = sbr.rel (%p295) target = $region21
  $region20: #{transformer_forward.33} parent=0 // pred_region
    %v298 = vld [vmem:[#allocation2] sm:$0xff]
    %v299 = vld [vmem:[#allocation2 + $0x8] sm:$0xff]
    %v300 = vld [vmem:[#allocation2 + $0x10] sm:$0xff]
    %v301 = vld [vmem:[#allocation2 + $0x18] sm:$0xff]
    %v302 = vld [vmem:[#allocation2 + $0x20] sm:$0xff]
    %v303 = vld [vmem:[#allocation2 + $0x28] sm:$0xff]
    %v304 = vld [vmem:[%s2] sm:$0x7]
    %v306 = vlaneseq
    %v307 = vshrl.u32 %v306, 7
    %v308 = vsub.s32 0, %v307
    %v309 = vrot.slane %v304, %v308
    %v310 = vlaneseq
    %v311 = vshrl.u32 %v310, 7
    %v312 = vsub.s32 1, %v311
    %v313 = vrot.slane %v304, %v312
    %v314 = vlaneseq
    %v315 = vshrl.u32 %v314, 7
    %v316 = vsub.s32 2, %v315
    %v317 = vrot.slane %v304, %v316
    %v321 = vadd.f32 %v298, %v309
    %v322 = vadd.f32 %v299, %v313
    %v323 = vadd.f32 %v300, %v317
    %v324 = vadd.f32 %v301, %v309
    %v325 = vadd.f32 %v302, %v313
    %v326 = vadd.f32 %v303, %v317
    %v327 = vpack.c.bf16 %v324, %v321
    %v328 = vpack.c.bf16 %v325, %v322
    %v329 = vpack.c.bf16 %v326, %v323
    %v333 = vunpack.c.l.b16 %v327
    %v334 = vunpack.c.l.b16 %v328
    %v335 = vunpack.c.l.b16 %v329
    %v336 = vunpack.c.h.b16 %v327
    %v337 = vunpack.c.h.b16 %v328
    %v338 = vunpack.c.h.b16 %v329
    %v339 = vpack.c.b16 %v334, %v333
    %v340 = vpack.c.b16 %v335, %v335
    %v341 = vpack.c.b16 %v337, %v336
    %v342 = vpack.c.b16 %v338, %v338
    %347 = vst [vmem:[%s3] sm:$0xff] %v339
    %348 = vst [vmem:[%s3 + $0x8] sm:$0xf] %v340
    %349 = vst [vmem:[%s3 + $0xc] sm:$0xff] %v341
    %350 = vst [vmem:[%s3 + $0x14] sm:$0xf] %v342
  $region21: #{transformer_forward.33} parent=0 // pred_fallthru
    _
  // Predicated region
  $region22: #{transformer_forward.33} parent=0 // pred_check
    _
  $region23: #{transformer_forward.33} parent=0 // pred_check_branch
    %352 = sbr.rel (0) target = $region25
  $region24: #{transformer_forward.33} parent=0 // pred_region
    _
  $region25: #{transformer_forward.33} parent=0 // pred_fallthru
    _
  // Predicated region
  $region26: #{transformer_forward.33} parent=0 // pred_check
    _
  $region27: #{transformer_forward.33} parent=0 // pred_check_branch
    %354 = sbr.rel (0) target = $region29
  $region28: #{transformer_forward.33} parent=0 // pred_region
    _
  $region29: #{transformer_forward.33} parent=0 // pred_fallthru
    _

// kernel: transformer_forward.35
$region0: #{transformer_forward.35}
  #allocation0 [shape = 'u32[]', space=smem, size = 0x4, offset = 0x4, fixed_abs, tag = 'smem constant byte address 0x4 - core index']
  #allocation1 [shape = 'u32[144,128]{1,0:T(1,128)}', space=vmem, size = 0x12000, scoped, tag = 'internal scratch']
  #allocation2 [shape = 'f32[16,128]{1,0:T(8,128)}', space=vmem, size = 0x2000, scoped, tag = 'scratch operand']
  %s0 = inlined_call_operand.vmem [shape: bf16[16,128], index: 0, kind: input, shape index: {}]
  %s1 = inlined_call_operand.vmem [shape: bf16[128,128], index: 1, kind: input, shape index: {}]
  %s2 = inlined_call_operand.vmem [shape: f32[1,128], index: 2, kind: input, shape index: {}]
  %s3 = inlined_call_operand.vmem [shape: bf16[16,128], index: 3, kind: input, shape index: {}]
  %s4 = inlined_call_operand.vmem [shape: f32[1,128], index: 4, kind: input, shape index: {}]
  %s5 = inlined_call_operand.vmem [shape: f32[1,128], index: 5, kind: input, shape index: {}]
  %s6 = inlined_call_operand.vmem [shape: bf16[16,128], index: 6, kind: output, shape index: {}]
  %s7 = sld [smem:[#allocation0]]
  $region42: #{transformer_forward.35} parent=0
    _
  %s9 = ssub.s32 1, %s7
  %s10 = scalar_select 0, %s9, %s7
  // Predicated region
  $region2: #{transformer_forward.35} parent=0 // pred_check
    _
  $region3: #{transformer_forward.35} parent=0 // pred_check_branch
    %12 = sbr.rel (0) target = $region5
  $region4: #{transformer_forward.35} parent=0 // pred_region
    _
  $region5: #{transformer_forward.35} parent=0 // pred_fallthru
    _
  // Predicated region
  $region6: #{transformer_forward.35} parent=0 // pred_check
    _
  $region7: #{transformer_forward.35} parent=0 // pred_check_branch
    %14 = sbr.rel (0) target = $region9
  $region8: #{transformer_forward.35} parent=0 // pred_region
    _
  $region9: #{transformer_forward.35} parent=0 // pred_fallthru
    _
  // Predicated region
  $region10: #{transformer_forward.35} parent=0 // pred_check
    _
  $region11: #{transformer_forward.35} parent=0 // pred_check_branch
    %16 = sbr.rel (0) target = $region13
  $region12: #{transformer_forward.35} parent=0 // pred_region
    _
  $region13: #{transformer_forward.35} parent=0 // pred_fallthru
    _
  // Predicated region
  $region14: #{transformer_forward.35} parent=0 // pred_check
    _
  $region15: #{transformer_forward.35} parent=0 // pred_check_branch
    %18 = sbr.rel (0) target = $region17
  $region16: #{transformer_forward.35} parent=0 // pred_region
    _
  $region17: #{transformer_forward.35} parent=0 // pred_fallthru
    _
  // Predicated region
  $region18: #{transformer_forward.35} parent=0 // pred_check
    _
  $region19: #{transformer_forward.35} parent=0 // pred_check_branch
    %20 = sbr.rel (0) target = $region21
  $region20: #{transformer_forward.35} parent=0 // pred_region
    _
  $region21: #{transformer_forward.35} parent=0 // pred_fallthru
    _
  // Predicated region
  $region22: #{transformer_forward.35} parent=0 // pred_check
    _
  $region23: #{transformer_forward.35} parent=0 // pred_check_branch
    %22 = sbr.rel (0) target = $region25
  $region24: #{transformer_forward.35} parent=0 // pred_region
    _
  $region25: #{transformer_forward.35} parent=0 // pred_fallthru
    _
  %p24 = scmp.eq.s32.totalorder 0, 0
  // Predicated region
  $region26: #{transformer_forward.35} parent=0 // pred_check
    %p25 = pneg %p24
  $region27: #{transformer_forward.35} parent=0 // pred_check_branch
    %27 = sbr.rel (%p25) target = $region29
  $region28: #{transformer_forward.35} parent=0 // pred_region
    %28 = vst [vmem:[#allocation2] sm:$0xff] 0.0
    %29 = vst [vmem:[#allocation2 + $0x8] sm:$0xff] 0.0
  $region29: #{transformer_forward.35} parent=0 // pred_fallthru
    _
  %v30 = vld [vmem:[#allocation2] sm:$0xff]
  %v31 = vld [vmem:[#allocation2 + $0x8] sm:$0xff]
  %v32 = vld [vmem:[%s0] sm:$0xf]
  %v33 = vld [vmem:[%s0 + $0x4] sm:$0xf]
  %v34 = vld [vmem:[%s1] sm:$0xf]
  %v35 = vld [vmem:[%s1 + $0x4] sm:$0xf]
  %v36 = vld [vmem:[%s1 + $0x8] sm:$0xf]
  %v37 = vld [vmem:[%s1 + $0xc] sm:$0xf]
  %v38 = vld [vmem:[%s1 + $0x10] sm:$0xf]
  %v39 = vld [vmem:[%s1 + $0x14] sm:$0xf]
  %v40 = vld [vmem:[%s1 + $0x18] sm:$0xf]
  %v41 = vld [vmem:[%s1 + $0x1c] sm:$0xf]
  %v42 = vld [vmem:[%s1 + $0x20] sm:$0xf]
  %v43 = vld [vmem:[%s1 + $0x24] sm:$0xf]
  %v44 = vld [vmem:[%s1 + $0x28] sm:$0xf]
  %v45 = vld [vmem:[%s1 + $0x2c] sm:$0xf]
  %v46 = vld [vmem:[%s1 + $0x30] sm:$0xf]
  %v47 = vld [vmem:[%s1 + $0x34] sm:$0xf]
  %v48 = vld [vmem:[%s1 + $0x38] sm:$0xf]
  %v49 = vld [vmem:[%s1 + $0x3c] sm:$0xf]
  %v52 = vunpack.c.l.b16 %v32
  %v53 = vunpack.c.l.b16 %v33
  %v54 = vpack.c.b16 %v53, %v52
  %v72 = vunpack.c.l.b16 %v34
  %v73 = vunpack.c.l.b16 %v35
  %v74 = vunpack.c.l.b16 %v36
  %v75 = vunpack.c.l.b16 %v37
  %v76 = vunpack.c.l.b16 %v38
  %v77 = vunpack.c.l.b16 %v39
  %v78 = vunpack.c.l.b16 %v40
  %v79 = vunpack.c.l.b16 %v41
  %v80 = vunpack.c.l.b16 %v42
  %v81 = vunpack.c.l.b16 %v43
  %v82 = vunpack.c.l.b16 %v44
  %v83 = vunpack.c.l.b16 %v45
  %v84 = vunpack.c.l.b16 %v46
  %v85 = vunpack.c.l.b16 %v47
  %v86 = vunpack.c.l.b16 %v48
  %v87 = vunpack.c.l.b16 %v49
  %v88 = vpack.c.b16 %v73, %v72
  %v89 = vpack.c.b16 %v75, %v74
  %v90 = vpack.c.b16 %v77, %v76
  %v91 = vpack.c.b16 %v79, %v78
  %v92 = vpack.c.b16 %v81, %v80
  %v93 = vpack.c.b16 %v83, %v82
  %v94 = vpack.c.b16 %v85, %v84
  %v95 = vpack.c.b16 %v87, %v86
  %104 = vmatprep.subr.bf16.mxu0 0
  %105 = vmatpush1.bf16.msra.mxu0 %v88
  %106 = vmatprep.subr.bf16.mxu0 0
  %107 = vmatpush1.bf16.msra.mxu0 %v89
  %108 = vmatprep.subr.bf16.mxu0 0
  %109 = vmatpush1.bf16.msra.mxu0 %v90
  %110 = vmatprep.subr.bf16.mxu0 0
  %111 = vmatpush1.bf16.msra.mxu0 %v91
  %112 = vmatprep.subr.bf16.mxu0 0
  %113 = vmatpush1.bf16.msra.mxu0 %v92
  %114 = vmatprep.subr.bf16.mxu0 0
  %115 = vmatpush1.bf16.msra.mxu0 %v93
  %116 = vmatprep.subr.bf16.mxu0 0
  %117 = vmatpush1.bf16.msra.mxu0 %v94
  %118 = vmatprep.subr.bf16.mxu0 0
  %119 = vmatpush1.bf16.msra.mxu0 %v95
  %120 = vmatprep.subr.bf16.mxu0 0
  %121 = vmatpush1.bf16.msra.mxu0 0
  %122 = vmatprep.subr.bf16.mxu0 0
  %123 = vmatpush1.bf16.msra.mxu0 0
  %124 = vmatprep.subr.bf16.mxu0 0
  %125 = vmatpush1.bf16.msra.mxu0 0
  %126 = vmatprep.subr.bf16.mxu0 0
  %127 = vmatpush1.bf16.msra.mxu0 0
  %128 = vmatprep.subr.bf16.mxu0 0
  %129 = vmatpush1.bf16.msra.mxu0 0
  %130 = vmatprep.subr.bf16.mxu0 0
  %131 = vmatpush1.bf16.msra.mxu0 0
  %132 = vmatprep.subr.bf16.mxu0 0
  %133 = vmatpush1.bf16.msra.mxu0 0
  %134 = vmatprep.subr.bf16.mxu0 0
  %135 = vmatpush1.bf16.msra.mxu0 0
  %136 = vmatprep.mubr.bf16.mxu0 0
  %137 = vmatmul.mubr.bf16.gmra.mrb[0].mxu0 %v54
  %v138 = vpop.f32.mrb[0].mxu0
  %v139 = vadd.f32 0.0, %v138
  %v140 = vpop.f32.mrb[0].mxu0
  %v141 = vpop.f32.mrb[0].mxu0
  %v142 = vadd.f32 0.0, %v141
  %v143 = vpop.f32.mrb[0].mxu0
  %144 = vdwg.mxu0
  %v145 = vadd.f32 %v30, %v139
  %v146 = vadd.f32 %v31, %v142
  %147 = vst [vmem:[#allocation2] sm:$0xff] %v145
  %148 = vst [vmem:[#allocation2 + $0x8] sm:$0xff] %v146
  // Predicated region
  $region30: #{transformer_forward.35} parent=0 // pred_check
    %p149 = pneg %p24
  $region31: #{transformer_forward.35} parent=0 // pred_check_branch
    %151 = sbr.rel (%p149) target = $region33
  $region32: #{transformer_forward.35} parent=0 // pred_region
    %v152 = vld [vmem:[#allocation2] sm:$0xff]
    %v153 = vld [vmem:[#allocation2 + $0x8] sm:$0xff]
    %v154 = vld [vmem:[%s2] sm:$0x1]
    %v156 = vlaneseq
    %v157 = vshrl.u32 %v156, 7
    %v158 = vsub.s32 0, %v157
    %v159 = vrot.slane %v154, %v158
    %v161 = vadd.f32 %v152, %v159
    %v162 = vadd.f32 %v153, %v159
    %v163 = vld [vmem:[%s3] sm:$0xf]
    %v164 = vld [vmem:[%s3 + $0x4] sm:$0xf]
    %v165 = vunpack.c.l.bf16 %v163
    %v166 = vunpack.c.l.bf16 %v164
    %v167 = vadd.f32 %v161, %v165
    %v168 = vadd.f32 %v162, %v166
    %169 = vadd.xlane.f32.xlu0 %v167
    %v170 = vpop.xlane.xlu0 %169
    %171 = vadd.xlane.f32.xlu0 %v168
    %v172 = vpop.xlane.xlu0 %171
    %v173 = vrcp.pop 128.0
    %v174 = vmul.f32 %v170, %v173
    %v175 = vmul.f32 %v172, %v173
    %v176 = vsub.f32 %v167, %v174
    %v177 = vsub.f32 %v168, %v175
    %v178 = vmul.f32 %v176, %v176
    %v179 = vmul.f32 %v177, %v177
    %180 = vadd.xlane.f32.xlu0 %v178
    %v181 = vpop.xlane.xlu0 %180
    %182 = vadd.xlane.f32.xlu0 %v179
    %v183 = vpop.xlane.xlu0 %182
    %v184 = vmul.f32 %v181, %v173
    %v185 = vmul.f32 %v183, %v173
    %v186 = vadd.f32 %v184, 1e-05
    %v187 = vadd.f32 %v185, 1e-05
    %v188 = vrsqrt.pop %v186
    %v189 = vrsqrt.pop %v187
    %v190 = vmul.f32 %v176, %v188
    %v191 = vmul.f32 %v177, %v189
    %v192 = vld [vmem:[%s4] sm:$0x1]
    %v194 = vlaneseq
    %v195 = vshrl.u32 %v194, 7
    %v196 = vsub.s32 0, %v195
    %v197 = vrot.slane %v192, %v196
    %v199 = vmul.f32 %v190, %v197
    %v200 = vmul.f32 %v191, %v197
    %v201 = vld [vmem:[%s5] sm:$0x1]
    %v203 = vlaneseq
    %v204 = vshrl.u32 %v203, 7
    %v205 = vsub.s32 0, %v204
    %v206 = vrot.slane %v201, %v205
    %v208 = vadd.f32 %v199, %v206
    %v209 = vadd.f32 %v200, %v206
    %v210 = vpack.c.bf16 %v209, %v208
    %v212 = vunpack.c.l.b16 %v210
    %v213 = vunpack.c.h.b16 %v210
    %v214 = vpack.c.b16 %v212, %v212
    %v215 = vpack.c.b16 %v213, %v213
    %218 = vst [vmem:[%s6] sm:$0xf] %v214
    %219 = vst [vmem:[%s6 + $0x4] sm:$0xf] %v215
  $region33: #{transformer_forward.35} parent=0 // pred_fallthru
    _
  // Predicated region
  $region34: #{transformer_forward.35} parent=0 // pred_check
    _
  $region35: #{transformer_forward.35} parent=0 // pred_check_branch
    %221 = sbr.rel (0) target = $region37
  $region36: #{transformer_forward.35} parent=0 // pred_region
    _
  $region37: #{transformer_forward.35} parent=0 // pred_fallthru
    _
  // Predicated region
  $region38: #{transformer_forward.35} parent=0 // pred_check
    _
  $region39: #{transformer_forward.35} parent=0 // pred_check_branch
    %223 = sbr.rel (0) target = $region41
  $region40: #{transformer_forward.35} parent=0 // pred_region
    _
  $region41: #{transformer_forward.35} parent=0 // pred_fallthru
    _

// kernel: transformer_forward.34
$region0: #{transformer_forward.34}
  #allocation0 [shape = 'u32[]', space=smem, size = 0x4, offset = 0x4, fixed_abs, tag = 'smem constant byte address 0x4 - core index']
  #allocation1 [shape = 'u32[144,128]{1,0:T(1,128)}', space=vmem, size = 0x12000, scoped, tag = 'internal scratch']
  #allocation2 [shape = 's32[1]{0}', space=sflag, size = 0x4, scoped, tag = 'scoped memory for transformer_forward.34']
  #allocation3 [shape = 'u8[512]{0}', space=smem, size = 0x200, scoped, tag = 'prefetched SMEM operand 0']
  %s0 = inlined_call_operand.vmem [shape: s32[2], index: 0, kind: input, shape index: {}]
  %s1 = inlined_call_operand.vmem [shape: bf16[2,8,384], index: 1, kind: input, shape index: {}, may-alias: {1,2,3}]
  %s2 = inlined_call_operand.vmem [shape: bf16[2,8,384], index: 2, kind: input, shape index: {}, may-alias: {1,2,3}]
  %s3 = inlined_call_operand.vmem [shape: bf16[2,8,384], index: 3, kind: input, shape index: {}, may-alias: {1,2,3}]
  %s4 = inlined_call_operand.vmem [shape: bf16[2,8,128], index: 4, kind: output, shape index: {}]
  %s5 = sld [smem:[#allocation0]]
  $region45: #{transformer_forward.34} parent=0
    _
  %s7 = ssub.s32 1, %s5
  %s8 = scalar_select 0, %s7, %s5
  %s9 = sshll.u32 %s0, 4
  %s10 = int_to_ptr.vmem [resolvable:$true] %s9
  %12 = dma.vmem_to_smem %s10, 16, [#allocation3], [#allocation2]
  %13 = dma.done [#allocation2], 16
  %14 = sfence
  loop: start=0, step=1, limit=4
  $region2: #{transformer_forward.34} parent=0 // loop_pre_header
    _
  $region3: #{transformer_forward.34} parent=0 // loop_header
    %s16 = sphi 0, %s20
    %p17 = scmp.ge.s32.totalorder %s16, 4
    %s26 = sphi 0, %s28
    %s29 = sphi 0, %s26
    %s30 = sphi 0, %s29
    %s46 = sphi 0, %s30
    %s52 = sphi 0, %s54
    %s55 = sphi 0, %s52
    %s56 = sphi 0, %s55
    %s72 = sphi 0, %s56
    %s78 = sphi 0, %s80
    %s81 = sphi 0, %s78
    %s82 = sphi 0, %s81
    %s98 = sphi 0, %s82
    %s104 = sphi 0, %s106
    %s107 = sphi 0, %s104
    %s108 = sphi 0, %s107
    %s124 = sphi 0, %s108
  $region4: #{transformer_forward.34} parent=0 // loop_header_branch
    %19 = sbr.rel (%p17) target = $region8
  $region5: #{transformer_forward.34} parent=0 // loop_body
    %s21 = ssub.s32 %s16, 1
    %s22 = ssub.s32 %s16, 2
    %s23 = sadd.s32 %s16, 1
    %s24 = ssub.s32 %s16, %s23
    %p25 = scmp.eq.s32.totalorder %s24, 0
    %s27 = sadd.s32 %s26, 1
    %s28 = scalar_select %p25, %s26, %s27
    %p31 = pneg %p25
    %p32 = scmp.eq.s32.totalorder %s16, 1
    %p33 = por %p31, %p32
    %p34 = scmp.ne.s32.totalorder %s26, %s29
    %p35 = scmp.eq.s32.totalorder %s16, 0
    %p36 = por %p34, %p35
    %p37 = scmp.ne.s32.totalorder %s26, %s29
    %p38 = scmp.eq.s32.totalorder %s21, 1
    %p39 = por %p37, %p38
    %p40 = scmp.ne.s32.totalorder %s29, %s30
    %p41 = scmp.eq.s32.totalorder %s21, 0
    %p42 = por %p40, %p41
    %p43 = scmp.ne.s32.totalorder %s29, %s30
    %p44 = scmp.eq.s32.totalorder %s22, 1
    %p45 = por %p43, %p44
    %p47 = scmp.ne.s32.totalorder %s30, %s46
    %p48 = scmp.eq.s32.totalorder %s22, 0
    %p49 = por %p47, %p48
    %s50 = ssub.s32 %s16, %s23
    %p51 = scmp.eq.s32.totalorder %s50, 0
    %s53 = sadd.s32 %s52, 1
    %s54 = scalar_select %p51, %s52, %s53
    %p57 = pneg %p51
    %p58 = scmp.eq.s32.totalorder %s16, 1
    %p59 = por %p57, %p58
    %p60 = scmp.ne.s32.totalorder %s52, %s55
    %p61 = scmp.eq.s32.totalorder %s16, 0
    %p62 = por %p60, %p61
    %p63 = scmp.ne.s32.totalorder %s52, %s55
    %p64 = scmp.eq.s32.totalorder %s21, 1
    %p65 = por %p63, %p64
    %p66 = scmp.ne.s32.totalorder %s55, %s56
    %p67 = scmp.eq.s32.totalorder %s21, 0
    %p68 = por %p66, %p67
    %p69 = scmp.ne.s32.totalorder %s55, %s56
    %p70 = scmp.eq.s32.totalorder %s22, 1
    %p71 = por %p69, %p70
    %p73 = scmp.ne.s32.totalorder %s56, %s72
    %p74 = scmp.eq.s32.totalorder %s22, 0
    %p75 = por %p73, %p74
    %s76 = ssub.s32 %s16, %s23
    %p77 = scmp.eq.s32.totalorder %s76, 0
    %s79 = sadd.s32 %s78, 1
    %s80 = scalar_select %p77, %s78, %s79
    %p83 = pneg %p77
    %p84 = scmp.eq.s32.totalorder %s16, 1
    %p85 = por %p83, %p84
    %p86 = scmp.ne.s32.totalorder %s78, %s81
    %p87 = scmp.eq.s32.totalorder %s16, 0
    %p88 = por %p86, %p87
    %p89 = scmp.ne.s32.totalorder %s78, %s81
    %p90 = scmp.eq.s32.totalorder %s21, 1
    %p91 = por %p89, %p90
    %p92 = scmp.ne.s32.totalorder %s81, %s82
    %p93 = scmp.eq.s32.totalorder %s21, 0
    %p94 = por %p92, %p93
    %p95 = scmp.ne.s32.totalorder %s81, %s82
    %p96 = scmp.eq.s32.totalorder %s22, 1
    %p97 = por %p95, %p96
    %p99 = scmp.ne.s32.totalorder %s82, %s98
    %p100 = scmp.eq.s32.totalorder %s22, 0
    %p101 = por %p99, %p100
    %s102 = ssub.s32 %s16, %s23
    %p103 = scmp.eq.s32.totalorder %s102, 0
    %s105 = sadd.s32 %s104, 1
    %s106 = scalar_select %p103, %s104, %s105
    %p109 = pneg %p103
    %p110 = scmp.eq.s32.totalorder %s16, 1
    %p111 = por %p109, %p110
    %p112 = scmp.ne.s32.totalorder %s104, %s107
    %p113 = scmp.eq.s32.totalorder %s16, 0
    %p114 = por %p112, %p113
    %p115 = scmp.ne.s32.totalorder %s104, %s107
    %p116 = scmp.eq.s32.totalorder %s21, 1
    %p117 = por %p115, %p116
    %p118 = scmp.ne.s32.totalorder %s107, %s108
    %p119 = scmp.eq.s32.totalorder %s21, 0
    %p120 = por %p118, %p119
    %p121 = scmp.ne.s32.totalorder %s107, %s108
    %p122 = scmp.eq.s32.totalorder %s22, 1
    %p123 = por %p121, %p122
    %p125 = scmp.ne.s32.totalorder %s108, %s124
    %p126 = scmp.eq.s32.totalorder %s22, 0
    %p127 = por %p125, %p126
    %p128 = scmp.le.s32.totalorder 1, %s16
    %p129 = scmp.lt.s32.totalorder %s16, 3
    %p130 = pnand %p128, %p129
    %p131 = pneg %p130
    // Predicated region
    $region9: #{transformer_forward.34} parent=5 // pred_check
      _
    $region10: #{transformer_forward.34} parent=5 // pred_check_branch
      %133 = sbr.rel (%p130) target = $region12
    $region11: #{transformer_forward.34} parent=5 // pred_region
      %s134 = ssub.s32 %s16, 1
    $region12: #{transformer_forward.34} parent=5 // pred_fallthru
      _
    %p135 = scmp.lt.s32.totalorder %s16, 2
    // Predicated region
    $region13: #{transformer_forward.34} parent=5 // pred_check
      %p136 = pneg %p135
    $region14: #{transformer_forward.34} parent=5 // pred_check_branch
      %138 = sbr.rel (%p136) target = $region16
    $region15: #{transformer_forward.34} parent=5 // pred_region
      // Predicated region
      $region17: #{transformer_forward.34} parent=15 // pred_check
        %p139 = pneg %p36
      $region18: #{transformer_forward.34} parent=15 // pred_check_branch
        %141 = sbr.rel (%p139) target = $region20
      $region19: #{transformer_forward.34} parent=15 // pred_region
        %p142 = scmp.lt.s32.totalorder %s16, 1
        %s143 = scalar_select %p142, %s16, 1
        %s144 = smul.addr %s143, 3
        %s145 = smul.addr %s144, 4
        %s146 = scalar_lea.vmem %s1, %s145
      $region20: #{transformer_forward.34} parent=15 // pred_fallthru
        _
      // Predicated region
      $region21: #{transformer_forward.34} parent=15 // pred_check
        %p147 = pneg %p62
      $region22: #{transformer_forward.34} parent=15 // pred_check_branch
        %149 = sbr.rel (%p147) target = $region24
      $region23: #{transformer_forward.34} parent=15 // pred_region
        %p150 = scmp.lt.s32.totalorder %s16, 1
        %s151 = scalar_select %p150, %s16, 1
        %s152 = smul.addr %s151, 3
        %s153 = sadd.s32 1, %s152
        %s154 = smul.addr %s153, 4
        %s155 = scalar_lea.vmem %s2, %s154
      $region24: #{transformer_forward.34} parent=15 // pred_fallthru
        _
      // Predicated region
      $region25: #{transformer_forward.34} parent=15 // pred_check
        %p156 = pneg %p88
      $region26: #{transformer_forward.34} parent=15 // pred_check_branch
        %158 = sbr.rel (%p156) target = $region28
      $region27: #{transformer_forward.34} parent=15 // pred_region
        %p159 = scmp.lt.s32.totalorder %s16, 1
        %s160 = scalar_select %p159, %s16, 1
        %s161 = smul.addr %s160, 3
        %s162 = sadd.s32 2, %s161
        %s163 = smul.addr %s162, 4
        %s164 = scalar_lea.vmem %s3, %s163
      $region28: #{transformer_forward.34} parent=15 // pred_fallthru
        _
    $region16: #{transformer_forward.34} parent=5 // pred_fallthru
      _
    %p165 = scmp.le.s32.totalorder 1, %s16
    %p166 = scmp.lt.s32.totalorder %s16, 3
    %p167 = pnand %p165, %p166
    %p168 = pneg %p167
    // Predicated region
    $region29: #{transformer_forward.34} parent=5 // pred_check
      _
    $region30: #{transformer_forward.34} parent=5 // pred_check_branch
      %170 = sbr.rel (%p167) target = $region32
    $region31: #{transformer_forward.34} parent=5 // pred_region
      %s171 = ssub.s32 %s16, 1
      %p172 = scmp.lt.s32.totalorder %s21, 1
      %s173 = scalar_select %p172, %s21, 1
      %s174 = smul.addr %s173, 3
      %s175 = smul.addr %s174, 4
      %s176 = scalar_lea.vmem %s1, %s175
      %p177 = pneg %p42
      %p178 = pneg %p39
      %p179 = scmp.lt.s32.totalorder %s21, 1
      %s180 = scalar_select %p179, %s21, 1
      %s181 = smul.addr %s180, 3
      %s182 = sadd.s32 1, %s181
      %s183 = smul.addr %s182, 4
      %s184 = scalar_lea.vmem %s2, %s183
      %p185 = pneg %p68
      %p186 = pneg %p65
      %p187 = scmp.lt.s32.totalorder %s21, 1
      %s188 = scalar_select %p187, %s21, 1
      %s189 = smul.addr %s188, 3
      %s190 = sadd.s32 2, %s189
      %s191 = smul.addr %s190, 4
      %s192 = scalar_lea.vmem %s3, %s191
      %p193 = pneg %p94
      %p194 = pneg %p91
      %p195 = pneg %p120
      %p196 = pneg %p117
      %p197 = scmp.lt.s32.totalorder %s21, 1
      %s198 = scalar_select %p197, %s21, 1
      %s199 = smul.addr %s198, 4
      %s200 = scalar_lea.vmem %s4, %s199
      %p201 = scmp.lt.s32.totalorder %s21, 1
      %s202 = scalar_select %p201, %s21, 1
      %s203 = smul.addr %s202, 3
      %s204 = smul.addr %s203, 4
      %s205 = scalar_lea.vmem %s1, %s204
      %p206 = scmp.lt.s32.totalorder %s21, 1
      %s207 = scalar_select %p206, %s21, 1
      %s208 = smul.addr %s207, 3
      %s209 = sadd.s32 1, %s208
      %s210 = smul.addr %s209, 4
      %s211 = scalar_lea.vmem %s2, %s210
      %p212 = scmp.lt.s32.totalorder %s21, 1
      %s213 = scalar_select %p212, %s21, 1
      %s214 = smul.addr %s213, 3
      %s215 = sadd.s32 2, %s214
      %s216 = smul.addr %s215, 4
      %s217 = scalar_lea.vmem %s3, %s216
      %p218 = scmp.lt.s32.totalorder %s21, 1
      %s219 = scalar_select %p218, %s21, 1
      %s220 = smul.addr %s219, 4
      %s221 = scalar_lea.vmem %s4, %s220
      %v223 = vld [vmem:[%s205] sm:$0xf]
      %v224 = vld [vmem:[%s211] sm:$0xf]
      %v225 = vld [vmem:[%s217] sm:$0xf]
      %v226 = vlaneseq
      %v227 = vand.u32 %v226, 127
      %s228 = sld [smem:[#allocation3 + %s21]]
      %v229 = vstv %s228
      %vm230 = vcmp.lt.s32.totalorder %v227, %v229
      %v231 = vlaneseq
      %v232 = vshrl.u32 %v231, 7
      %vm233 = vcmp.le.s32.totalorder %v227, %v232
      %vm234 = vmand %vm230, %vm233
      %vm235 = vcmask 261120
      %v237 = vsel %vm235, %v223, 0
      %v240 = vsel %vm235, %v224, 0
      %242 = vmatprep.subr.bf16.mxu0 0
      %243 = vmatpush1.bf16.xpose.msra.mxu0 %v240
      %244 = vmatprep.subr.bf16.mxu0 0
      %245 = vmatpush1.bf16.xpose.msra.mxu0 0
      %246 = vmatprep.subr.bf16.mxu0 0
      %247 = vmatpush1.bf16.xpose.msra.mxu0 0
      %248 = vmatprep.subr.bf16.mxu0 0
      %249 = vmatpush1.bf16.xpose.msra.mxu0 0
      %250 = vmatprep.subr.bf16.mxu0 0
      %251 = vmatpush1.bf16.xpose.msra.mxu0 0
      %252 = vmatprep.subr.bf16.mxu0 0
      %253 = vmatpush1.bf16.xpose.msra.mxu0 0
      %254 = vmatprep.subr.bf16.mxu0 0
      %255 = vmatpush1.bf16.xpose.msra.mxu0 0
      %256 = vmatprep.subr.bf16.mxu0 0
      %257 = vmatpush1.bf16.xpose.msra.mxu0 0
      %258 = vmatprep.subr.bf16.mxu0 0
      %259 = vmatpush1.bf16.xpose.msra.mxu0 0
      %260 = vmatprep.subr.bf16.mxu0 0
      %261 = vmatpush1.bf16.xpose.msra.mxu0 0
      %262 = vmatprep.subr.bf16.mxu0 0
      %263 = vmatpush1.bf16.xpose.msra.mxu0 0
      %264 = vmatprep.subr.bf16.mxu0 0
      %265 = vmatpush1.bf16.xpose.msra.mxu0 0
      %266 = vmatprep.subr.bf16.mxu0 0
      %267 = vmatpush1.bf16.xpose.msra.mxu0 0
      %268 = vmatprep.subr.bf16.mxu0 0
      %269 = vmatpush1.bf16.xpose.msra.mxu0 0
      %270 = vmatprep.subr.bf16.mxu0 0
      %271 = vmatpush1.bf16.xpose.msra.mxu0 0
      %272 = vmatprep.subr.bf16.mxu0 0
      %273 = vmatpush1.bf16.xpose.msra.mxu0 0
      %274 = vmatprep.mubr.bf16.mxu0 0
      %275 = vmatmul.mubr.bf16.gmra.mrb[0].mxu0 %v237
      %v276 = vpop.f32.mrb[0].mxu0
      %v277 = vadd.f32 0.0, %v276
      %v278 = vpop.f32.mrb[0].mxu0
      %v279 = vpop.f32.mrb[0].mxu0
      %v280 = vpop.f32.mrb[0].mxu0
      %281 = vdwg.mxu0
      %v282 = vsel %vm234, %v277, -1e+30
      %vm283 = vcmask 64512
      %v284 = vsel %vm283, %v282, -inf
      %285 = vmax.xlane.f32.xlu0 %v284
      %v286 = vpop.xlane.xlu0 %285
      %v287 = vsub.f32 %v282, %v286
      %v288 = vmul.f32 %v287, 1.442695
      %v289 = vpow.pop %v288
      %v290 = vsel %vm283, %v289, 0.0
      %291 = vadd.xlane.f32.xlu0 %v290
      %v292 = vpop.xlane.xlu0 %291
      %v293 = vrcp.pop %v292
      %v294 = vmul.f32 %v289, %v293
      %v295 = vpack.c.bf16 %v294, %v294
      %v297 = vsel %vm283, %v295, 0
      %vm299 = vcmask 1043456
      %v301 = vsel %vm299, %v225, 0
      %303 = vmatprep.subr.bf16.mxu0 0
      %304 = vmatpush1.bf16.msra.mxu0 %v301
      %305 = vmatprep.subr.bf16.mxu0 0
      %306 = vmatpush1.bf16.msra.mxu0 0
      %307 = vmatprep.subr.bf16.mxu0 0
      %308 = vmatpush1.bf16.msra.mxu0 0
      %309 = vmatprep.subr.bf16.mxu0 0
      %310 = vmatpush1.bf16.msra.mxu0 0
      %311 = vmatprep.subr.bf16.mxu0 0
      %312 = vmatpush1.bf16.msra.mxu0 0
      %313 = vmatprep.subr.bf16.mxu0 0
      %314 = vmatpush1.bf16.msra.mxu0 0
      %315 = vmatprep.subr.bf16.mxu0 0
      %316 = vmatpush1.bf16.msra.mxu0 0
      %317 = vmatprep.subr.bf16.mxu0 0
      %318 = vmatpush1.bf16.msra.mxu0 0
      %319 = vmatprep.subr.bf16.mxu0 0
      %320 = vmatpush1.bf16.msra.mxu0 0
      %321 = vmatprep.subr.bf16.mxu0 0
      %322 = vmatpush1.bf16.msra.mxu0 0
      %323 = vmatprep.subr.bf16.mxu0 0
      %324 = vmatpush1.bf16.msra.mxu0 0
      %325 = vmatprep.subr.bf16.mxu0 0
      %326 = vmatpush1.bf16.msra.mxu0 0
      %327 = vmatprep.subr.bf16.mxu0 0
      %328 = vmatpush1.bf16.msra.mxu0 0
      %329 = vmatprep.subr.bf16.mxu0 0
      %330 = vmatpush1.bf16.msra.mxu0 0
      %331 = vmatprep.subr.bf16.mxu0 0
      %332 = vmatpush1.bf16.msra.mxu0 0
      %333 = vmatprep.subr.bf16.mxu0 0
      %334 = vmatpush1.bf16.msra.mxu0 0
      %335 = vmatprep.mubr.bf16.mxu0 0
      %336 = vmatmul.mubr.bf16.gmra.mrb[0].mxu0 %v297
      %v337 = vpop.f32.mrb[0].mxu0
      %v338 = vadd.f32 0.0, %v337
      %v339 = vpop.f32.mrb[0].mxu0
      %v340 = vpop.f32.mrb[0].mxu0
      %v341 = vpop.f32.mrb[0].mxu0
      %342 = vdwg.mxu0
      %v343 = vpack.c.bf16 %v338, %v338
      %vm344 = vcmask 257024
      %345 = vst.msk [vmem:[%s221] sm:$0xf] %vm344, %v343
      %v347 = vunpack.c.l.b16 %v223
      %v348 = vpack.c.b16 %v347, %v347
      %349 = vrot.lane.b32.xlu0 %v348, 96
      %v350 = vpop.permute.xlu0 %349
      %v352 = vunpack.c.l.b16 %v224
      %v353 = vpack.c.b16 %v352, %v352
      %354 = vrot.lane.b32.xlu0 %v353, 96
      %v355 = vpop.permute.xlu0 %354
      %v357 = vsel %vm235, %v350, 0
      %v360 = vsel %vm235, %v355, 0
      %362 = vmatprep.subr.bf16.mxu0 0
      %363 = vmatpush1.bf16.xpose.msra.mxu0 %v360
      %364 = vmatprep.subr.bf16.mxu0 0
      %365 = vmatpush1.bf16.xpose.msra.mxu0 0
      %366 = vmatprep.subr.bf16.mxu0 0
      %367 = vmatpush1.bf16.xpose.msra.mxu0 0
      %368 = vmatprep.subr.bf16.mxu0 0
      %369 = vmatpush1.bf16.xpose.msra.mxu0 0
      %370 = vmatprep.subr.bf16.mxu0 0
      %371 = vmatpush1.bf16.xpose.msra.mxu0 0
      %372 = vmatprep.subr.bf16.mxu0 0
      %373 = vmatpush1.bf16.xpose.msra.mxu0 0
      %374 = vmatprep.subr.bf16.mxu0 0
      %375 = vmatpush1.bf16.xpose.msra.mxu0 0
      %376 = vmatprep.subr.bf16.mxu0 0
      %377 = vmatpush1.bf16.xpose.msra.mxu0 0
      %378 = vmatprep.subr.bf16.mxu0 0
      %379 = vmatpush1.bf16.xpose.msra.mxu0 0
      %380 = vmatprep.subr.bf16.mxu0 0
      %381 = vmatpush1.bf16.xpose.msra.mxu0 0
      %382 = vmatprep.subr.bf16.mxu0 0
      %383 = vmatpush1.bf16.xpose.msra.mxu0 0
      %384 = vmatprep.subr.bf16.mxu0 0
      %385 = vmatpush1.bf16.xpose.msra.mxu0 0
      %386 = vmatprep.subr.bf16.mxu0 0
      %387 = vmatpush1.bf16.xpose.msra.mxu0 0
      %388 = vmatprep.subr.bf16.mxu0 0
      %389 = vmatpush1.bf16.xpose.msra.mxu0 0
      %390 = vmatprep.subr.bf16.mxu0 0
      %391 = vmatpush1.bf16.xpose.msra.mxu0 0
      %392 = vmatprep.subr.bf16.mxu0 0
      %393 = vmatpush1.bf16.xpose.msra.mxu0 0
      %394 = vmatprep.mubr.bf16.mxu0 0
      %395 = vmatmul.mubr.bf16.gmra.mrb[0].mxu0 %v357
      %v396 = vpop.f32.mrb[0].mxu0
      %v397 = vadd.f32 0.0, %v396
      %v398 = vpop.f32.mrb[0].mxu0
      %v399 = vpop.f32.mrb[0].mxu0
      %v400 = vpop.f32.mrb[0].mxu0
      %401 = vdwg.mxu0
      %v402 = vsel %vm234, %v397, -1e+30
      %v403 = vsel %vm283, %v402, -inf
      %404 = vmax.xlane.f32.xlu0 %v403
      %v405 = vpop.xlane.xlu0 %404
      %v406 = vsub.f32 %v402, %v405
      %v407 = vmul.f32 %v406, 1.442695
      %v408 = vpow.pop %v407
      %v409 = vsel %vm283, %v408, 0.0
      %410 = vadd.xlane.f32.xlu0 %v409
      %v411 = vpop.xlane.xlu0 %410
      %v412 = vrcp.pop %v411
      %v413 = vmul.f32 %v408, %v412
      %v414 = vpack.c.bf16 %v413, %v413
      %v416 = vunpack.c.l.b16 %v225
      %v417 = vpack.c.b16 %v416, %v416
      %418 = vrot.lane.b32.xlu0 %v417, 96
      %v419 = vpop.permute.xlu0 %418
      %v421 = vsel %vm283, %v414, 0
      %v424 = vsel %vm299, %v419, 0
      %426 = vmatprep.subr.bf16.mxu0 0
      %427 = vmatpush1.bf16.msra.mxu0 %v424
      %428 = vmatprep.subr.bf16.mxu0 0
      %429 = vmatpush1.bf16.msra.mxu0 0
      %430 = vmatprep.subr.bf16.mxu0 0
      %431 = vmatpush1.bf16.msra.mxu0 0
      %432 = vmatprep.subr.bf16.mxu0 0
      %433 = vmatpush1.bf16.msra.mxu0 0
      %434 = vmatprep.subr.bf16.mxu0 0
      %435 = vmatpush1.bf16.msra.mxu0 0
      %436 = vmatprep.subr.bf16.mxu0 0
      %437 = vmatpush1.bf16.msra.mxu0 0
      %438 = vmatprep.subr.bf16.mxu0 0
      %439 = vmatpush1.bf16.msra.mxu0 0
      %440 = vmatprep.subr.bf16.mxu0 0
      %441 = vmatpush1.bf16.msra.mxu0 0
      %442 = vmatprep.subr.bf16.mxu0 0
      %443 = vmatpush1.bf16.msra.mxu0 0
      %444 = vmatprep.subr.bf16.mxu0 0
      %445 = vmatpush1.bf16.msra.mxu0 0
      %446 = vmatprep.subr.bf16.mxu0 0
      %447 = vmatpush1.bf16.msra.mxu0 0
      %448 = vmatprep.subr.bf16.mxu0 0
      %449 = vmatpush1.bf16.msra.mxu0 0
      %450 = vmatprep.subr.bf16.mxu0 0
      %451 = vmatpush1.bf16.msra.mxu0 0
      %452 = vmatprep.subr.bf16.mxu0 0
      %453 = vmatpush1.bf16.msra.mxu0 0
      %454 = vmatprep.subr.bf16.mxu0 0
      %455 = vmatpush1.bf16.msra.mxu0 0
      %456 = vmatprep.subr.bf16.mxu0 0
      %457 = vmatpush1.bf16.msra.mxu0 0
      %458 = vmatprep.mubr.bf16.mxu0 0
      %459 = vmatmul.mubr.bf16.gmra.mrb[0].mxu0 %v421
      %v460 = vpop.f32.mrb[0].mxu0
      %v461 = vadd.f32 0.0, %v460
      %v462 = vpop.f32.mrb[0].mxu0
      %v463 = vpop.f32.mrb[0].mxu0
      %v464 = vpop.f32.mrb[0].mxu0
      %465 = vdwg.mxu0
      %v466 = vpack.c.bf16 %v461, %v461
      %v468 = vunpack.c.l.b16 %v466
      %v469 = vpack.c.b16 %v468, %v468
      %470 = vrot.lane.b32.xlu0 %v469, 32
      %v471 = vpop.permute.xlu0 %470
      %vm473 = vcmask 519424
      %474 = vst.msk [vmem:[%s221] sm:$0xf] %vm473, %v471
      %475 = vrot.lane.b32.xlu0 %v348, 64
      %v476 = vpop.permute.xlu0 %475
      %477 = vrot.lane.b32.xlu0 %v353, 64
      %v478 = vpop.permute.xlu0 %477
      %v480 = vsel %vm235, %v476, 0
      %v483 = vsel %vm235, %v478, 0
      %485 = vmatprep.subr.bf16.mxu0 0
      %486 = vmatpush1.bf16.xpose.msra.mxu0 %v483
      %487 = vmatprep.subr.bf16.mxu0 0
      %488 = vmatpush1.bf16.xpose.msra.mxu0 0
      %489 = vmatprep.subr.bf16.mxu0 0
      %490 = vmatpush1.bf16.xpose.msra.mxu0 0
      %491 = vmatprep.subr.bf16.mxu0 0
      %492 = vmatpush1.bf16.xpose.msra.mxu0 0
      %493 = vmatprep.subr.bf16.mxu0 0
      %494 = vmatpush1.bf16.xpose.msra.mxu0 0
      %495 = vmatprep.subr.bf16.mxu0 0
      %496 = vmatpush1.bf16.xpose.msra.mxu0 0
      %497 = vmatprep.subr.bf16.mxu0 0
      %498 = vmatpush1.bf16.xpose.msra.mxu0 0
      %499 = vmatprep.subr.bf16.mxu0 0
      %500 = vmatpush1.bf16.xpose.msra.mxu0 0
      %501 = vmatprep.subr.bf16.mxu0 0
      %502 = vmatpush1.bf16.xpose.msra.mxu0 0
      %503 = vmatprep.subr.bf16.mxu0 0
      %504 = vmatpush1.bf16.xpose.msra.mxu0 0
      %505 = vmatprep.subr.bf16.mxu0 0
      %506 = vmatpush1.bf16.xpose.msra.mxu0 0
      %507 = vmatprep.subr.bf16.mxu0 0
      %508 = vmatpush1.bf16.xpose.msra.mxu0 0
      %509 = vmatprep.subr.bf16.mxu0 0
      %510 = vmatpush1.bf16.xpose.msra.mxu0 0
      %511 = vmatprep.subr.bf16.mxu0 0
      %512 = vmatpush1.bf16.xpose.msra.mxu0 0
      %513 = vmatprep.subr.bf16.mxu0 0
      %514 = vmatpush1.bf16.xpose.msra.mxu0 0
      %515 = vmatprep.subr.bf16.mxu0 0
      %516 = vmatpush1.bf16.xpose.msra.mxu0 0
      %517 = vmatprep.mubr.bf16.mxu0 0
      %518 = vmatmul.mubr.bf16.gmra.mrb[0].mxu0 %v480
      %v519 = vpop.f32.mrb[0].mxu0
      %v520 = vadd.f32 0.0, %v519
      %v521 = vpop.f32.mrb[0].mxu0
      %v522 = vpop.f32.mrb[0].mxu0
      %v523 = vpop.f32.mrb[0].mxu0
      %524 = vdwg.mxu0
      %v525 = vsel %vm234, %v520, -1e+30
      %v526 = vsel %vm283, %v525, -inf
      %527 = vmax.xlane.f32.xlu0 %v526
      %v528 = vpop.xlane.xlu0 %527
      %v529 = vsub.f32 %v525, %v528
      %v530 = vmul.f32 %v529, 1.442695
      %v531 = vpow.pop %v530
      %v532 = vsel %vm283, %v531, 0.0
      %533 = vadd.xlane.f32.xlu0 %v532
      %v534 = vpop.xlane.xlu0 %533
      %v535 = vrcp.pop %v534
      %v536 = vmul.f32 %v531, %v535
      %v537 = vpack.c.bf16 %v536, %v536
      %538 = vrot.lane.b32.xlu0 %v417, 64
      %v539 = vpop.permute.xlu0 %538
      %v541 = vsel %vm283, %v537, 0
      %v544 = vsel %vm299, %v539, 0
      %546 = vmatprep.subr.bf16.mxu0 0
      %547 = vmatpush1.bf16.msra.mxu0 %v544
      %548 = vmatprep.subr.bf16.mxu0 0
      %549 = vmatpush1.bf16.msra.mxu0 0
      %550 = vmatprep.subr.bf16.mxu0 0
      %551 = vmatpush1.bf16.msra.mxu0 0
      %552 = vmatprep.subr.bf16.mxu0 0
      %553 = vmatpush1.bf16.msra.mxu0 0
      %554 = vmatprep.subr.bf16.mxu0 0
      %555 = vmatpush1.bf16.msra.mxu0 0
      %556 = vmatprep.subr.bf16.mxu0 0
      %557 = vmatpush1.bf16.msra.mxu0 0
      %558 = vmatprep.subr.bf16.mxu0 0
      %559 = vmatpush1.bf16.msra.mxu0 0
      %560 = vmatprep.subr.bf16.mxu0 0
      %561 = vmatpush1.bf16.msra.mxu0 0
      %562 = vmatprep.subr.bf16.mxu0 0
      %563 = vmatpush1.bf16.msra.mxu0 0
      %564 = vmatprep.subr.bf16.mxu0 0
      %565 = vmatpush1.bf16.msra.mxu0 0
      %566 = vmatprep.subr.bf16.mxu0 0
      %567 = vmatpush1.bf16.msra.mxu0 0
      %568 = vmatprep.subr.bf16.mxu0 0
      %569 = vmatpush1.bf16.msra.mxu0 0
      %570 = vmatprep.subr.bf16.mxu0 0
      %571 = vmatpush1.bf16.msra.mxu0 0
      %572 = vmatprep.subr.bf16.mxu0 0
      %573 = vmatpush1.bf16.msra.mxu0 0
      %574 = vmatprep.subr.bf16.mxu0 0
      %575 = vmatpush1.bf16.msra.mxu0 0
      %576 = vmatprep.subr.bf16.mxu0 0
      %577 = vmatpush1.bf16.msra.mxu0 0
      %578 = vmatprep.mubr.bf16.mxu0 0
      %579 = vmatmul.mubr.bf16.gmra.mrb[0].mxu0 %v541
      %v580 = vpop.f32.mrb[0].mxu0
      %v581 = vadd.f32 0.0, %v580
      %v582 = vpop.f32.mrb[0].mxu0
      %v583 = vpop.f32.mrb[0].mxu0
      %v584 = vpop.f32.mrb[0].mxu0
      %585 = vdwg.mxu0
      %v586 = vpack.c.bf16 %v581, %v581
      %v588 = vunpack.c.l.b16 %v586
      %v589 = vpack.c.b16 %v588, %v588
      %590 = vrot.lane.b32.xlu0 %v589, 64
      %v591 = vpop.permute.xlu0 %590
      %vm593 = vcmask 781824
      %594 = vst.msk [vmem:[%s221] sm:$0xf] %vm593, %v591
      %595 = vrot.lane.b32.xlu0 %v348, 32
      %v596 = vpop.permute.xlu0 %595
      %597 = vrot.lane.b32.xlu0 %v353, 32
      %v598 = vpop.permute.xlu0 %597
      %v600 = vsel %vm235, %v596, 0
      %v603 = vsel %vm235, %v598, 0
      %605 = vmatprep.subr.bf16.mxu0 0
      %606 = vmatpush1.bf16.xpose.msra.mxu0 %v603
      %607 = vmatprep.subr.bf16.mxu0 0
      %608 = vmatpush1.bf16.xpose.msra.mxu0 0
      %609 = vmatprep.subr.bf16.mxu0 0
      %610 = vmatpush1.bf16.xpose.msra.mxu0 0
      %611 = vmatprep.subr.bf16.mxu0 0
      %612 = vmatpush1.bf16.xpose.msra.mxu0 0
      %613 = vmatprep.subr.bf16.mxu0 0
      %614 = vmatpush1.bf16.xpose.msra.mxu0 0
      %615 = vmatprep.subr.bf16.mxu0 0
      %616 = vmatpush1.bf16.xpose.msra.mxu0 0
      %617 = vmatprep.subr.bf16.mxu0 0
      %618 = vmatpush1.bf16.xpose.msra.mxu0 0
      %619 = vmatprep.subr.bf16.mxu0 0
      %620 = vmatpush1.bf16.xpose.msra.mxu0 0
      %621 = vmatprep.subr.bf16.mxu0 0
      %622 = vmatpush1.bf16.xpose.msra.mxu0 0
      %623 = vmatprep.subr.bf16.mxu0 0
      %624 = vmatpush1.bf16.xpose.msra.mxu0 0
      %625 = vmatprep.subr.bf16.mxu0 0
      %626 = vmatpush1.bf16.xpose.msra.mxu0 0
      %627 = vmatprep.subr.bf16.mxu0 0
      %628 = vmatpush1.bf16.xpose.msra.mxu0 0
      %629 = vmatprep.subr.bf16.mxu0 0
      %630 = vmatpush1.bf16.xpose.msra.mxu0 0
      %631 = vmatprep.subr.bf16.mxu0 0
      %632 = vmatpush1.bf16.xpose.msra.mxu0 0
      %633 = vmatprep.subr.bf16.mxu0 0
      %634 = vmatpush1.bf16.xpose.msra.mxu0 0
      %635 = vmatprep.subr.bf16.mxu0 0
      %636 = vmatpush1.bf16.xpose.msra.mxu0 0
      %637 = vmatprep.mubr.bf16.mxu0 0
      %638 = vmatmul.mubr.bf16.gmra.mrb[0].mxu0 %v600
      %v639 = vpop.f32.mrb[0].mxu0
      %v640 = vadd.f32 0.0, %v639
      %v641 = vpop.f32.mrb[0].mxu0
      %v642 = vpop.f32.mrb[0].mxu0
      %v643 = vpop.f32.mrb[0].mxu0
      %644 = vdwg.mxu0
      %v645 = vsel %vm234, %v640, -1e+30
      %v646 = vsel %vm283, %v645, -inf
      %647 = vmax.xlane.f32.xlu0 %v646
      %v648 = vpop.xlane.xlu0 %647
      %v649 = vsub.f32 %v645, %v648
      %v650 = vmul.f32 %v649, 1.442695
      %v651 = vpow.pop %v650
      %v652 = vsel %vm283, %v651, 0.0
      %653 = vadd.xlane.f32.xlu0 %v652
      %v654 = vpop.xlane.xlu0 %653
      %v655 = vrcp.pop %v654
      %v656 = vmul.f32 %v651, %v655
      %v657 = vpack.c.bf16 %v656, %v656
      %658 = vrot.lane.b32.xlu0 %v417, 32
      %v659 = vpop.permute.xlu0 %658
      %v661 = vsel %vm283, %v657, 0
      %v664 = vsel %vm299, %v659, 0
      %666 = vmatprep.subr.bf16.mxu0 0
      %667 = vmatpush1.bf16.msra.mxu0 %v664
      %668 = vmatprep.subr.bf16.mxu0 0
      %669 = vmatpush1.bf16.msra.mxu0 0
      %670 = vmatprep.subr.bf16.mxu0 0
      %671 = vmatpush1.bf16.msra.mxu0 0
      %672 = vmatprep.subr.bf16.mxu0 0
      %673 = vmatpush1.bf16.msra.mxu0 0
      %674 = vmatprep.subr.bf16.mxu0 0
      %675 = vmatpush1.bf16.msra.mxu0 0
      %676 = vmatprep.subr.bf16.mxu0 0
      %677 = vmatpush1.bf16.msra.mxu0 0
      %678 = vmatprep.subr.bf16.mxu0 0
      %679 = vmatpush1.bf16.msra.mxu0 0
      %680 = vmatprep.subr.bf16.mxu0 0
      %681 = vmatpush1.bf16.msra.mxu0 0
      %682 = vmatprep.subr.bf16.mxu0 0
      %683 = vmatpush1.bf16.msra.mxu0 0
      %684 = vmatprep.subr.bf16.mxu0 0
      %685 = vmatpush1.bf16.msra.mxu0 0
      %686 = vmatprep.subr.bf16.mxu0 0
      %687 = vmatpush1.bf16.msra.mxu0 0
      %688 = vmatprep.subr.bf16.mxu0 0
      %689 = vmatpush1.bf16.msra.mxu0 0
      %690 = vmatprep.subr.bf16.mxu0 0
      %691 = vmatpush1.bf16.msra.mxu0 0
      %692 = vmatprep.subr.bf16.mxu0 0
      %693 = vmatpush1.bf16.msra.mxu0 0
      %694 = vmatprep.subr.bf16.mxu0 0
      %695 = vmatpush1.bf16.msra.mxu0 0
      %696 = vmatprep.subr.bf16.mxu0 0
      %697 = vmatpush1.bf16.msra.mxu0 0
      %698 = vmatprep.mubr.bf16.mxu0 0
      %699 = vmatmul.mubr.bf16.gmra.mrb[0].mxu0 %v661
      %v700 = vpop.f32.mrb[0].mxu0
      %v701 = vadd.f32 0.0, %v700
      %v702 = vpop.f32.mrb[0].mxu0
      %v703 = vpop.f32.mrb[0].mxu0
      %v704 = vpop.f32.mrb[0].mxu0
      %705 = vdwg.mxu0
      %v706 = vpack.c.bf16 %v701, %v701
      %v708 = vunpack.c.l.b16 %v706
      %v709 = vpack.c.b16 %v708, %v708
      %710 = vrot.lane.b32.xlu0 %v709, 96
      %v711 = vpop.permute.xlu0 %710
      %vm713 = vcmask 1044224
      %714 = vst.msk [vmem:[%s221] sm:$0xf] %vm713, %v711
      %p715 = scmp.lt.s32.totalorder %s21, 1
      %s716 = scalar_select %p715, %s21, 1
      %s717 = smul.addr %s716, 4
      %s718 = scalar_lea.vmem %s4, %s717
      // Predicated region
      $region33: #{transformer_forward.34} parent=31 // pred_check
        %p719 = pneg %p117
      $region34: #{transformer_forward.34} parent=31 // pred_check_branch
        %721 = sbr.rel (%p719) target = $region36
      $region35: #{transformer_forward.34} parent=31 // pred_region
        _
      $region36: #{transformer_forward.34} parent=31 // pred_fallthru
        _
    $region32: #{transformer_forward.34} parent=5 // pred_fallthru
      _
    %p722 = scmp.le.s32.totalorder 2, %s16
    // Predicated region
    $region37: #{transformer_forward.34} parent=5 // pred_check
      %p723 = pneg %p722
    $region38: #{transformer_forward.34} parent=5 // pred_check_branch
      %725 = sbr.rel (%p723) target = $region40
    $region39: #{transformer_forward.34} parent=5 // pred_region
      %s726 = ssub.s32 %s16, 2
      // Predicated region
      $region41: #{transformer_forward.34} parent=39 // pred_check
        %p727 = pneg %p123
      $region42: #{transformer_forward.34} parent=39 // pred_check_branch
        %729 = sbr.rel (%p727) target = $region44
      $region43: #{transformer_forward.34} parent=39 // pred_region
        %p730 = scmp.lt.s32.totalorder %s22, 1
        %s731 = scalar_select %p730, %s22, 1
        %s732 = smul.addr %s731, 4
        %s733 = scalar_lea.vmem %s4, %s732
      $region44: #{transformer_forward.34} parent=39 // pred_fallthru
        _
    $region40: #{transformer_forward.34} parent=5 // pred_fallthru
      _
  $region6: #{transformer_forward.34} parent=0 // loop_footer
    %s20 = sadd.s32 1, %s16
  $region7: #{transformer_forward.34} parent=0 // loop_footer_branch
    %15 = sbr.rel target = $region3
  $region8: #{transformer_forward.34} parent=0 // loop_exit
    _

// kernel: transformer_forward.37
$region0: #{transformer_forward.37}
  #allocation0 [shape = 'u32[]', space=smem, size = 0x4, offset = 0x4, fixed_abs, tag = 'smem constant byte address 0x4 - core index']
  #allocation1 [shape = 'u32[144,128]{1,0:T(1,128)}', space=vmem, size = 0x12000, scoped, tag = 'internal scratch']
  #allocation2 [shape = 'f32[16,256]{1,0:T(8,128)}', space=vmem, size = 0x4000, scoped, tag = 'scratch operand']
  %s0 = inlined_call_operand.vmem [shape: bf16[16,128], index: 0, kind: input, shape index: {}]
  %s1 = inlined_call_operand.vmem [shape: bf16[128,256], index: 1, kind: input, shape index: {}]
  %s2 = inlined_call_operand.vmem [shape: f32[1,256], index: 2, kind: input, shape index: {}]
  %s3 = inlined_call_operand.vmem [shape: bf16[16,256], index: 3, kind: output, shape index: {}]
  %s4 = sld [smem:[#allocation0]]
  $region30: #{transformer_forward.37} parent=0
    _
  %s6 = ssub.s32 1, %s4
  %s7 = scalar_select 0, %s6, %s4
  // Predicated region
  $region2: #{transformer_forward.37} parent=0 // pred_check
    _
  $region3: #{transformer_forward.37} parent=0 // pred_check_branch
    %9 = sbr.rel (0) target = $region5
  $region4: #{transformer_forward.37} parent=0 // pred_region
    _
  $region5: #{transformer_forward.37} parent=0 // pred_fallthru
    _
  // Predicated region
  $region6: #{transformer_forward.37} parent=0 // pred_check
    _
  $region7: #{transformer_forward.37} parent=0 // pred_check_branch
    %11 = sbr.rel (0) target = $region9
  $region8: #{transformer_forward.37} parent=0 // pred_region
    _
  $region9: #{transformer_forward.37} parent=0 // pred_fallthru
    _
  // Predicated region
  $region10: #{transformer_forward.37} parent=0 // pred_check
    _
  $region11: #{transformer_forward.37} parent=0 // pred_check_branch
    %13 = sbr.rel (0) target = $region13
  $region12: #{transformer_forward.37} parent=0 // pred_region
    _
  $region13: #{transformer_forward.37} parent=0 // pred_fallthru
    _
  %p15 = scmp.eq.s32.totalorder 0, 0
  // Predicated region
  $region14: #{transformer_forward.37} parent=0 // pred_check
    %p16 = pneg %p15
  $region15: #{transformer_forward.37} parent=0 // pred_check_branch
    %18 = sbr.rel (%p16) target = $region17
  $region16: #{transformer_forward.37} parent=0 // pred_region
    %19 = vst [vmem:[#allocation2] sm:$0xff] 0.0
    %20 = vst [vmem:[#allocation2 + $0x8] sm:$0xff] 0.0
    %21 = vst [vmem:[#allocation2 + $0x10] sm:$0xff] 0.0
    %22 = vst [vmem:[#allocation2 + $0x18] sm:$0xff] 0.0
  $region17: #{transformer_forward.37} parent=0 // pred_fallthru
    _
  %v23 = vld [vmem:[#allocation2] sm:$0xff]
  %v24 = vld [vmem:[#allocation2 + $0x8] sm:$0xff]
  %v25 = vld [vmem:[#allocation2 + $0x10] sm:$0xff]
  %v26 = vld [vmem:[#allocation2 + $0x18] sm:$0xff]
  %v27 = vld [vmem:[%s0] sm:$0xf]
  %v28 = vld [vmem:[%s0 + $0x4] sm:$0xf]
  %v29 = vld [vmem:[%s1] sm:$0xff]
  %v30 = vld [vmem:[%s1 + $0x8] sm:$0xff]
  %v31 = vld [vmem:[%s1 + $0x10] sm:$0xff]
  %v32 = vld [vmem:[%s1 + $0x18] sm:$0xff]
  %v33 = vld [vmem:[%s1 + $0x20] sm:$0xff]
  %v34 = vld [vmem:[%s1 + $0x28] sm:$0xff]
  %v35 = vld [vmem:[%s1 + $0x30] sm:$0xff]
  %v36 = vld [vmem:[%s1 + $0x38] sm:$0xff]
  %v37 = vld [vmem:[%s1 + $0x40] sm:$0xff]
  %v38 = vld [vmem:[%s1 + $0x48] sm:$0xff]
  %v39 = vld [vmem:[%s1 + $0x50] sm:$0xff]
  %v40 = vld [vmem:[%s1 + $0x58] sm:$0xff]
  %v41 = vld [vmem:[%s1 + $0x60] sm:$0xff]
  %v42 = vld [vmem:[%s1 + $0x68] sm:$0xff]
  %v43 = vld [vmem:[%s1 + $0x70] sm:$0xff]
  %v44 = vld [vmem:[%s1 + $0x78] sm:$0xff]
  %v47 = vunpack.c.l.b16 %v27
  %v48 = vunpack.c.l.b16 %v28
  %v49 = vpack.c.b16 %v48, %v47
  %v67 = vunpack.c.l.b16 %v29
  %v68 = vunpack.c.h.b16 %v29
  %v69 = vunpack.c.l.b16 %v30
  %v70 = vunpack.c.h.b16 %v30
  %v71 = vunpack.c.l.b16 %v31
  %v72 = vunpack.c.h.b16 %v31
  %v73 = vunpack.c.l.b16 %v32
  %v74 = vunpack.c.h.b16 %v32
  %v75 = vunpack.c.l.b16 %v33
  %v76 = vunpack.c.h.b16 %v33
  %v77 = vunpack.c.l.b16 %v34
  %v78 = vunpack.c.h.b16 %v34
  %v79 = vunpack.c.l.b16 %v35
  %v80 = vunpack.c.h.b16 %v35
  %v81 = vunpack.c.l.b16 %v36
  %v82 = vunpack.c.h.b16 %v36
  %v83 = vunpack.c.l.b16 %v37
  %v84 = vunpack.c.h.b16 %v37
  %v85 = vunpack.c.l.b16 %v38
  %v86 = vunpack.c.h.b16 %v38
  %v87 = vunpack.c.l.b16 %v39
  %v88 = vunpack.c.h.b16 %v39
  %v89 = vunpack.c.l.b16 %v40
  %v90 = vunpack.c.h.b16 %v40
  %v91 = vunpack.c.l.b16 %v41
  %v92 = vunpack.c.h.b16 %v41
  %v93 = vunpack.c.l.b16 %v42
  %v94 = vunpack.c.h.b16 %v42
  %v95 = vunpack.c.l.b16 %v43
  %v96 = vunpack.c.h.b16 %v43
  %v97 = vunpack.c.l.b16 %v44
  %v98 = vunpack.c.h.b16 %v44
  %v99 = vpack.c.b16 %v69, %v67
  %v100 = vpack.c.b16 %v70, %v68
  %v101 = vpack.c.b16 %v73, %v71
  %v102 = vpack.c.b16 %v74, %v72
  %v103 = vpack.c.b16 %v77, %v75
  %v104 = vpack.c.b16 %v78, %v76
  %v105 = vpack.c.b16 %v81, %v79
  %v106 = vpack.c.b16 %v82, %v80
  %v107 = vpack.c.b16 %v85, %v83
  %v108 = vpack.c.b16 %v86, %v84
  %v109 = vpack.c.b16 %v89, %v87
  %v110 = vpack.c.b16 %v90, %v88
  %v111 = vpack.c.b16 %v93, %v91
  %v112 = vpack.c.b16 %v94, %v92
  %v113 = vpack.c.b16 %v97, %v95
  %v114 = vpack.c.b16 %v98, %v96
  %131 = vmatprep.subr.bf16.mxu0 %v100
  %132 = vmatpush1.bf16.msra.mxu0 %v99
  %133 = vmatprep.subr.bf16.mxu0 %v102
  %134 = vmatpush1.bf16.msra.mxu0 %v101
  %135 = vmatprep.subr.bf16.mxu0 %v104
  %136 = vmatpush1.bf16.msra.mxu0 %v103
  %137 = vmatprep.subr.bf16.mxu0 %v106
  %138 = vmatpush1.bf16.msra.mxu0 %v105
  %139 = vmatprep.subr.bf16.mxu0 %v108
  %140 = vmatpush1.bf16.msra.mxu0 %v107
  %141 = vmatprep.subr.bf16.mxu0 %v110
  %142 = vmatpush1.bf16.msra.mxu0 %v109
  %143 = vmatprep.subr.bf16.mxu0 %v112
  %144 = vmatpush1.bf16.msra.mxu0 %v111
  %145 = vmatprep.subr.bf16.mxu0 %v114
  %146 = vmatpush1.bf16.msra.mxu0 %v113
  %147 = vmatprep.subr.bf16.mxu0 0
  %148 = vmatpush1.bf16.msra.mxu0 0
  %149 = vmatprep.subr.bf16.mxu0 0
  %150 = vmatpush1.bf16.msra.mxu0 0
  %151 = vmatprep.subr.bf16.mxu0 0
  %152 = vmatpush1.bf16.msra.mxu0 0
  %153 = vmatprep.subr.bf16.mxu0 0
  %154 = vmatpush1.bf16.msra.mxu0 0
  %155 = vmatprep.subr.bf16.mxu0 0
  %156 = vmatpush1.bf16.msra.mxu0 0
  %157 = vmatprep.subr.bf16.mxu0 0
  %158 = vmatpush1.bf16.msra.mxu0 0
  %159 = vmatprep.subr.bf16.mxu0 0
  %160 = vmatpush1.bf16.msra.mxu0 0
  %161 = vmatprep.subr.bf16.mxu0 0
  %162 = vmatpush1.bf16.msra.mxu0 0
  %163 = vmatprep.mubr.bf16.mxu0 0
  %164 = vmatmul.mubr.bf16.gmra.mrb[0].mxu0 %v49
  %v165 = vpop.f32.mrb[0].mxu0
  %v166 = vadd.f32 0.0, %v165
  %v167 = vpop.f32.mrb[0].mxu0
  %v168 = vadd.f32 0.0, %v167
  %v169 = vpop.f32.mrb[0].mxu0
  %v170 = vadd.f32 0.0, %v169
  %v171 = vpop.f32.mrb[0].mxu0
  %v172 = vadd.f32 0.0, %v171
  %173 = vdwg.mxu0
  %v174 = vadd.f32 %v23, %v166
  %v175 = vadd.f32 %v24, %v168
  %v176 = vadd.f32 %v25, %v170
  %v177 = vadd.f32 %v26, %v172
  %178 = vst [vmem:[#allocation2] sm:$0xff] %v174
  %179 = vst [vmem:[#allocation2 + $0x8] sm:$0xff] %v175
  %180 = vst [vmem:[#allocation2 + $0x10] sm:$0xff] %v176
  %181 = vst [vmem:[#allocation2 + $0x18] sm:$0xff] %v177
  // Predicated region
  $region18: #{transformer_forward.37} parent=0 // pred_check
    %p182 = pneg %p15
  $region19: #{transformer_forward.37} parent=0 // pred_check_branch
    %184 = sbr.rel (%p182) target = $region21
  $region20: #{transformer_forward.37} parent=0 // pred_region
    %v185 = vld [vmem:[#allocation2] sm:$0xff]
    %v186 = vld [vmem:[#allocation2 + $0x8] sm:$0xff]
    %v187 = vld [vmem:[#allocation2 + $0x10] sm:$0xff]
    %v188 = vld [vmem:[#allocation2 + $0x18] sm:$0xff]
    %v189 = vld [vmem:[%s2] sm:$0x3]
    %v191 = vlaneseq
    %v192 = vshrl.u32 %v191, 7
    %v193 = vsub.s32 0, %v192
    %v194 = vrot.slane %v189, %v193
    %v195 = vlaneseq
    %v196 = vshrl.u32 %v195, 7
    %v197 = vsub.s32 1, %v196
    %v198 = vrot.slane %v189, %v197
    %v201 = vadd.f32 %v185, %v194
    %v202 = vadd.f32 %v186, %v198
    %v203 = vadd.f32 %v187, %v194
    %v204 = vadd.f32 %v188, %v198
    %v205 = vpack.c.bf16 %v203, %v201
    %v206 = vpack.c.bf16 %v204, %v202
    %v209 = vunpack.c.l.b16 %v205
    %v210 = vunpack.c.l.b16 %v206
    %v211 = vunpack.c.h.b16 %v205
    %v212 = vunpack.c.h.b16 %v206
    %v213 = vpack.c.b16 %v210, %v209
    %v214 = vpack.c.b16 %v212, %v211
    %217 = vst [vmem:[%s3] sm:$0xff] %v213
    %218 = vst [vmem:[%s3 + $0x8] sm:$0xff] %v214
  $region21: #{transformer_forward.37} parent=0 // pred_fallthru
    _
  // Predicated region
  $region22: #{transformer_forward.37} parent=0 // pred_check
    _
  $region23: #{transformer_forward.37} parent=0 // pred_check_branch
    %220 = sbr.rel (0) target = $region25
  $region24: #{transformer_forward.37} parent=0 // pred_region
    _
  $region25: #{transformer_forward.37} parent=0 // pred_fallthru
    _
  // Predicated region
  $region26: #{transformer_forward.37} parent=0 // pred_check
    _
  $region27: #{transformer_forward.37} parent=0 // pred_check_branch
    %222 = sbr.rel (0) target = $region29
  $region28: #{transformer_forward.37} parent=0 // pred_region
    _
  $region29: #{transformer_forward.37} parent=0 // pred_fallthru
    _

// kernel: transformer_forward.28
$region0: #{transformer_forward.28}
  #allocation0 [shape = 'u32[]', space=smem, size = 0x4, offset = 0x4, fixed_abs, tag = 'smem constant byte address 0x4 - core index']
  #allocation1 [shape = 'u32[144,128]{1,0:T(1,128)}', space=vmem, size = 0x12000, scoped, tag = 'internal scratch']
  #allocation2 [shape = 'f32[16,128]{1,0:T(8,128)}', space=vmem, size = 0x2000, scoped, tag = 'scratch operand']
  %s0 = inlined_call_operand.vmem [shape: bf16[16,128], index: 0, kind: input, shape index: {}, may-alias: {0,5}]
  %s1 = inlined_call_operand.vmem [shape: bf16[128,256], index: 1, kind: input, shape index: {}]
  %s2 = inlined_call_operand.vmem [shape: f32[1,256], index: 2, kind: input, shape index: {}]
  %s3 = inlined_call_operand.vmem [shape: bf16[256,128], index: 3, kind: input, shape index: {}]
  %s4 = inlined_call_operand.vmem [shape: f32[1,128], index: 4, kind: input, shape index: {}]
  %s5 = inlined_call_operand.vmem [shape: bf16[16,128], index: 5, kind: input, shape index: {}, may-alias: {0,5}]
  %s6 = inlined_call_operand.vmem [shape: f32[1,128], index: 6, kind: input, shape index: {}]
  %s7 = inlined_call_operand.vmem [shape: f32[1,128], index: 7, kind: input, shape index: {}]
  %s8 = inlined_call_operand.vmem [shape: bf16[16,128], index: 8, kind: output, shape index: {}]
  %s9 = sld [smem:[#allocation0]]
  $region50: #{transformer_forward.28} parent=0
    _
  %s11 = ssub.s32 1, %s9
  %s12 = scalar_select 0, %s11, %s9
  // Predicated region
  $region2: #{transformer_forward.28} parent=0 // pred_check
    _
  $region3: #{transformer_forward.28} parent=0 // pred_check_branch
    %14 = sbr.rel (0) target = $region5
  $region4: #{transformer_forward.28} parent=0 // pred_region
    _
  $region5: #{transformer_forward.28} parent=0 // pred_fallthru
    _
  // Predicated region
  $region6: #{transformer_forward.28} parent=0 // pred_check
    _
  $region7: #{transformer_forward.28} parent=0 // pred_check_branch
    %16 = sbr.rel (0) target = $region9
  $region8: #{transformer_forward.28} parent=0 // pred_region
    _
  $region9: #{transformer_forward.28} parent=0 // pred_fallthru
    _
  // Predicated region
  $region10: #{transformer_forward.28} parent=0 // pred_check
    _
  $region11: #{transformer_forward.28} parent=0 // pred_check_branch
    %18 = sbr.rel (0) target = $region13
  $region12: #{transformer_forward.28} parent=0 // pred_region
    _
  $region13: #{transformer_forward.28} parent=0 // pred_fallthru
    _
  // Predicated region
  $region14: #{transformer_forward.28} parent=0 // pred_check
    _
  $region15: #{transformer_forward.28} parent=0 // pred_check_branch
    %20 = sbr.rel (0) target = $region17
  $region16: #{transformer_forward.28} parent=0 // pred_region
    _
  $region17: #{transformer_forward.28} parent=0 // pred_fallthru
    _
  // Predicated region
  $region18: #{transformer_forward.28} parent=0 // pred_check
    _
  $region19: #{transformer_forward.28} parent=0 // pred_check_branch
    %22 = sbr.rel (0) target = $region21
  $region20: #{transformer_forward.28} parent=0 // pred_region
    _
  $region21: #{transformer_forward.28} parent=0 // pred_fallthru
    _
  // Predicated region
  $region22: #{transformer_forward.28} parent=0 // pred_check
    _
  $region23: #{transformer_forward.28} parent=0 // pred_check_branch
    %24 = sbr.rel (0) target = $region25
  $region24: #{transformer_forward.28} parent=0 // pred_region
    _
  $region25: #{transformer_forward.28} parent=0 // pred_fallthru
    _
  // Predicated region
  $region26: #{transformer_forward.28} parent=0 // pred_check
    _
  $region27: #{transformer_forward.28} parent=0 // pred_check_branch
    %26 = sbr.rel (0) target = $region29
  $region28: #{transformer_forward.28} parent=0 // pred_region
    _
  $region29: #{transformer_forward.28} parent=0 // pred_fallthru
    _
  // Predicated region
  $region30: #{transformer_forward.28} parent=0 // pred_check
    _
  $region31: #{transformer_forward.28} parent=0 // pred_check_branch
    %28 = sbr.rel (0) target = $region33
  $region32: #{transformer_forward.28} parent=0 // pred_region
    _
  $region33: #{transformer_forward.28} parent=0 // pred_fallthru
    _
  %p30 = scmp.eq.s32.totalorder 0, 0
  // Predicated region
  $region34: #{transformer_forward.28} parent=0 // pred_check
    %p31 = pneg %p30
  $region35: #{transformer_forward.28} parent=0 // pred_check_branch
    %33 = sbr.rel (%p31) target = $region37
  $region36: #{transformer_forward.28} parent=0 // pred_region
    %34 = vst [vmem:[#allocation2] sm:$0xff] 0.0
    %35 = vst [vmem:[#allocation2 + $0x8] sm:$0xff] 0.0
  $region37: #{transformer_forward.28} parent=0 // pred_fallthru
    _
  %v36 = vld [vmem:[%s0] sm:$0xf]
  %v37 = vld [vmem:[%s0 + $0x4] sm:$0xf]
  %v38 = vld [vmem:[%s1] sm:$0xff]
  %v39 = vld [vmem:[%s1 + $0x8] sm:$0xff]
  %v40 = vld [vmem:[%s1 + $0x10] sm:$0xff]
  %v41 = vld [vmem:[%s1 + $0x18] sm:$0xff]
  %v42 = vld [vmem:[%s1 + $0x20] sm:$0xff]
  %v43 = vld [vmem:[%s1 + $0x28] sm:$0xff]
  %v44 = vld [vmem:[%s1 + $0x30] sm:$0xff]
  %v45 = vld [vmem:[%s1 + $0x38] sm:$0xff]
  %v46 = vld [vmem:[%s1 + $0x40] sm:$0xff]
  %v47 = vld [vmem:[%s1 + $0x48] sm:$0xff]
  %v48 = vld [vmem:[%s1 + $0x50] sm:$0xff]
  %v49 = vld [vmem:[%s1 + $0x58] sm:$0xff]
  %v50 = vld [vmem:[%s1 + $0x60] sm:$0xff]
  %v51 = vld [vmem:[%s1 + $0x68] sm:$0xff]
  %v52 = vld [vmem:[%s1 + $0x70] sm:$0xff]
  %v53 = vld [vmem:[%s1 + $0x78] sm:$0xff]
  %v54 = vld [vmem:[%s2] sm:$0x3]
  %v56 = vlaneseq
  %v57 = vshrl.u32 %v56, 7
  %v58 = vsub.s32 0, %v57
  %v59 = vrot.slane %v54, %v58
  %v60 = vlaneseq
  %v61 = vshrl.u32 %v60, 7
  %v62 = vsub.s32 1, %v61
  %v63 = vrot.slane %v54, %v62
  %v68 = vunpack.c.l.b16 %v36
  %v69 = vunpack.c.l.b16 %v37
  %v70 = vpack.c.b16 %v69, %v68
  %v88 = vunpack.c.l.b16 %v38
  %v89 = vunpack.c.h.b16 %v38
  %v90 = vunpack.c.l.b16 %v39
  %v91 = vunpack.c.h.b16 %v39
  %v92 = vunpack.c.l.b16 %v40
  %v93 = vunpack.c.h.b16 %v40
  %v94 = vunpack.c.l.b16 %v41
  %v95 = vunpack.c.h.b16 %v41
  %v96 = vunpack.c.l.b16 %v42
  %v97 = vunpack.c.h.b16 %v42
  %v98 = vunpack.c.l.b16 %v43
  %v99 = vunpack.c.h.b16 %v43
  %v100 = vunpack.c.l.b16 %v44
  %v101 = vunpack.c.h.b16 %v44
  %v102 = vunpack.c.l.b16 %v45
  %v103 = vunpack.c.h.b16 %v45
  %v104 = vunpack.c.l.b16 %v46
  %v105 = vunpack.c.h.b16 %v46
  %v106 = vunpack.c.l.b16 %v47
  %v107 = vunpack.c.h.b16 %v47
  %v108 = vunpack.c.l.b16 %v48
  %v109 = vunpack.c.h.b16 %v48
  %v110 = vunpack.c.l.b16 %v49
  %v111 = vunpack.c.h.b16 %v49
  %v112 = vunpack.c.l.b16 %v50
  %v113 = vunpack.c.h.b16 %v50
  %v114 = vunpack.c.l.b16 %v51
  %v115 = vunpack.c.h.b16 %v51
  %v116 = vunpack.c.l.b16 %v52
  %v117 = vunpack.c.h.b16 %v52
  %v118 = vunpack.c.l.b16 %v53
  %v119 = vunpack.c.h.b16 %v53
  %v120 = vpack.c.b16 %v90, %v88
  %v121 = vpack.c.b16 %v91, %v89
  %v122 = vpack.c.b16 %v94, %v92
  %v123 = vpack.c.b16 %v95, %v93
  %v124 = vpack.c.b16 %v98, %v96
  %v125 = vpack.c.b16 %v99, %v97
  %v126 = vpack.c.b16 %v102, %v100
  %v127 = vpack.c.b16 %v103, %v101
  %v128 = vpack.c.b16 %v106, %v104
  %v129 = vpack.c.b16 %v107, %v105
  %v130 = vpack.c.b16 %v110, %v108
  %v131 = vpack.c.b16 %v111, %v109
  %v132 = vpack.c.b16 %v114, %v112
  %v133 = vpack.c.b16 %v115, %v113
  %v134 = vpack.c.b16 %v118, %v116
  %v135 = vpack.c.b16 %v119, %v117
  %152 = vmatprep.subr.bf16.mxu0 %v121
  %153 = vmatpush1.bf16.msra.mxu0 %v120
  %154 = vmatprep.subr.bf16.mxu0 %v123
  %155 = vmatpush1.bf16.msra.mxu0 %v122
  %156 = vmatprep.subr.bf16.mxu0 %v125
  %157 = vmatpush1.bf16.msra.mxu0 %v124
  %158 = vmatprep.subr.bf16.mxu0 %v127
  %159 = vmatpush1.bf16.msra.mxu0 %v126
  %160 = vmatprep.subr.bf16.mxu0 %v129
  %161 = vmatpush1.bf16.msra.mxu0 %v128
  %162 = vmatprep.subr.bf16.mxu0 %v131
  %163 = vmatpush1.bf16.msra.mxu0 %v130
  %164 = vmatprep.subr.bf16.mxu0 %v133
  %165 = vmatpush1.bf16.msra.mxu0 %v132
  %166 = vmatprep.subr.bf16.mxu0 %v135
  %167 = vmatpush1.bf16.msra.mxu0 %v134
  %168 = vmatprep.subr.bf16.mxu0 0
  %169 = vmatpush1.bf16.msra.mxu0 0
  %170 = vmatprep.subr.bf16.mxu0 0
  %171 = vmatpush1.bf16.msra.mxu0 0
  %172 = vmatprep.subr.bf16.mxu0 0
  %173 = vmatpush1.bf16.msra.mxu0 0
  %174 = vmatprep.subr.bf16.mxu0 0
  %175 = vmatpush1.bf16.msra.mxu0 0
  %176 = vmatprep.subr.bf16.mxu0 0
  %177 = vmatpush1.bf16.msra.mxu0 0
  %178 = vmatprep.subr.bf16.mxu0 0
  %179 = vmatpush1.bf16.msra.mxu0 0
  %180 = vmatprep.subr.bf16.mxu0 0
  %181 = vmatpush1.bf16.msra.mxu0 0
  %182 = vmatprep.subr.bf16.mxu0 0
  %183 = vmatpush1.bf16.msra.mxu0 0
  %184 = vmatprep.mubr.bf16.mxu0 0
  %185 = vmatmul.mubr.bf16.gmra.mrb[0].mxu0 %v70
  %v186 = vpop.f32.mrb[0].mxu0
  %v187 = vadd.f32 %v59, %v186
  %v188 = vpop.f32.mrb[0].mxu0
  %v189 = vadd.f32 %v63, %v188
  %v190 = vpop.f32.mrb[0].mxu0
  %v191 = vadd.f32 %v59, %v190
  %v192 = vpop.f32.mrb[0].mxu0
  %v193 = vadd.f32 %v63, %v192
  %194 = vdwg.mxu0
  %v195 = vmax.f32 %v187, 0.0
  %v196 = vmax.f32 %v189, 0.0
  %v197 = vmax.f32 %v191, 0.0
  %v198 = vmax.f32 %v193, 0.0
  %v199 = vpack.c.bf16 %v197, %v195
  %v200 = vpack.c.bf16 %v198, %v196
  %v201 = vld [vmem:[#allocation2] sm:$0xff]
  %v202 = vld [vmem:[#allocation2 + $0x8] sm:$0xff]
  %v203 = vld [vmem:[%s3] sm:$0xf]
  %v204 = vld [vmem:[%s3 + $0x4] sm:$0xf]
  %v205 = vld [vmem:[%s3 + $0x8] sm:$0xf]
  %v206 = vld [vmem:[%s3 + $0xc] sm:$0xf]
  %v207 = vld [vmem:[%s3 + $0x10] sm:$0xf]
  %v208 = vld [vmem:[%s3 + $0x14] sm:$0xf]
  %v209 = vld [vmem:[%s3 + $0x18] sm:$0xf]
  %v210 = vld [vmem:[%s3 + $0x1c] sm:$0xf]
  %v211 = vld [vmem:[%s3 + $0x20] sm:$0xf]
  %v212 = vld [vmem:[%s3 + $0x24] sm:$0xf]
  %v213 = vld [vmem:[%s3 + $0x28] sm:$0xf]
  %v214 = vld [vmem:[%s3 + $0x2c] sm:$0xf]
  %v215 = vld [vmem:[%s3 + $0x30] sm:$0xf]
  %v216 = vld [vmem:[%s3 + $0x34] sm:$0xf]
  %v217 = vld [vmem:[%s3 + $0x38] sm:$0xf]
  %v218 = vld [vmem:[%s3 + $0x3c] sm:$0xf]
  %v219 = vld [vmem:[%s3 + $0x40] sm:$0xf]
  %v220 = vld [vmem:[%s3 + $0x44] sm:$0xf]
  %v221 = vld [vmem:[%s3 + $0x48] sm:$0xf]
  %v222 = vld [vmem:[%s3 + $0x4c] sm:$0xf]
  %v223 = vld [vmem:[%s3 + $0x50] sm:$0xf]
  %v224 = vld [vmem:[%s3 + $0x54] sm:$0xf]
  %v225 = vld [vmem:[%s3 + $0x58] sm:$0xf]
  %v226 = vld [vmem:[%s3 + $0x5c] sm:$0xf]
  %v227 = vld [vmem:[%s3 + $0x60] sm:$0xf]
  %v228 = vld [vmem:[%s3 + $0x64] sm:$0xf]
  %v229 = vld [vmem:[%s3 + $0x68] sm:$0xf]
  %v230 = vld [vmem:[%s3 + $0x6c] sm:$0xf]
  %v231 = vld [vmem:[%s3 + $0x70] sm:$0xf]
  %v232 = vld [vmem:[%s3 + $0x74] sm:$0xf]
  %v233 = vld [vmem:[%s3 + $0x78] sm:$0xf]
  %v234 = vld [vmem:[%s3 + $0x7c] sm:$0xf]
  %v267 = vunpack.c.l.b16 %v203
  %v268 = vunpack.c.l.b16 %v204
  %v269 = vunpack.c.l.b16 %v205
  %v270 = vunpack.c.l.b16 %v206
  %v271 = vunpack.c.l.b16 %v207
  %v272 = vunpack.c.l.b16 %v208
  %v273 = vunpack.c.l.b16 %v209
  %v274 = vunpack.c.l.b16 %v210
  %v275 = vunpack.c.l.b16 %v211
  %v276 = vunpack.c.l.b16 %v212
  %v277 = vunpack.c.l.b16 %v213
  %v278 = vunpack.c.l.b16 %v214
  %v279 = vunpack.c.l.b16 %v215
  %v280 = vunpack.c.l.b16 %v216
  %v281 = vunpack.c.l.b16 %v217
  %v282 = vunpack.c.l.b16 %v218
  %v283 = vunpack.c.l.b16 %v219
  %v284 = vunpack.c.l.b16 %v220
  %v285 = vunpack.c.l.b16 %v221
  %v286 = vunpack.c.l.b16 %v222
  %v287 = vunpack.c.l.b16 %v223
  %v288 = vunpack.c.l.b16 %v224
  %v289 = vunpack.c.l.b16 %v225
  %v290 = vunpack.c.l.b16 %v226
  %v291 = vunpack.c.l.b16 %v227
  %v292 = vunpack.c.l.b16 %v228
  %v293 = vunpack.c.l.b16 %v229
  %v294 = vunpack.c.l.b16 %v230
  %v295 = vunpack.c.l.b16 %v231
  %v296 = vunpack.c.l.b16 %v232
  %v297 = vunpack.c.l.b16 %v233
  %v298 = vunpack.c.l.b16 %v234
  %v299 = vpack.c.b16 %v268, %v267
  %v300 = vpack.c.b16 %v270, %v269
  %v301 = vpack.c.b16 %v272, %v271
  %v302 = vpack.c.b16 %v274, %v273
  %v303 = vpack.c.b16 %v276, %v275
  %v304 = vpack.c.b16 %v278, %v277
  %v305 = vpack.c.b16 %v280, %v279
  %v306 = vpack.c.b16 %v282, %v281
  %v307 = vpack.c.b16 %v284, %v283
  %v308 = vpack.c.b16 %v286, %v285
  %v309 = vpack.c.b16 %v288, %v287
  %v310 = vpack.c.b16 %v290, %v289
  %v311 = vpack.c.b16 %v292, %v291
  %v312 = vpack.c.b16 %v294, %v293
  %v313 = vpack.c.b16 %v296, %v295
  %v314 = vpack.c.b16 %v298, %v297
  %331 = vmatprep.subr.bf16.mxu0 0
  %332 = vmatpush1.bf16.msra.mxu0 %v299
  %333 = vmatprep.subr.bf16.mxu0 0
  %334 = vmatpush1.bf16.msra.mxu0 %v300
  %335 = vmatprep.subr.bf16.mxu0 0
  %336 = vmatpush1.bf16.msra.mxu0 %v301
  %337 = vmatprep.subr.bf16.mxu0 0
  %338 = vmatpush1.bf16.msra.mxu0 %v302
  %339 = vmatprep.subr.bf16.mxu0 0
  %340 = vmatpush1.bf16.msra.mxu0 %v303
  %341 = vmatprep.subr.bf16.mxu0 0
  %342 = vmatpush1.bf16.msra.mxu0 %v304
  %343 = vmatprep.subr.bf16.mxu0 0
  %344 = vmatpush1.bf16.msra.mxu0 %v305
  %345 = vmatprep.subr.bf16.mxu0 0
  %346 = vmatpush1.bf16.msra.mxu0 %v306
  %347 = vmatprep.subr.bf16.mxu0 0
  %348 = vmatpush1.bf16.msra.mxu0 %v307
  %349 = vmatprep.subr.bf16.mxu0 0
  %350 = vmatpush1.bf16.msra.mxu0 %v308
  %351 = vmatprep.subr.bf16.mxu0 0
  %352 = vmatpush1.bf16.msra.mxu0 %v309
  %353 = vmatprep.subr.bf16.mxu0 0
  %354 = vmatpush1.bf16.msra.mxu0 %v310
  %355 = vmatprep.subr.bf16.mxu0 0
  %356 = vmatpush1.bf16.msra.mxu0 %v311
  %357 = vmatprep.subr.bf16.mxu0 0
  %358 = vmatpush1.bf16.msra.mxu0 %v312
  %359 = vmatprep.subr.bf16.mxu0 0
  %360 = vmatpush1.bf16.msra.mxu0 %v313
  %361 = vmatprep.subr.bf16.mxu0 0
  %362 = vmatpush1.bf16.msra.mxu0 %v314
  %363 = vmatprep.mubr.bf16.mxu0 %v200
  %364 = vmatmul.mubr.bf16.gmra.mrb[0].mxu0 %v199
  %v365 = vpop.f32.mrb[0].mxu0
  %v366 = vadd.f32 0.0, %v365
  %v367 = vpop.f32.mrb[0].mxu0
  %v368 = vpop.f32.mrb[0].mxu0
  %v369 = vadd.f32 0.0, %v368
  %v370 = vpop.f32.mrb[0].mxu0
  %371 = vdwg.mxu0
  %v372 = vadd.f32 %v201, %v366
  %v373 = vadd.f32 %v202, %v369
  %374 = vst [vmem:[#allocation2] sm:$0xff] %v372
  %375 = vst [vmem:[#allocation2 + $0x8] sm:$0xff] %v373
  // Predicated region
  $region38: #{transformer_forward.28} parent=0 // pred_check
    %p376 = pneg %p30
  $region39: #{transformer_forward.28} parent=0 // pred_check_branch
    %378 = sbr.rel (%p376) target = $region41
  $region40: #{transformer_forward.28} parent=0 // pred_region
    %v379 = vld [vmem:[#allocation2] sm:$0xff]
    %v380 = vld [vmem:[#allocation2 + $0x8] sm:$0xff]
    %v381 = vld [vmem:[%s4] sm:$0x1]
    %v383 = vlaneseq
    %v384 = vshrl.u32 %v383, 7
    %v385 = vsub.s32 0, %v384
    %v386 = vrot.slane %v381, %v385
    %v388 = vadd.f32 %v379, %v386
    %v389 = vadd.f32 %v380, %v386
    %v390 = vld [vmem:[%s5] sm:$0xf]
    %v391 = vld [vmem:[%s5 + $0x4] sm:$0xf]
    %v392 = vunpack.c.l.bf16 %v390
    %v393 = vunpack.c.l.bf16 %v391
    %v394 = vadd.f32 %v388, %v392
    %v395 = vadd.f32 %v389, %v393
    %396 = vadd.xlane.f32.xlu0 %v394
    %v397 = vpop.xlane.xlu0 %396
    %398 = vadd.xlane.f32.xlu0 %v395
    %v399 = vpop.xlane.xlu0 %398
    %v400 = vrcp.pop 128.0
    %v401 = vmul.f32 %v397, %v400
    %v402 = vmul.f32 %v399, %v400
    %v403 = vsub.f32 %v394, %v401
    %v404 = vsub.f32 %v395, %v402
    %v405 = vmul.f32 %v403, %v403
    %v406 = vmul.f32 %v404, %v404
    %407 = vadd.xlane.f32.xlu0 %v405
    %v408 = vpop.xlane.xlu0 %407
    %409 = vadd.xlane.f32.xlu0 %v406
    %v410 = vpop.xlane.xlu0 %409
    %v411 = vmul.f32 %v408, %v400
    %v412 = vmul.f32 %v410, %v400
    %v413 = vadd.f32 %v411, 1e-05
    %v414 = vadd.f32 %v412, 1e-05
    %v415 = vrsqrt.pop %v413
    %v416 = vrsqrt.pop %v414
    %v417 = vmul.f32 %v403, %v415
    %v418 = vmul.f32 %v404, %v416
    %v419 = vld [vmem:[%s6] sm:$0x1]
    %v421 = vlaneseq
    %v422 = vshrl.u32 %v421, 7
    %v423 = vsub.s32 0, %v422
    %v424 = vrot.slane %v419, %v423
    %v426 = vmul.f32 %v417, %v424
    %v427 = vmul.f32 %v418, %v424
    %v428 = vld [vmem:[%s7] sm:$0x1]
    %v430 = vlaneseq
    %v431 = vshrl.u32 %v430, 7
    %v432 = vsub.s32 0, %v431
    %v433 = vrot.slane %v428, %v432
    %v435 = vadd.f32 %v426, %v433
    %v436 = vadd.f32 %v427, %v433
    %v437 = vpack.c.bf16 %v436, %v435
    %v439 = vunpack.c.l.b16 %v437
    %v440 = vunpack.c.h.b16 %v437
    %v441 = vpack.c.b16 %v439, %v439
    %v442 = vpack.c.b16 %v440, %v440
    %445 = vst [vmem:[%s8] sm:$0xf] %v441
    %446 = vst [vmem:[%s8 + $0x4] sm:$0xf] %v442
  $region41: #{transformer_forward.28} parent=0 // pred_fallthru
    _
  // Predicated region
  $region42: #{transformer_forward.28} parent=0 // pred_check
    _
  $region43: #{transformer_forward.28} parent=0 // pred_check_branch
    %448 = sbr.rel (0) target = $region45
  $region44: #{transformer_forward.28} parent=0 // pred_region
    _
  $region45: #{transformer_forward.28} parent=0 // pred_fallthru
    _
  // Predicated region
  $region46: #{transformer_forward.28} parent=0 // pred_check
    _
  $region47: #{transformer_forward.28} parent=0 // pred_check_branch
    %450 = sbr.rel (0) target = $region49
  $region48: #{transformer_forward.28} parent=0 // pred_region
    _
  $region49: #{transformer_forward.28} parent=0 // pred_fallthru
    _

// kernel: transformer_forward.38
$region0: #{transformer_forward.38}
  #allocation0 [shape = 'u32[]', space=smem, size = 0x4, offset = 0x4, fixed_abs, tag = 'smem constant byte address 0x4 - core index']
  #allocation1 [shape = 'u32[144,128]{1,0:T(1,128)}', space=vmem, size = 0x12000, scoped, tag = 'internal scratch']
  #allocation2 [shape = 's32[1]{0}', space=sflag, size = 0x4, scoped, tag = 'scoped memory for transformer_forward.38']
  #allocation3 [shape = 'u8[512]{0}', space=smem, size = 0x200, scoped, tag = 'prefetched SMEM operand 0']
  %s0 = inlined_call_operand.vmem [shape: s32[2], index: 0, kind: input, shape index: {}]
  %s1 = inlined_call_operand.vmem [shape: bf16[2,8,128], index: 1, kind: input, shape index: {}]
  %s2 = inlined_call_operand.vmem [shape: bf16[2,8,256], index: 2, kind: input, shape index: {}, may-alias: {2,3}]
  %s3 = inlined_call_operand.vmem [shape: bf16[2,8,256], index: 3, kind: input, shape index: {}, may-alias: {2,3}]
  %s4 = inlined_call_operand.vmem [shape: bf16[2,8,128], index: 4, kind: output, shape index: {}]
  %s5 = sld [smem:[#allocation0]]
  $region45: #{transformer_forward.38} parent=0
    _
  %s7 = ssub.s32 1, %s5
  %s8 = scalar_select 0, %s7, %s5
  %s9 = sshll.u32 %s0, 4
  %s10 = int_to_ptr.vmem [resolvable:$true] %s9
  %12 = dma.vmem_to_smem %s10, 16, [#allocation3], [#allocation2]
  %13 = dma.done [#allocation2], 16
  %14 = sfence
  loop: start=0, step=1, limit=4
  $region2: #{transformer_forward.38} parent=0 // loop_pre_header
    _
  $region3: #{transformer_forward.38} parent=0 // loop_header
    %s16 = sphi 0, %s20
    %p17 = scmp.ge.s32.totalorder %s16, 4
    %s26 = sphi 0, %s28
    %s29 = sphi 0, %s26
    %s30 = sphi 0, %s29
    %s46 = sphi 0, %s30
    %s52 = sphi 0, %s54
    %s55 = sphi 0, %s52
    %s56 = sphi 0, %s55
    %s72 = sphi 0, %s56
    %s78 = sphi 0, %s80
    %s81 = sphi 0, %s78
    %s82 = sphi 0, %s81
    %s98 = sphi 0, %s82
    %s104 = sphi 0, %s106
    %s107 = sphi 0, %s104
    %s108 = sphi 0, %s107
    %s124 = sphi 0, %s108
  $region4: #{transformer_forward.38} parent=0 // loop_header_branch
    %19 = sbr.rel (%p17) target = $region8
  $region5: #{transformer_forward.38} parent=0 // loop_body
    %s21 = ssub.s32 %s16, 1
    %s22 = ssub.s32 %s16, 2
    %s23 = sadd.s32 %s16, 1
    %s24 = ssub.s32 %s16, %s23
    %p25 = scmp.eq.s32.totalorder %s24, 0
    %s27 = sadd.s32 %s26, 1
    %s28 = scalar_select %p25, %s26, %s27
    %p31 = pneg %p25
    %p32 = scmp.eq.s32.totalorder %s16, 1
    %p33 = por %p31, %p32
    %p34 = scmp.ne.s32.totalorder %s26, %s29
    %p35 = scmp.eq.s32.totalorder %s16, 0
    %p36 = por %p34, %p35
    %p37 = scmp.ne.s32.totalorder %s26, %s29
    %p38 = scmp.eq.s32.totalorder %s21, 1
    %p39 = por %p37, %p38
    %p40 = scmp.ne.s32.totalorder %s29, %s30
    %p41 = scmp.eq.s32.totalorder %s21, 0
    %p42 = por %p40, %p41
    %p43 = scmp.ne.s32.totalorder %s29, %s30
    %p44 = scmp.eq.s32.totalorder %s22, 1
    %p45 = por %p43, %p44
    %p47 = scmp.ne.s32.totalorder %s30, %s46
    %p48 = scmp.eq.s32.totalorder %s22, 0
    %p49 = por %p47, %p48
    %s50 = ssub.s32 %s16, %s23
    %p51 = scmp.eq.s32.totalorder %s50, 0
    %s53 = sadd.s32 %s52, 1
    %s54 = scalar_select %p51, %s52, %s53
    %p57 = pneg %p51
    %p58 = scmp.eq.s32.totalorder %s16, 1
    %p59 = por %p57, %p58
    %p60 = scmp.ne.s32.totalorder %s52, %s55
    %p61 = scmp.eq.s32.totalorder %s16, 0
    %p62 = por %p60, %p61
    %p63 = scmp.ne.s32.totalorder %s52, %s55
    %p64 = scmp.eq.s32.totalorder %s21, 1
    %p65 = por %p63, %p64
    %p66 = scmp.ne.s32.totalorder %s55, %s56
    %p67 = scmp.eq.s32.totalorder %s21, 0
    %p68 = por %p66, %p67
    %p69 = scmp.ne.s32.totalorder %s55, %s56
    %p70 = scmp.eq.s32.totalorder %s22, 1
    %p71 = por %p69, %p70
    %p73 = scmp.ne.s32.totalorder %s56, %s72
    %p74 = scmp.eq.s32.totalorder %s22, 0
    %p75 = por %p73, %p74
    %s76 = ssub.s32 %s16, %s23
    %p77 = scmp.eq.s32.totalorder %s76, 0
    %s79 = sadd.s32 %s78, 1
    %s80 = scalar_select %p77, %s78, %s79
    %p83 = pneg %p77
    %p84 = scmp.eq.s32.totalorder %s16, 1
    %p85 = por %p83, %p84
    %p86 = scmp.ne.s32.totalorder %s78, %s81
    %p87 = scmp.eq.s32.totalorder %s16, 0
    %p88 = por %p86, %p87
    %p89 = scmp.ne.s32.totalorder %s78, %s81
    %p90 = scmp.eq.s32.totalorder %s21, 1
    %p91 = por %p89, %p90
    %p92 = scmp.ne.s32.totalorder %s81, %s82
    %p93 = scmp.eq.s32.totalorder %s21, 0
    %p94 = por %p92, %p93
    %p95 = scmp.ne.s32.totalorder %s81, %s82
    %p96 = scmp.eq.s32.totalorder %s22, 1
    %p97 = por %p95, %p96
    %p99 = scmp.ne.s32.totalorder %s82, %s98
    %p100 = scmp.eq.s32.totalorder %s22, 0
    %p101 = por %p99, %p100
    %s102 = ssub.s32 %s16, %s23
    %p103 = scmp.eq.s32.totalorder %s102, 0
    %s105 = sadd.s32 %s104, 1
    %s106 = scalar_select %p103, %s104, %s105
    %p109 = pneg %p103
    %p110 = scmp.eq.s32.totalorder %s16, 1
    %p111 = por %p109, %p110
    %p112 = scmp.ne.s32.totalorder %s104, %s107
    %p113 = scmp.eq.s32.totalorder %s16, 0
    %p114 = por %p112, %p113
    %p115 = scmp.ne.s32.totalorder %s104, %s107
    %p116 = scmp.eq.s32.totalorder %s21, 1
    %p117 = por %p115, %p116
    %p118 = scmp.ne.s32.totalorder %s107, %s108
    %p119 = scmp.eq.s32.totalorder %s21, 0
    %p120 = por %p118, %p119
    %p121 = scmp.ne.s32.totalorder %s107, %s108
    %p122 = scmp.eq.s32.totalorder %s22, 1
    %p123 = por %p121, %p122
    %p125 = scmp.ne.s32.totalorder %s108, %s124
    %p126 = scmp.eq.s32.totalorder %s22, 0
    %p127 = por %p125, %p126
    %p128 = scmp.le.s32.totalorder 1, %s16
    %p129 = scmp.lt.s32.totalorder %s16, 3
    %p130 = pnand %p128, %p129
    %p131 = pneg %p130
    // Predicated region
    $region9: #{transformer_forward.38} parent=5 // pred_check
      _
    $region10: #{transformer_forward.38} parent=5 // pred_check_branch
      %133 = sbr.rel (%p130) target = $region12
    $region11: #{transformer_forward.38} parent=5 // pred_region
      %s134 = ssub.s32 %s16, 1
    $region12: #{transformer_forward.38} parent=5 // pred_fallthru
      _
    %p135 = scmp.lt.s32.totalorder %s16, 2
    // Predicated region
    $region13: #{transformer_forward.38} parent=5 // pred_check
      %p136 = pneg %p135
    $region14: #{transformer_forward.38} parent=5 // pred_check_branch
      %138 = sbr.rel (%p136) target = $region16
    $region15: #{transformer_forward.38} parent=5 // pred_region
      // Predicated region
      $region17: #{transformer_forward.38} parent=15 // pred_check
        %p139 = pneg %p36
      $region18: #{transformer_forward.38} parent=15 // pred_check_branch
        %141 = sbr.rel (%p139) target = $region20
      $region19: #{transformer_forward.38} parent=15 // pred_region
        %p142 = scmp.lt.s32.totalorder %s16, 1
        %s143 = scalar_select %p142, %s16, 1
        %s144 = smul.addr %s143, 4
        %s145 = scalar_lea.vmem %s1, %s144
      $region20: #{transformer_forward.38} parent=15 // pred_fallthru
        _
      // Predicated region
      $region21: #{transformer_forward.38} parent=15 // pred_check
        %p146 = pneg %p62
      $region22: #{transformer_forward.38} parent=15 // pred_check_branch
        %148 = sbr.rel (%p146) target = $region24
      $region23: #{transformer_forward.38} parent=15 // pred_region
        %p149 = scmp.lt.s32.totalorder %s16, 1
        %s150 = scalar_select %p149, %s16, 1
        %s151 = smul.addr %s150, 2
        %s152 = smul.addr %s151, 4
        %s153 = scalar_lea.vmem %s2, %s152
      $region24: #{transformer_forward.38} parent=15 // pred_fallthru
        _
      // Predicated region
      $region25: #{transformer_forward.38} parent=15 // pred_check
        %p154 = pneg %p88
      $region26: #{transformer_forward.38} parent=15 // pred_check_branch
        %156 = sbr.rel (%p154) target = $region28
      $region27: #{transformer_forward.38} parent=15 // pred_region
        %p157 = scmp.lt.s32.totalorder %s16, 1
        %s158 = scalar_select %p157, %s16, 1
        %s159 = smul.addr %s158, 2
        %s160 = sadd.s32 1, %s159
        %s161 = smul.addr %s160, 4
        %s162 = scalar_lea.vmem %s3, %s161
      $region28: #{transformer_forward.38} parent=15 // pred_fallthru
        _
    $region16: #{transformer_forward.38} parent=5 // pred_fallthru
      _
    %p163 = scmp.le.s32.totalorder 1, %s16
    %p164 = scmp.lt.s32.totalorder %s16, 3
    %p165 = pnand %p163, %p164
    %p166 = pneg %p165
    // Predicated region
    $region29: #{transformer_forward.38} parent=5 // pred_check
      _
    $region30: #{transformer_forward.38} parent=5 // pred_check_branch
      %168 = sbr.rel (%p165) target = $region32
    $region31: #{transformer_forward.38} parent=5 // pred_region
      %s169 = ssub.s32 %s16, 1
      %p170 = scmp.lt.s32.totalorder %s21, 1
      %s171 = scalar_select %p170, %s21, 1
      %s172 = smul.addr %s171, 4
      %s173 = scalar_lea.vmem %s1, %s172
      %p174 = pneg %p42
      %p175 = pneg %p39
      %p176 = scmp.lt.s32.totalorder %s21, 1
      %s177 = scalar_select %p176, %s21, 1
      %s178 = smul.addr %s177, 2
      %s179 = smul.addr %s178, 4
      %s180 = scalar_lea.vmem %s2, %s179
      %p181 = pneg %p68
      %p182 = pneg %p65
      %p183 = scmp.lt.s32.totalorder %s21, 1
      %s184 = scalar_select %p183, %s21, 1
      %s185 = smul.addr %s184, 2
      %s186 = sadd.s32 1, %s185
      %s187 = smul.addr %s186, 4
      %s188 = scalar_lea.vmem %s3, %s187
      %p189 = pneg %p94
      %p190 = pneg %p91
      %p191 = pneg %p120
      %p192 = pneg %p117
      %p193 = scmp.lt.s32.totalorder %s21, 1
      %s194 = scalar_select %p193, %s21, 1
      %s195 = smul.addr %s194, 4
      %s196 = scalar_lea.vmem %s4, %s195
      %p197 = scmp.lt.s32.totalorder %s21, 1
      %s198 = scalar_select %p197, %s21, 1
      %s199 = smul.addr %s198, 4
      %s200 = scalar_lea.vmem %s1, %s199
      %p201 = scmp.lt.s32.totalorder %s21, 1
      %s202 = scalar_select %p201, %s21, 1
      %s203 = smul.addr %s202, 2
      %s204 = smul.addr %s203, 4
      %s205 = scalar_lea.vmem %s2, %s204
      %p206 = scmp.lt.s32.totalorder %s21, 1
      %s207 = scalar_select %p206, %s21, 1
      %s208 = smul.addr %s207, 2
      %s209 = sadd.s32 1, %s208
      %s210 = smul.addr %s209, 4
      %s211 = scalar_lea.vmem %s3, %s210
      %p212 = scmp.lt.s32.totalorder %s21, 1
      %s213 = scalar_select %p212, %s21, 1
      %s214 = smul.addr %s213, 4
      %s215 = scalar_lea.vmem %s4, %s214
      %v217 = vld [vmem:[%s200] sm:$0xf]
      %v218 = vld [vmem:[%s205] sm:$0xf]
      %v219 = vld [vmem:[%s211] sm:$0xf]
      %v220 = vlaneseq
      %v221 = vand.u32 %v220, 127
      %s222 = sld [smem:[#allocation3 + %s21]]
      %v223 = vstv %s222
      %vm224 = vcmp.lt.s32.totalorder %v221, %v223
      %vm225 = vcmask 261120
      %v227 = vsel %vm225, %v217, 0
      %v230 = vsel %vm225, %v218, 0
      %232 = vmatprep.subr.bf16.mxu0 0
      %233 = vmatpush1.bf16.xpose.msra.mxu0 %v230
      %234 = vmatprep.subr.bf16.mxu0 0
      %235 = vmatpush1.bf16.xpose.msra.mxu0 0
      %236 = vmatprep.subr.bf16.mxu0 0
      %237 = vmatpush1.bf16.xpose.msra.mxu0 0
      %238 = vmatprep.subr.bf16.mxu0 0
      %239 = vmatpush1.bf16.xpose.msra.mxu0 0
      %240 = vmatprep.subr.bf16.mxu0 0
      %241 = vmatpush1.bf16.xpose.msra.mxu0 0
      %242 = vmatprep.subr.bf16.mxu0 0
      %243 = vmatpush1.bf16.xpose.msra.mxu0 0
      %244 = vmatprep.subr.bf16.mxu0 0
      %245 = vmatpush1.bf16.xpose.msra.mxu0 0
      %246 = vmatprep.subr.bf16.mxu0 0
      %247 = vmatpush1.bf16.xpose.msra.mxu0 0
      %248 = vmatprep.subr.bf16.mxu0 0
      %249 = vmatpush1.bf16.xpose.msra.mxu0 0
      %250 = vmatprep.subr.bf16.mxu0 0
      %251 = vmatpush1.bf16.xpose.msra.mxu0 0
      %252 = vmatprep.subr.bf16.mxu0 0
      %253 = vmatpush1.bf16.xpose.msra.mxu0 0
      %254 = vmatprep.subr.bf16.mxu0 0
      %255 = vmatpush1.bf16.xpose.msra.mxu0 0
      %256 = vmatprep.subr.bf16.mxu0 0
      %257 = vmatpush1.bf16.xpose.msra.mxu0 0
      %258 = vmatprep.subr.bf16.mxu0 0
      %259 = vmatpush1.bf16.xpose.msra.mxu0 0
      %260 = vmatprep.subr.bf16.mxu0 0
      %261 = vmatpush1.bf16.xpose.msra.mxu0 0
      %262 = vmatprep.subr.bf16.mxu0 0
      %263 = vmatpush1.bf16.xpose.msra.mxu0 0
      %264 = vmatprep.mubr.bf16.mxu0 0
      %265 = vmatmul.mubr.bf16.gmra.mrb[0].mxu0 %v227
      %v266 = vpop.f32.mrb[0].mxu0
      %v267 = vadd.f32 0.0, %v266
      %v268 = vpop.f32.mrb[0].mxu0
      %v269 = vpop.f32.mrb[0].mxu0
      %v270 = vpop.f32.mrb[0].mxu0
      %271 = vdwg.mxu0
      %v272 = vsel %vm224, %v267, -1e+30
      %vm273 = vcmask 64512
      %v274 = vsel %vm273, %v272, -inf
      %275 = vmax.xlane.f32.xlu0 %v274
      %v276 = vpop.xlane.xlu0 %275
      %v277 = vsub.f32 %v272, %v276
      %v278 = vmul.f32 %v277, 1.442695
      %v279 = vpow.pop %v278
      %v280 = vsel %vm273, %v279, 0.0
      %281 = vadd.xlane.f32.xlu0 %v280
      %v282 = vpop.xlane.xlu0 %281
      %v283 = vrcp.pop %v282
      %v284 = vmul.f32 %v279, %v283
      %v285 = vpack.c.bf16 %v284, %v284
      %v287 = vsel %vm273, %v285, 0
      %vm289 = vcmask 1043456
      %v291 = vsel %vm289, %v219, 0
      %293 = vmatprep.subr.bf16.mxu0 0
      %294 = vmatpush1.bf16.msra.mxu0 %v291
      %295 = vmatprep.subr.bf16.mxu0 0
      %296 = vmatpush1.bf16.msra.mxu0 0
      %297 = vmatprep.subr.bf16.mxu0 0
      %298 = vmatpush1.bf16.msra.mxu0 0
      %299 = vmatprep.subr.bf16.mxu0 0
      %300 = vmatpush1.bf16.msra.mxu0 0
      %301 = vmatprep.subr.bf16.mxu0 0
      %302 = vmatpush1.bf16.msra.mxu0 0
      %303 = vmatprep.subr.bf16.mxu0 0
      %304 = vmatpush1.bf16.msra.mxu0 0
      %305 = vmatprep.subr.bf16.mxu0 0
      %306 = vmatpush1.bf16.msra.mxu0 0
      %307 = vmatprep.subr.bf16.mxu0 0
      %308 = vmatpush1.bf16.msra.mxu0 0
      %309 = vmatprep.subr.bf16.mxu0 0
      %310 = vmatpush1.bf16.msra.mxu0 0
      %311 = vmatprep.subr.bf16.mxu0 0
      %312 = vmatpush1.bf16.msra.mxu0 0
      %313 = vmatprep.subr.bf16.mxu0 0
      %314 = vmatpush1.bf16.msra.mxu0 0
      %315 = vmatprep.subr.bf16.mxu0 0
      %316 = vmatpush1.bf16.msra.mxu0 0
      %317 = vmatprep.subr.bf16.mxu0 0
      %318 = vmatpush1.bf16.msra.mxu0 0
      %319 = vmatprep.subr.bf16.mxu0 0
      %320 = vmatpush1.bf16.msra.mxu0 0
      %321 = vmatprep.subr.bf16.mxu0 0
      %322 = vmatpush1.bf16.msra.mxu0 0
      %323 = vmatprep.subr.bf16.mxu0 0
      %324 = vmatpush1.bf16.msra.mxu0 0
      %325 = vmatprep.mubr.bf16.mxu0 0
      %326 = vmatmul.mubr.bf16.gmra.mrb[0].mxu0 %v287
      %v327 = vpop.f32.mrb[0].mxu0
      %v328 = vadd.f32 0.0, %v327
      %v329 = vpop.f32.mrb[0].mxu0
      %v330 = vpop.f32.mrb[0].mxu0
      %v331 = vpop.f32.mrb[0].mxu0
      %332 = vdwg.mxu0
      %v333 = vpack.c.bf16 %v328, %v328
      %vm334 = vcmask 257024
      %335 = vst.msk [vmem:[%s215] sm:$0xf] %vm334, %v333
      %v337 = vunpack.c.l.b16 %v217
      %v338 = vpack.c.b16 %v337, %v337
      %339 = vrot.lane.b32.xlu0 %v338, 96
      %v340 = vpop.permute.xlu0 %339
      %v342 = vunpack.c.l.b16 %v218
      %v343 = vpack.c.b16 %v342, %v342
      %344 = vrot.lane.b32.xlu0 %v343, 96
      %v345 = vpop.permute.xlu0 %344
      %v347 = vsel %vm225, %v340, 0
      %v350 = vsel %vm225, %v345, 0
      %352 = vmatprep.subr.bf16.mxu0 0
      %353 = vmatpush1.bf16.xpose.msra.mxu0 %v350
      %354 = vmatprep.subr.bf16.mxu0 0
      %355 = vmatpush1.bf16.xpose.msra.mxu0 0
      %356 = vmatprep.subr.bf16.mxu0 0
      %357 = vmatpush1.bf16.xpose.msra.mxu0 0
      %358 = vmatprep.subr.bf16.mxu0 0
      %359 = vmatpush1.bf16.xpose.msra.mxu0 0
      %360 = vmatprep.subr.bf16.mxu0 0
      %361 = vmatpush1.bf16.xpose.msra.mxu0 0
      %362 = vmatprep.subr.bf16.mxu0 0
      %363 = vmatpush1.bf16.xpose.msra.mxu0 0
      %364 = vmatprep.subr.bf16.mxu0 0
      %365 = vmatpush1.bf16.xpose.msra.mxu0 0
      %366 = vmatprep.subr.bf16.mxu0 0
      %367 = vmatpush1.bf16.xpose.msra.mxu0 0
      %368 = vmatprep.subr.bf16.mxu0 0
      %369 = vmatpush1.bf16.xpose.msra.mxu0 0
      %370 = vmatprep.subr.bf16.mxu0 0
      %371 = vmatpush1.bf16.xpose.msra.mxu0 0
      %372 = vmatprep.subr.bf16.mxu0 0
      %373 = vmatpush1.bf16.xpose.msra.mxu0 0
      %374 = vmatprep.subr.bf16.mxu0 0
      %375 = vmatpush1.bf16.xpose.msra.mxu0 0
      %376 = vmatprep.subr.bf16.mxu0 0
      %377 = vmatpush1.bf16.xpose.msra.mxu0 0
      %378 = vmatprep.subr.bf16.mxu0 0
      %379 = vmatpush1.bf16.xpose.msra.mxu0 0
      %380 = vmatprep.subr.bf16.mxu0 0
      %381 = vmatpush1.bf16.xpose.msra.mxu0 0
      %382 = vmatprep.subr.bf16.mxu0 0
      %383 = vmatpush1.bf16.xpose.msra.mxu0 0
      %384 = vmatprep.mubr.bf16.mxu0 0
      %385 = vmatmul.mubr.bf16.gmra.mrb[0].mxu0 %v347
      %v386 = vpop.f32.mrb[0].mxu0
      %v387 = vadd.f32 0.0, %v386
      %v388 = vpop.f32.mrb[0].mxu0
      %v389 = vpop.f32.mrb[0].mxu0
      %v390 = vpop.f32.mrb[0].mxu0
      %391 = vdwg.mxu0
      %v392 = vsel %vm224, %v387, -1e+30
      %v393 = vsel %vm273, %v392, -inf
      %394 = vmax.xlane.f32.xlu0 %v393
      %v395 = vpop.xlane.xlu0 %394
      %v396 = vsub.f32 %v392, %v395
      %v397 = vmul.f32 %v396, 1.442695
      %v398 = vpow.pop %v397
      %v399 = vsel %vm273, %v398, 0.0
      %400 = vadd.xlane.f32.xlu0 %v399
      %v401 = vpop.xlane.xlu0 %400
      %v402 = vrcp.pop %v401
      %v403 = vmul.f32 %v398, %v402
      %v404 = vpack.c.bf16 %v403, %v403
      %v406 = vunpack.c.l.b16 %v219
      %v407 = vpack.c.b16 %v406, %v406
      %408 = vrot.lane.b32.xlu0 %v407, 96
      %v409 = vpop.permute.xlu0 %408
      %v411 = vsel %vm273, %v404, 0
      %v414 = vsel %vm289, %v409, 0
      %416 = vmatprep.subr.bf16.mxu0 0
      %417 = vmatpush1.bf16.msra.mxu0 %v414
      %418 = vmatprep.subr.bf16.mxu0 0
      %419 = vmatpush1.bf16.msra.mxu0 0
      %420 = vmatprep.subr.bf16.mxu0 0
      %421 = vmatpush1.bf16.msra.mxu0 0
      %422 = vmatprep.subr.bf16.mxu0 0
      %423 = vmatpush1.bf16.msra.mxu0 0
      %424 = vmatprep.subr.bf16.mxu0 0
      %425 = vmatpush1.bf16.msra.mxu0 0
      %426 = vmatprep.subr.bf16.mxu0 0
      %427 = vmatpush1.bf16.msra.mxu0 0
      %428 = vmatprep.subr.bf16.mxu0 0
      %429 = vmatpush1.bf16.msra.mxu0 0
      %430 = vmatprep.subr.bf16.mxu0 0
      %431 = vmatpush1.bf16.msra.mxu0 0
      %432 = vmatprep.subr.bf16.mxu0 0
      %433 = vmatpush1.bf16.msra.mxu0 0
      %434 = vmatprep.subr.bf16.mxu0 0
      %435 = vmatpush1.bf16.msra.mxu0 0
      %436 = vmatprep.subr.bf16.mxu0 0
      %437 = vmatpush1.bf16.msra.mxu0 0
      %438 = vmatprep.subr.bf16.mxu0 0
      %439 = vmatpush1.bf16.msra.mxu0 0
      %440 = vmatprep.subr.bf16.mxu0 0
      %441 = vmatpush1.bf16.msra.mxu0 0
      %442 = vmatprep.subr.bf16.mxu0 0
      %443 = vmatpush1.bf16.msra.mxu0 0
      %444 = vmatprep.subr.bf16.mxu0 0
      %445 = vmatpush1.bf16.msra.mxu0 0
      %446 = vmatprep.subr.bf16.mxu0 0
      %447 = vmatpush1.bf16.msra.mxu0 0
      %448 = vmatprep.mubr.bf16.mxu0 0
      %449 = vmatmul.mubr.bf16.gmra.mrb[0].mxu0 %v411
      %v450 = vpop.f32.mrb[0].mxu0
      %v451 = vadd.f32 0.0, %v450
      %v452 = vpop.f32.mrb[0].mxu0
      %v453 = vpop.f32.mrb[0].mxu0
      %v454 = vpop.f32.mrb[0].mxu0
      %455 = vdwg.mxu0
      %v456 = vpack.c.bf16 %v451, %v451
      %v458 = vunpack.c.l.b16 %v456
      %v459 = vpack.c.b16 %v458, %v458
      %460 = vrot.lane.b32.xlu0 %v459, 32
      %v461 = vpop.permute.xlu0 %460
      %vm463 = vcmask 519424
      %464 = vst.msk [vmem:[%s215] sm:$0xf] %vm463, %v461
      %465 = vrot.lane.b32.xlu0 %v338, 64
      %v466 = vpop.permute.xlu0 %465
      %467 = vrot.lane.b32.xlu0 %v343, 64
      %v468 = vpop.permute.xlu0 %467
      %v470 = vsel %vm225, %v466, 0
      %v473 = vsel %vm225, %v468, 0
      %475 = vmatprep.subr.bf16.mxu0 0
      %476 = vmatpush1.bf16.xpose.msra.mxu0 %v473
      %477 = vmatprep.subr.bf16.mxu0 0
      %478 = vmatpush1.bf16.xpose.msra.mxu0 0
      %479 = vmatprep.subr.bf16.mxu0 0
      %480 = vmatpush1.bf16.xpose.msra.mxu0 0
      %481 = vmatprep.subr.bf16.mxu0 0
      %482 = vmatpush1.bf16.xpose.msra.mxu0 0
      %483 = vmatprep.subr.bf16.mxu0 0
      %484 = vmatpush1.bf16.xpose.msra.mxu0 0
      %485 = vmatprep.subr.bf16.mxu0 0
      %486 = vmatpush1.bf16.xpose.msra.mxu0 0
      %487 = vmatprep.subr.bf16.mxu0 0
      %488 = vmatpush1.bf16.xpose.msra.mxu0 0
      %489 = vmatprep.subr.bf16.mxu0 0
      %490 = vmatpush1.bf16.xpose.msra.mxu0 0
      %491 = vmatprep.subr.bf16.mxu0 0
      %492 = vmatpush1.bf16.xpose.msra.mxu0 0
      %493 = vmatprep.subr.bf16.mxu0 0
      %494 = vmatpush1.bf16.xpose.msra.mxu0 0
      %495 = vmatprep.subr.bf16.mxu0 0
      %496 = vmatpush1.bf16.xpose.msra.mxu0 0
      %497 = vmatprep.subr.bf16.mxu0 0
      %498 = vmatpush1.bf16.xpose.msra.mxu0 0
      %499 = vmatprep.subr.bf16.mxu0 0
      %500 = vmatpush1.bf16.xpose.msra.mxu0 0
      %501 = vmatprep.subr.bf16.mxu0 0
      %502 = vmatpush1.bf16.xpose.msra.mxu0 0
      %503 = vmatprep.subr.bf16.mxu0 0
      %504 = vmatpush1.bf16.xpose.msra.mxu0 0
      %505 = vmatprep.subr.bf16.mxu0 0
      %506 = vmatpush1.bf16.xpose.msra.mxu0 0
      %507 = vmatprep.mubr.bf16.mxu0 0
      %508 = vmatmul.mubr.bf16.gmra.mrb[0].mxu0 %v470
      %v509 = vpop.f32.mrb[0].mxu0
      %v510 = vadd.f32 0.0, %v509
      %v511 = vpop.f32.mrb[0].mxu0
      %v512 = vpop.f32.mrb[0].mxu0
      %v513 = vpop.f32.mrb[0].mxu0
      %514 = vdwg.mxu0
      %v515 = vsel %vm224, %v510, -1e+30
      %v516 = vsel %vm273, %v515, -inf
      %517 = vmax.xlane.f32.xlu0 %v516
      %v518 = vpop.xlane.xlu0 %517
      %v519 = vsub.f32 %v515, %v518
      %v520 = vmul.f32 %v519, 1.442695
      %v521 = vpow.pop %v520
      %v522 = vsel %vm273, %v521, 0.0
      %523 = vadd.xlane.f32.xlu0 %v522
      %v524 = vpop.xlane.xlu0 %523
      %v525 = vrcp.pop %v524
      %v526 = vmul.f32 %v521, %v525
      %v527 = vpack.c.bf16 %v526, %v526
      %528 = vrot.lane.b32.xlu0 %v407, 64
      %v529 = vpop.permute.xlu0 %528
      %v531 = vsel %vm273, %v527, 0
      %v534 = vsel %vm289, %v529, 0
      %536 = vmatprep.subr.bf16.mxu0 0
      %537 = vmatpush1.bf16.msra.mxu0 %v534
      %538 = vmatprep.subr.bf16.mxu0 0
      %539 = vmatpush1.bf16.msra.mxu0 0
      %540 = vmatprep.subr.bf16.mxu0 0
      %541 = vmatpush1.bf16.msra.mxu0 0
      %542 = vmatprep.subr.bf16.mxu0 0
      %543 = vmatpush1.bf16.msra.mxu0 0
      %544 = vmatprep.subr.bf16.mxu0 0
      %545 = vmatpush1.bf16.msra.mxu0 0
      %546 = vmatprep.subr.bf16.mxu0 0
      %547 = vmatpush1.bf16.msra.mxu0 0
      %548 = vmatprep.subr.bf16.mxu0 0
      %549 = vmatpush1.bf16.msra.mxu0 0
      %550 = vmatprep.subr.bf16.mxu0 0
      %551 = vmatpush1.bf16.msra.mxu0 0
      %552 = vmatprep.subr.bf16.mxu0 0
      %553 = vmatpush1.bf16.msra.mxu0 0
      %554 = vmatprep.subr.bf16.mxu0 0
      %555 = vmatpush1.bf16.msra.mxu0 0
      %556 = vmatprep.subr.bf16.mxu0 0
      %557 = vmatpush1.bf16.msra.mxu0 0
      %558 = vmatprep.subr.bf16.mxu0 0
      %559 = vmatpush1.bf16.msra.mxu0 0
      %560 = vmatprep.subr.bf16.mxu0 0
      %561 = vmatpush1.bf16.msra.mxu0 0
      %562 = vmatprep.subr.bf16.mxu0 0
      %563 = vmatpush1.bf16.msra.mxu0 0
      %564 = vmatprep.subr.bf16.mxu0 0
      %565 = vmatpush1.bf16.msra.mxu0 0
      %566 = vmatprep.subr.bf16.mxu0 0
      %567 = vmatpush1.bf16.msra.mxu0 0
      %568 = vmatprep.mubr.bf16.mxu0 0
      %569 = vmatmul.mubr.bf16.gmra.mrb[0].mxu0 %v531
      %v570 = vpop.f32.mrb[0].mxu0
      %v571 = vadd.f32 0.0, %v570
      %v572 = vpop.f32.mrb[0].mxu0
      %v573 = vpop.f32.mrb[0].mxu0
      %v574 = vpop.f32.mrb[0].mxu0
      %575 = vdwg.mxu0
      %v576 = vpack.c.bf16 %v571, %v571
      %v578 = vunpack.c.l.b16 %v576
      %v579 = vpack.c.b16 %v578, %v578
      %580 = vrot.lane.b32.xlu0 %v579, 64
      %v581 = vpop.permute.xlu0 %580
      %vm583 = vcmask 781824
      %584 = vst.msk [vmem:[%s215] sm:$0xf] %vm583, %v581
      %585 = vrot.lane.b32.xlu0 %v338, 32
      %v586 = vpop.permute.xlu0 %585
      %587 = vrot.lane.b32.xlu0 %v343, 32
      %v588 = vpop.permute.xlu0 %587
      %v590 = vsel %vm225, %v586, 0
      %v593 = vsel %vm225, %v588, 0
      %595 = vmatprep.subr.bf16.mxu0 0
      %596 = vmatpush1.bf16.xpose.msra.mxu0 %v593
      %597 = vmatprep.subr.bf16.mxu0 0
      %598 = vmatpush1.bf16.xpose.msra.mxu0 0
      %599 = vmatprep.subr.bf16.mxu0 0
      %600 = vmatpush1.bf16.xpose.msra.mxu0 0
      %601 = vmatprep.subr.bf16.mxu0 0
      %602 = vmatpush1.bf16.xpose.msra.mxu0 0
      %603 = vmatprep.subr.bf16.mxu0 0
      %604 = vmatpush1.bf16.xpose.msra.mxu0 0
      %605 = vmatprep.subr.bf16.mxu0 0
      %606 = vmatpush1.bf16.xpose.msra.mxu0 0
      %607 = vmatprep.subr.bf16.mxu0 0
      %608 = vmatpush1.bf16.xpose.msra.mxu0 0
      %609 = vmatprep.subr.bf16.mxu0 0
      %610 = vmatpush1.bf16.xpose.msra.mxu0 0
      %611 = vmatprep.subr.bf16.mxu0 0
      %612 = vmatpush1.bf16.xpose.msra.mxu0 0
      %613 = vmatprep.subr.bf16.mxu0 0
      %614 = vmatpush1.bf16.xpose.msra.mxu0 0
      %615 = vmatprep.subr.bf16.mxu0 0
      %616 = vmatpush1.bf16.xpose.msra.mxu0 0
      %617 = vmatprep.subr.bf16.mxu0 0
      %618 = vmatpush1.bf16.xpose.msra.mxu0 0
      %619 = vmatprep.subr.bf16.mxu0 0
      %620 = vmatpush1.bf16.xpose.msra.mxu0 0
      %621 = vmatprep.subr.bf16.mxu0 0
      %622 = vmatpush1.bf16.xpose.msra.mxu0 0
      %623 = vmatprep.subr.bf16.mxu0 0
      %624 = vmatpush1.bf16.xpose.msra.mxu0 0
      %625 = vmatprep.subr.bf16.mxu0 0
      %626 = vmatpush1.bf16.xpose.msra.mxu0 0
      %627 = vmatprep.mubr.bf16.mxu0 0
      %628 = vmatmul.mubr.bf16.gmra.mrb[0].mxu0 %v590
      %v629 = vpop.f32.mrb[0].mxu0
      %v630 = vadd.f32 0.0, %v629
      %v631 = vpop.f32.mrb[0].mxu0
      %v632 = vpop.f32.mrb[0].mxu0
      %v633 = vpop.f32.mrb[0].mxu0
      %634 = vdwg.mxu0
      %v635 = vsel %vm224, %v630, -1e+30
      %v636 = vsel %vm273, %v635, -inf
      %637 = vmax.xlane.f32.xlu0 %v636
      %v638 = vpop.xlane.xlu0 %637
      %v639 = vsub.f32 %v635, %v638
      %v640 = vmul.f32 %v639, 1.442695
      %v641 = vpow.pop %v640
      %v642 = vsel %vm273, %v641, 0.0
      %643 = vadd.xlane.f32.xlu0 %v642
      %v644 = vpop.xlane.xlu0 %643
      %v645 = vrcp.pop %v644
      %v646 = vmul.f32 %v641, %v645
      %v647 = vpack.c.bf16 %v646, %v646
      %648 = vrot.lane.b32.xlu0 %v407, 32
      %v649 = vpop.permute.xlu0 %648
      %v651 = vsel %vm273, %v647, 0
      %v654 = vsel %vm289, %v649, 0
      %656 = vmatprep.subr.bf16.mxu0 0
      %657 = vmatpush1.bf16.msra.mxu0 %v654
      %658 = vmatprep.subr.bf16.mxu0 0
      %659 = vmatpush1.bf16.msra.mxu0 0
      %660 = vmatprep.subr.bf16.mxu0 0
      %661 = vmatpush1.bf16.msra.mxu0 0
      %662 = vmatprep.subr.bf16.mxu0 0
      %663 = vmatpush1.bf16.msra.mxu0 0
      %664 = vmatprep.subr.bf16.mxu0 0
      %665 = vmatpush1.bf16.msra.mxu0 0
      %666 = vmatprep.subr.bf16.mxu0 0
      %667 = vmatpush1.bf16.msra.mxu0 0
      %668 = vmatprep.subr.bf16.mxu0 0
      %669 = vmatpush1.bf16.msra.mxu0 0
      %670 = vmatprep.subr.bf16.mxu0 0
      %671 = vmatpush1.bf16.msra.mxu0 0
      %672 = vmatprep.subr.bf16.mxu0 0
      %673 = vmatpush1.bf16.msra.mxu0 0
      %674 = vmatprep.subr.bf16.mxu0 0
      %675 = vmatpush1.bf16.msra.mxu0 0
      %676 = vmatprep.subr.bf16.mxu0 0
      %677 = vmatpush1.bf16.msra.mxu0 0
      %678 = vmatprep.subr.bf16.mxu0 0
      %679 = vmatpush1.bf16.msra.mxu0 0
      %680 = vmatprep.subr.bf16.mxu0 0
      %681 = vmatpush1.bf16.msra.mxu0 0
      %682 = vmatprep.subr.bf16.mxu0 0
      %683 = vmatpush1.bf16.msra.mxu0 0
      %684 = vmatprep.subr.bf16.mxu0 0
      %685 = vmatpush1.bf16.msra.mxu0 0
      %686 = vmatprep.subr.bf16.mxu0 0
      %687 = vmatpush1.bf16.msra.mxu0 0
      %688 = vmatprep.mubr.bf16.mxu0 0
      %689 = vmatmul.mubr.bf16.gmra.mrb[0].mxu0 %v651
      %v690 = vpop.f32.mrb[0].mxu0
      %v691 = vadd.f32 0.0, %v690
      %v692 = vpop.f32.mrb[0].mxu0
      %v693 = vpop.f32.mrb[0].mxu0
      %v694 = vpop.f32.mrb[0].mxu0
      %695 = vdwg.mxu0
      %v696 = vpack.c.bf16 %v691, %v691
      %v698 = vunpack.c.l.b16 %v696
      %v699 = vpack.c.b16 %v698, %v698
      %700 = vrot.lane.b32.xlu0 %v699, 96
      %v701 = vpop.permute.xlu0 %700
      %vm703 = vcmask 1044224
      %704 = vst.msk [vmem:[%s215] sm:$0xf] %vm703, %v701
      %p705 = scmp.lt.s32.totalorder %s21, 1
      %s706 = scalar_select %p705, %s21, 1
      %s707 = smul.addr %s706, 4
      %s708 = scalar_lea.vmem %s4, %s707
      // Predicated region
      $region33: #{transformer_forward.38} parent=31 // pred_check
        %p709 = pneg %p117
      $region34: #{transformer_forward.38} parent=31 // pred_check_branch
        %711 = sbr.rel (%p709) target = $region36
      $region35: #{transformer_forward.38} parent=31 // pred_region
        _
      $region36: #{transformer_forward.38} parent=31 // pred_fallthru
        _
    $region32: #{transformer_forward.38} parent=5 // pred_fallthru
      _
    %p712 = scmp.le.s32.totalorder 2, %s16
    // Predicated region
    $region37: #{transformer_forward.38} parent=5 // pred_check
      %p713 = pneg %p712
    $region38: #{transformer_forward.38} parent=5 // pred_check_branch
      %715 = sbr.rel (%p713) target = $region40
    $region39: #{transformer_forward.38} parent=5 // pred_region
      %s716 = ssub.s32 %s16, 2
      // Predicated region
      $region41: #{transformer_forward.38} parent=39 // pred_check
        %p717 = pneg %p123
      $region42: #{transformer_forward.38} parent=39 // pred_check_branch
        %719 = sbr.rel (%p717) target = $region44
      $region43: #{transformer_forward.38} parent=39 // pred_region
        %p720 = scmp.lt.s32.totalorder %s22, 1
        %s721 = scalar_select %p720, %s22, 1
        %s722 = smul.addr %s721, 4
        %s723 = scalar_lea.vmem %s4, %s722
      $region44: #{transformer_forward.38} parent=39 // pred_fallthru
        _
    $region40: #{transformer_forward.38} parent=5 // pred_fallthru
      _
  $region6: #{transformer_forward.38} parent=0 // loop_footer
    %s20 = sadd.s32 1, %s16
  $region7: #{transformer_forward.38} parent=0 // loop_footer_branch
    %15 = sbr.rel target = $region3
  $region8: #{transformer_forward.38} parent=0 // loop_exit
    _

// kernel: transformer_forward.26
$region0: #{transformer_forward.26}
  #allocation0 [shape = 'u32[]', space=smem, size = 0x4, offset = 0x4, fixed_abs, tag = 'smem constant byte address 0x4 - core index']
  #allocation1 [shape = 'u32[144,128]{1,0:T(1,128)}', space=vmem, size = 0x12000, scoped, tag = 'internal scratch']
  #allocation2 [shape = 's32[1]{0}', space=sflag, size = 0x4, scoped, tag = 'scoped memory for transformer_forward.26']
  #allocation3 [shape = 'u8[512]{0}', space=smem, size = 0x200, scoped, tag = 'prefetched SMEM operand 0']
  %s0 = inlined_call_operand.vmem [shape: s32[2], index: 0, kind: input, shape index: {}]
  %s1 = inlined_call_operand.vmem [shape: bf16[2,8,384], index: 1, kind: input, shape index: {}, may-alias: {1,2,3}]
  %s2 = inlined_call_operand.vmem [shape: bf16[2,8,384], index: 2, kind: input, shape index: {}, may-alias: {1,2,3}]
  %s3 = inlined_call_operand.vmem [shape: bf16[2,8,384], index: 3, kind: input, shape index: {}, may-alias: {1,2,3}]
  %s4 = inlined_call_operand.vmem [shape: bf16[2,8,128], index: 4, kind: output, shape index: {}]
  %s5 = sld [smem:[#allocation0]]
  $region45: #{transformer_forward.26} parent=0
    _
  %s7 = ssub.s32 1, %s5
  %s8 = scalar_select 0, %s7, %s5
  %s9 = sshll.u32 %s0, 4
  %s10 = int_to_ptr.vmem [resolvable:$true] %s9
  %12 = dma.vmem_to_smem %s10, 16, [#allocation3], [#allocation2]
  %13 = dma.done [#allocation2], 16
  %14 = sfence
  loop: start=0, step=1, limit=4
  $region2: #{transformer_forward.26} parent=0 // loop_pre_header
    _
  $region3: #{transformer_forward.26} parent=0 // loop_header
    %s16 = sphi 0, %s20
    %p17 = scmp.ge.s32.totalorder %s16, 4
    %s26 = sphi 0, %s28
    %s29 = sphi 0, %s26
    %s30 = sphi 0, %s29
    %s46 = sphi 0, %s30
    %s52 = sphi 0, %s54
    %s55 = sphi 0, %s52
    %s56 = sphi 0, %s55
    %s72 = sphi 0, %s56
    %s78 = sphi 0, %s80
    %s81 = sphi 0, %s78
    %s82 = sphi 0, %s81
    %s98 = sphi 0, %s82
    %s104 = sphi 0, %s106
    %s107 = sphi 0, %s104
    %s108 = sphi 0, %s107
    %s124 = sphi 0, %s108
  $region4: #{transformer_forward.26} parent=0 // loop_header_branch
    %19 = sbr.rel (%p17) target = $region8
  $region5: #{transformer_forward.26} parent=0 // loop_body
    %s21 = ssub.s32 %s16, 1
    %s22 = ssub.s32 %s16, 2
    %s23 = sadd.s32 %s16, 1
    %s24 = ssub.s32 %s16, %s23
    %p25 = scmp.eq.s32.totalorder %s24, 0
    %s27 = sadd.s32 %s26, 1
    %s28 = scalar_select %p25, %s26, %s27
    %p31 = pneg %p25
    %p32 = scmp.eq.s32.totalorder %s16, 1
    %p33 = por %p31, %p32
    %p34 = scmp.ne.s32.totalorder %s26, %s29
    %p35 = scmp.eq.s32.totalorder %s16, 0
    %p36 = por %p34, %p35
    %p37 = scmp.ne.s32.totalorder %s26, %s29
    %p38 = scmp.eq.s32.totalorder %s21, 1
    %p39 = por %p37, %p38
    %p40 = scmp.ne.s32.totalorder %s29, %s30
    %p41 = scmp.eq.s32.totalorder %s21, 0
    %p42 = por %p40, %p41
    %p43 = scmp.ne.s32.totalorder %s29, %s30
    %p44 = scmp.eq.s32.totalorder %s22, 1
    %p45 = por %p43, %p44
    %p47 = scmp.ne.s32.totalorder %s30, %s46
    %p48 = scmp.eq.s32.totalorder %s22, 0
    %p49 = por %p47, %p48
    %s50 = ssub.s32 %s16, %s23
    %p51 = scmp.eq.s32.totalorder %s50, 0
    %s53 = sadd.s32 %s52, 1
    %s54 = scalar_select %p51, %s52, %s53
    %p57 = pneg %p51
    %p58 = scmp.eq.s32.totalorder %s16, 1
    %p59 = por %p57, %p58
    %p60 = scmp.ne.s32.totalorder %s52, %s55
    %p61 = scmp.eq.s32.totalorder %s16, 0
    %p62 = por %p60, %p61
    %p63 = scmp.ne.s32.totalorder %s52, %s55
    %p64 = scmp.eq.s32.totalorder %s21, 1
    %p65 = por %p63, %p64
    %p66 = scmp.ne.s32.totalorder %s55, %s56
    %p67 = scmp.eq.s32.totalorder %s21, 0
    %p68 = por %p66, %p67
    %p69 = scmp.ne.s32.totalorder %s55, %s56
    %p70 = scmp.eq.s32.totalorder %s22, 1
    %p71 = por %p69, %p70
    %p73 = scmp.ne.s32.totalorder %s56, %s72
    %p74 = scmp.eq.s32.totalorder %s22, 0
    %p75 = por %p73, %p74
    %s76 = ssub.s32 %s16, %s23
    %p77 = scmp.eq.s32.totalorder %s76, 0
    %s79 = sadd.s32 %s78, 1
    %s80 = scalar_select %p77, %s78, %s79
    %p83 = pneg %p77
    %p84 = scmp.eq.s32.totalorder %s16, 1
    %p85 = por %p83, %p84
    %p86 = scmp.ne.s32.totalorder %s78, %s81
    %p87 = scmp.eq.s32.totalorder %s16, 0
    %p88 = por %p86, %p87
    %p89 = scmp.ne.s32.totalorder %s78, %s81
    %p90 = scmp.eq.s32.totalorder %s21, 1
    %p91 = por %p89, %p90
    %p92 = scmp.ne.s32.totalorder %s81, %s82
    %p93 = scmp.eq.s32.totalorder %s21, 0
    %p94 = por %p92, %p93
    %p95 = scmp.ne.s32.totalorder %s81, %s82
    %p96 = scmp.eq.s32.totalorder %s22, 1
    %p97 = por %p95, %p96
    %p99 = scmp.ne.s32.totalorder %s82, %s98
    %p100 = scmp.eq.s32.totalorder %s22, 0
    %p101 = por %p99, %p100
    %s102 = ssub.s32 %s16, %s23
    %p103 = scmp.eq.s32.totalorder %s102, 0
    %s105 = sadd.s32 %s104, 1
    %s106 = scalar_select %p103, %s104, %s105
    %p109 = pneg %p103
    %p110 = scmp.eq.s32.totalorder %s16, 1
    %p111 = por %p109, %p110
    %p112 = scmp.ne.s32.totalorder %s104, %s107
    %p113 = scmp.eq.s32.totalorder %s16, 0
    %p114 = por %p112, %p113
    %p115 = scmp.ne.s32.totalorder %s104, %s107
    %p116 = scmp.eq.s32.totalorder %s21, 1
    %p117 = por %p115, %p116
    %p118 = scmp.ne.s32.totalorder %s107, %s108
    %p119 = scmp.eq.s32.totalorder %s21, 0
    %p120 = por %p118, %p119
    %p121 = scmp.ne.s32.totalorder %s107, %s108
    %p122 = scmp.eq.s32.totalorder %s22, 1
    %p123 = por %p121, %p122
    %p125 = scmp.ne.s32.totalorder %s108, %s124
    %p126 = scmp.eq.s32.totalorder %s22, 0
    %p127 = por %p125, %p126
    %p128 = scmp.le.s32.totalorder 1, %s16
    %p129 = scmp.lt.s32.totalorder %s16, 3
    %p130 = pnand %p128, %p129
    %p131 = pneg %p130
    // Predicated region
    $region9: #{transformer_forward.26} parent=5 // pred_check
      _
    $region10: #{transformer_forward.26} parent=5 // pred_check_branch
      %133 = sbr.rel (%p130) target = $region12
    $region11: #{transformer_forward.26} parent=5 // pred_region
      %s134 = ssub.s32 %s16, 1
    $region12: #{transformer_forward.26} parent=5 // pred_fallthru
      _
    %p135 = scmp.lt.s32.totalorder %s16, 2
    // Predicated region
    $region13: #{transformer_forward.26} parent=5 // pred_check
      %p136 = pneg %p135
    $region14: #{transformer_forward.26} parent=5 // pred_check_branch
      %138 = sbr.rel (%p136) target = $region16
    $region15: #{transformer_forward.26} parent=5 // pred_region
      // Predicated region
      $region17: #{transformer_forward.26} parent=15 // pred_check
        %p139 = pneg %p36
      $region18: #{transformer_forward.26} parent=15 // pred_check_branch
        %141 = sbr.rel (%p139) target = $region20
      $region19: #{transformer_forward.26} parent=15 // pred_region
        %p142 = scmp.lt.s32.totalorder %s16, 1
        %s143 = scalar_select %p142, %s16, 1
        %s144 = smul.addr %s143, 3
        %s145 = smul.addr %s144, 4
        %s146 = scalar_lea.vmem %s1, %s145
      $region20: #{transformer_forward.26} parent=15 // pred_fallthru
        _
      // Predicated region
      $region21: #{transformer_forward.26} parent=15 // pred_check
        %p147 = pneg %p62
      $region22: #{transformer_forward.26} parent=15 // pred_check_branch
        %149 = sbr.rel (%p147) target = $region24
      $region23: #{transformer_forward.26} parent=15 // pred_region
        %p150 = scmp.lt.s32.totalorder %s16, 1
        %s151 = scalar_select %p150, %s16, 1
        %s152 = smul.addr %s151, 3
        %s153 = sadd.s32 1, %s152
        %s154 = smul.addr %s153, 4
        %s155 = scalar_lea.vmem %s2, %s154
      $region24: #{transformer_forward.26} parent=15 // pred_fallthru
        _
      // Predicated region
      $region25: #{transformer_forward.26} parent=15 // pred_check
        %p156 = pneg %p88
      $region26: #{transformer_forward.26} parent=15 // pred_check_branch
        %158 = sbr.rel (%p156) target = $region28
      $region27: #{transformer_forward.26} parent=15 // pred_region
        %p159 = scmp.lt.s32.totalorder %s16, 1
        %s160 = scalar_select %p159, %s16, 1
        %s161 = smul.addr %s160, 3
        %s162 = sadd.s32 2, %s161
        %s163 = smul.addr %s162, 4
        %s164 = scalar_lea.vmem %s3, %s163
      $region28: #{transformer_forward.26} parent=15 // pred_fallthru
        _
    $region16: #{transformer_forward.26} parent=5 // pred_fallthru
      _
    %p165 = scmp.le.s32.totalorder 1, %s16
    %p166 = scmp.lt.s32.totalorder %s16, 3
    %p167 = pnand %p165, %p166
    %p168 = pneg %p167
    // Predicated region
    $region29: #{transformer_forward.26} parent=5 // pred_check
      _
    $region30: #{transformer_forward.26} parent=5 // pred_check_branch
      %170 = sbr.rel (%p167) target = $region32
    $region31: #{transformer_forward.26} parent=5 // pred_region
      %s171 = ssub.s32 %s16, 1
      %p172 = scmp.lt.s32.totalorder %s21, 1
      %s173 = scalar_select %p172, %s21, 1
      %s174 = smul.addr %s173, 3
      %s175 = smul.addr %s174, 4
      %s176 = scalar_lea.vmem %s1, %s175
      %p177 = pneg %p42
      %p178 = pneg %p39
      %p179 = scmp.lt.s32.totalorder %s21, 1
      %s180 = scalar_select %p179, %s21, 1
      %s181 = smul.addr %s180, 3
      %s182 = sadd.s32 1, %s181
      %s183 = smul.addr %s182, 4
      %s184 = scalar_lea.vmem %s2, %s183
      %p185 = pneg %p68
      %p186 = pneg %p65
      %p187 = scmp.lt.s32.totalorder %s21, 1
      %s188 = scalar_select %p187, %s21, 1
      %s189 = smul.addr %s188, 3
      %s190 = sadd.s32 2, %s189
      %s191 = smul.addr %s190, 4
      %s192 = scalar_lea.vmem %s3, %s191
      %p193 = pneg %p94
      %p194 = pneg %p91
      %p195 = pneg %p120
      %p196 = pneg %p117
      %p197 = scmp.lt.s32.totalorder %s21, 1
      %s198 = scalar_select %p197, %s21, 1
      %s199 = smul.addr %s198, 4
      %s200 = scalar_lea.vmem %s4, %s199
      %p201 = scmp.lt.s32.totalorder %s21, 1
      %s202 = scalar_select %p201, %s21, 1
      %s203 = smul.addr %s202, 3
      %s204 = smul.addr %s203, 4
      %s205 = scalar_lea.vmem %s1, %s204
      %p206 = scmp.lt.s32.totalorder %s21, 1
      %s207 = scalar_select %p206, %s21, 1
      %s208 = smul.addr %s207, 3
      %s209 = sadd.s32 1, %s208
      %s210 = smul.addr %s209, 4
      %s211 = scalar_lea.vmem %s2, %s210
      %p212 = scmp.lt.s32.totalorder %s21, 1
      %s213 = scalar_select %p212, %s21, 1
      %s214 = smul.addr %s213, 3
      %s215 = sadd.s32 2, %s214
      %s216 = smul.addr %s215, 4
      %s217 = scalar_lea.vmem %s3, %s216
      %p218 = scmp.lt.s32.totalorder %s21, 1
      %s219 = scalar_select %p218, %s21, 1
      %s220 = smul.addr %s219, 4
      %s221 = scalar_lea.vmem %s4, %s220
      %v223 = vld [vmem:[%s205] sm:$0xf]
      %v224 = vld [vmem:[%s211] sm:$0xf]
      %v225 = vld [vmem:[%s217] sm:$0xf]
      %v226 = vlaneseq
      %v227 = vand.u32 %v226, 127
      %s228 = sld [smem:[#allocation3 + %s21]]
      %v229 = vstv %s228
      %vm230 = vcmp.lt.s32.totalorder %v227, %v229
      %vm231 = vcmask 261120
      %v233 = vsel %vm231, %v223, 0
      %v236 = vsel %vm231, %v224, 0
      %238 = vmatprep.subr.bf16.mxu0 0
      %239 = vmatpush1.bf16.xpose.msra.mxu0 %v236
      %240 = vmatprep.subr.bf16.mxu0 0
      %241 = vmatpush1.bf16.xpose.msra.mxu0 0
      %242 = vmatprep.subr.bf16.mxu0 0
      %243 = vmatpush1.bf16.xpose.msra.mxu0 0
      %244 = vmatprep.subr.bf16.mxu0 0
      %245 = vmatpush1.bf16.xpose.msra.mxu0 0
      %246 = vmatprep.subr.bf16.mxu0 0
      %247 = vmatpush1.bf16.xpose.msra.mxu0 0
      %248 = vmatprep.subr.bf16.mxu0 0
      %249 = vmatpush1.bf16.xpose.msra.mxu0 0
      %250 = vmatprep.subr.bf16.mxu0 0
      %251 = vmatpush1.bf16.xpose.msra.mxu0 0
      %252 = vmatprep.subr.bf16.mxu0 0
      %253 = vmatpush1.bf16.xpose.msra.mxu0 0
      %254 = vmatprep.subr.bf16.mxu0 0
      %255 = vmatpush1.bf16.xpose.msra.mxu0 0
      %256 = vmatprep.subr.bf16.mxu0 0
      %257 = vmatpush1.bf16.xpose.msra.mxu0 0
      %258 = vmatprep.subr.bf16.mxu0 0
      %259 = vmatpush1.bf16.xpose.msra.mxu0 0
      %260 = vmatprep.subr.bf16.mxu0 0
      %261 = vmatpush1.bf16.xpose.msra.mxu0 0
      %262 = vmatprep.subr.bf16.mxu0 0
      %263 = vmatpush1.bf16.xpose.msra.mxu0 0
      %264 = vmatprep.subr.bf16.mxu0 0
      %265 = vmatpush1.bf16.xpose.msra.mxu0 0
      %266 = vmatprep.subr.bf16.mxu0 0
      %267 = vmatpush1.bf16.xpose.msra.mxu0 0
      %268 = vmatprep.subr.bf16.mxu0 0
      %269 = vmatpush1.bf16.xpose.msra.mxu0 0
      %270 = vmatprep.mubr.bf16.mxu0 0
      %271 = vmatmul.mubr.bf16.gmra.mrb[0].mxu0 %v233
      %v272 = vpop.f32.mrb[0].mxu0
      %v273 = vadd.f32 0.0, %v272
      %v274 = vpop.f32.mrb[0].mxu0
      %v275 = vpop.f32.mrb[0].mxu0
      %v276 = vpop.f32.mrb[0].mxu0
      %277 = vdwg.mxu0
      %v278 = vsel %vm230, %v273, -1e+30
      %vm279 = vcmask 64512
      %v280 = vsel %vm279, %v278, -inf
      %281 = vmax.xlane.f32.xlu0 %v280
      %v282 = vpop.xlane.xlu0 %281
      %v283 = vsub.f32 %v278, %v282
      %v284 = vmul.f32 %v283, 1.442695
      %v285 = vpow.pop %v284
      %v286 = vsel %vm279, %v285, 0.0
      %287 = vadd.xlane.f32.xlu0 %v286
      %v288 = vpop.xlane.xlu0 %287
      %v289 = vrcp.pop %v288
      %v290 = vmul.f32 %v285, %v289
      %v291 = vpack.c.bf16 %v290, %v290
      %v293 = vsel %vm279, %v291, 0
      %vm295 = vcmask 1043456
      %v297 = vsel %vm295, %v225, 0
      %299 = vmatprep.subr.bf16.mxu0 0
      %300 = vmatpush1.bf16.msra.mxu0 %v297
      %301 = vmatprep.subr.bf16.mxu0 0
      %302 = vmatpush1.bf16.msra.mxu0 0
      %303 = vmatprep.subr.bf16.mxu0 0
      %304 = vmatpush1.bf16.msra.mxu0 0
      %305 = vmatprep.subr.bf16.mxu0 0
      %306 = vmatpush1.bf16.msra.mxu0 0
      %307 = vmatprep.subr.bf16.mxu0 0
      %308 = vmatpush1.bf16.msra.mxu0 0
      %309 = vmatprep.subr.bf16.mxu0 0
      %310 = vmatpush1.bf16.msra.mxu0 0
      %311 = vmatprep.subr.bf16.mxu0 0
      %312 = vmatpush1.bf16.msra.mxu0 0
      %313 = vmatprep.subr.bf16.mxu0 0
      %314 = vmatpush1.bf16.msra.mxu0 0
      %315 = vmatprep.subr.bf16.mxu0 0
      %316 = vmatpush1.bf16.msra.mxu0 0
      %317 = vmatprep.subr.bf16.mxu0 0
      %318 = vmatpush1.bf16.msra.mxu0 0
      %319 = vmatprep.subr.bf16.mxu0 0
      %320 = vmatpush1.bf16.msra.mxu0 0
      %321 = vmatprep.subr.bf16.mxu0 0
      %322 = vmatpush1.bf16.msra.mxu0 0
      %323 = vmatprep.subr.bf16.mxu0 0
      %324 = vmatpush1.bf16.msra.mxu0 0
      %325 = vmatprep.subr.bf16.mxu0 0
      %326 = vmatpush1.bf16.msra.mxu0 0
      %327 = vmatprep.subr.bf16.mxu0 0
      %328 = vmatpush1.bf16.msra.mxu0 0
      %329 = vmatprep.subr.bf16.mxu0 0
      %330 = vmatpush1.bf16.msra.mxu0 0
      %331 = vmatprep.mubr.bf16.mxu0 0
      %332 = vmatmul.mubr.bf16.gmra.mrb[0].mxu0 %v293
      %v333 = vpop.f32.mrb[0].mxu0
      %v334 = vadd.f32 0.0, %v333
      %v335 = vpop.f32.mrb[0].mxu0
      %v336 = vpop.f32.mrb[0].mxu0
      %v337 = vpop.f32.mrb[0].mxu0
      %338 = vdwg.mxu0
      %v339 = vpack.c.bf16 %v334, %v334
      %vm340 = vcmask 257024
      %341 = vst.msk [vmem:[%s221] sm:$0xf] %vm340, %v339
      %v343 = vunpack.c.l.b16 %v223
      %v344 = vpack.c.b16 %v343, %v343
      %345 = vrot.lane.b32.xlu0 %v344, 96
      %v346 = vpop.permute.xlu0 %345
      %v348 = vunpack.c.l.b16 %v224
      %v349 = vpack.c.b16 %v348, %v348
      %350 = vrot.lane.b32.xlu0 %v349, 96
      %v351 = vpop.permute.xlu0 %350
      %v353 = vsel %vm231, %v346, 0
      %v356 = vsel %vm231, %v351, 0
      %358 = vmatprep.subr.bf16.mxu0 0
      %359 = vmatpush1.bf16.xpose.msra.mxu0 %v356
      %360 = vmatprep.subr.bf16.mxu0 0
      %361 = vmatpush1.bf16.xpose.msra.mxu0 0
      %362 = vmatprep.subr.bf16.mxu0 0
      %363 = vmatpush1.bf16.xpose.msra.mxu0 0
      %364 = vmatprep.subr.bf16.mxu0 0
      %365 = vmatpush1.bf16.xpose.msra.mxu0 0
      %366 = vmatprep.subr.bf16.mxu0 0
      %367 = vmatpush1.bf16.xpose.msra.mxu0 0
      %368 = vmatprep.subr.bf16.mxu0 0
      %369 = vmatpush1.bf16.xpose.msra.mxu0 0
      %370 = vmatprep.subr.bf16.mxu0 0
      %371 = vmatpush1.bf16.xpose.msra.mxu0 0
      %372 = vmatprep.subr.bf16.mxu0 0
      %373 = vmatpush1.bf16.xpose.msra.mxu0 0
      %374 = vmatprep.subr.bf16.mxu0 0
      %375 = vmatpush1.bf16.xpose.msra.mxu0 0
      %376 = vmatprep.subr.bf16.mxu0 0
      %377 = vmatpush1.bf16.xpose.msra.mxu0 0
      %378 = vmatprep.subr.bf16.mxu0 0
      %379 = vmatpush1.bf16.xpose.msra.mxu0 0
      %380 = vmatprep.subr.bf16.mxu0 0
      %381 = vmatpush1.bf16.xpose.msra.mxu0 0
      %382 = vmatprep.subr.bf16.mxu0 0
      %383 = vmatpush1.bf16.xpose.msra.mxu0 0
      %384 = vmatprep.subr.bf16.mxu0 0
      %385 = vmatpush1.bf16.xpose.msra.mxu0 0
      %386 = vmatprep.subr.bf16.mxu0 0
      %387 = vmatpush1.bf16.xpose.msra.mxu0 0
      %388 = vmatprep.subr.bf16.mxu0 0
      %389 = vmatpush1.bf16.xpose.msra.mxu0 0
      %390 = vmatprep.mubr.bf16.mxu0 0
      %391 = vmatmul.mubr.bf16.gmra.mrb[0].mxu0 %v353
      %v392 = vpop.f32.mrb[0].mxu0
      %v393 = vadd.f32 0.0, %v392
      %v394 = vpop.f32.mrb[0].mxu0
      %v395 = vpop.f32.mrb[0].mxu0
      %v396 = vpop.f32.mrb[0].mxu0
      %397 = vdwg.mxu0
      %v398 = vsel %vm230, %v393, -1e+30
      %v399 = vsel %vm279, %v398, -inf
      %400 = vmax.xlane.f32.xlu0 %v399
      %v401 = vpop.xlane.xlu0 %400
      %v402 = vsub.f32 %v398, %v401
      %v403 = vmul.f32 %v402, 1.442695
      %v404 = vpow.pop %v403
      %v405 = vsel %vm279, %v404, 0.0
      %406 = vadd.xlane.f32.xlu0 %v405
      %v407 = vpop.xlane.xlu0 %406
      %v408 = vrcp.pop %v407
      %v409 = vmul.f32 %v404, %v408
      %v410 = vpack.c.bf16 %v409, %v409
      %v412 = vunpack.c.l.b16 %v225
      %v413 = vpack.c.b16 %v412, %v412
      %414 = vrot.lane.b32.xlu0 %v413, 96
      %v415 = vpop.permute.xlu0 %414
      %v417 = vsel %vm279, %v410, 0
      %v420 = vsel %vm295, %v415, 0
      %422 = vmatprep.subr.bf16.mxu0 0
      %423 = vmatpush1.bf16.msra.mxu0 %v420
      %424 = vmatprep.subr.bf16.mxu0 0
      %425 = vmatpush1.bf16.msra.mxu0 0
      %426 = vmatprep.subr.bf16.mxu0 0
      %427 = vmatpush1.bf16.msra.mxu0 0
      %428 = vmatprep.subr.bf16.mxu0 0
      %429 = vmatpush1.bf16.msra.mxu0 0
      %430 = vmatprep.subr.bf16.mxu0 0
      %431 = vmatpush1.bf16.msra.mxu0 0
      %432 = vmatprep.subr.bf16.mxu0 0
      %433 = vmatpush1.bf16.msra.mxu0 0
      %434 = vmatprep.subr.bf16.mxu0 0
      %435 = vmatpush1.bf16.msra.mxu0 0
      %436 = vmatprep.subr.bf16.mxu0 0
      %437 = vmatpush1.bf16.msra.mxu0 0
      %438 = vmatprep.subr.bf16.mxu0 0
      %439 = vmatpush1.bf16.msra.mxu0 0
      %440 = vmatprep.subr.bf16.mxu0 0
      %441 = vmatpush1.bf16.msra.mxu0 0
      %442 = vmatprep.subr.bf16.mxu0 0
      %443 = vmatpush1.bf16.msra.mxu0 0
      %444 = vmatprep.subr.bf16.mxu0 0
      %445 = vmatpush1.bf16.msra.mxu0 0
      %446 = vmatprep.subr.bf16.mxu0 0
      %447 = vmatpush1.bf16.msra.mxu0 0
      %448 = vmatprep.subr.bf16.mxu0 0
      %449 = vmatpush1.bf16.msra.mxu0 0
      %450 = vmatprep.subr.bf16.mxu0 0
      %451 = vmatpush1.bf16.msra.mxu0 0
      %452 = vmatprep.subr.bf16.mxu0 0
      %453 = vmatpush1.bf16.msra.mxu0 0
      %454 = vmatprep.mubr.bf16.mxu0 0
      %455 = vmatmul.mubr.bf16.gmra.mrb[0].mxu0 %v417
      %v456 = vpop.f32.mrb[0].mxu0
      %v457 = vadd.f32 0.0, %v456
      %v458 = vpop.f32.mrb[0].mxu0
      %v459 = vpop.f32.mrb[0].mxu0
      %v460 = vpop.f32.mrb[0].mxu0
      %461 = vdwg.mxu0
      %v462 = vpack.c.bf16 %v457, %v457
      %v464 = vunpack.c.l.b16 %v462
      %v465 = vpack.c.b16 %v464, %v464
      %466 = vrot.lane.b32.xlu0 %v465, 32
      %v467 = vpop.permute.xlu0 %466
      %vm469 = vcmask 519424
      %470 = vst.msk [vmem:[%s221] sm:$0xf] %vm469, %v467
      %471 = vrot.lane.b32.xlu0 %v344, 64
      %v472 = vpop.permute.xlu0 %471
      %473 = vrot.lane.b32.xlu0 %v349, 64
      %v474 = vpop.permute.xlu0 %473
      %v476 = vsel %vm231, %v472, 0
      %v479 = vsel %vm231, %v474, 0
      %481 = vmatprep.subr.bf16.mxu0 0
      %482 = vmatpush1.bf16.xpose.msra.mxu0 %v479
      %483 = vmatprep.subr.bf16.mxu0 0
      %484 = vmatpush1.bf16.xpose.msra.mxu0 0
      %485 = vmatprep.subr.bf16.mxu0 0
      %486 = vmatpush1.bf16.xpose.msra.mxu0 0
      %487 = vmatprep.subr.bf16.mxu0 0
      %488 = vmatpush1.bf16.xpose.msra.mxu0 0
      %489 = vmatprep.subr.bf16.mxu0 0
      %490 = vmatpush1.bf16.xpose.msra.mxu0 0
      %491 = vmatprep.subr.bf16.mxu0 0
      %492 = vmatpush1.bf16.xpose.msra.mxu0 0
      %493 = vmatprep.subr.bf16.mxu0 0
      %494 = vmatpush1.bf16.xpose.msra.mxu0 0
      %495 = vmatprep.subr.bf16.mxu0 0
      %496 = vmatpush1.bf16.xpose.msra.mxu0 0
      %497 = vmatprep.subr.bf16.mxu0 0
      %498 = vmatpush1.bf16.xpose.msra.mxu0 0
      %499 = vmatprep.subr.bf16.mxu0 0
      %500 = vmatpush1.bf16.xpose.msra.mxu0 0
      %501 = vmatprep.subr.bf16.mxu0 0
      %502 = vmatpush1.bf16.xpose.msra.mxu0 0
      %503 = vmatprep.subr.bf16.mxu0 0
      %504 = vmatpush1.bf16.xpose.msra.mxu0 0
      %505 = vmatprep.subr.bf16.mxu0 0
      %506 = vmatpush1.bf16.xpose.msra.mxu0 0
      %507 = vmatprep.subr.bf16.mxu0 0
      %508 = vmatpush1.bf16.xpose.msra.mxu0 0
      %509 = vmatprep.subr.bf16.mxu0 0
      %510 = vmatpush1.bf16.xpose.msra.mxu0 0
      %511 = vmatprep.subr.bf16.mxu0 0
      %512 = vmatpush1.bf16.xpose.msra.mxu0 0
      %513 = vmatprep.mubr.bf16.mxu0 0
      %514 = vmatmul.mubr.bf16.gmra.mrb[0].mxu0 %v476
      %v515 = vpop.f32.mrb[0].mxu0
      %v516 = vadd.f32 0.0, %v515
      %v517 = vpop.f32.mrb[0].mxu0
      %v518 = vpop.f32.mrb[0].mxu0
      %v519 = vpop.f32.mrb[0].mxu0
      %520 = vdwg.mxu0
      %v521 = vsel %vm230, %v516, -1e+30
      %v522 = vsel %vm279, %v521, -inf
      %523 = vmax.xlane.f32.xlu0 %v522
      %v524 = vpop.xlane.xlu0 %523
      %v525 = vsub.f32 %v521, %v524
      %v526 = vmul.f32 %v525, 1.442695
      %v527 = vpow.pop %v526
      %v528 = vsel %vm279, %v527, 0.0
      %529 = vadd.xlane.f32.xlu0 %v528
      %v530 = vpop.xlane.xlu0 %529
      %v531 = vrcp.pop %v530
      %v532 = vmul.f32 %v527, %v531
      %v533 = vpack.c.bf16 %v532, %v532
      %534 = vrot.lane.b32.xlu0 %v413, 64
      %v535 = vpop.permute.xlu0 %534
      %v537 = vsel %vm279, %v533, 0
      %v540 = vsel %vm295, %v535, 0
      %542 = vmatprep.subr.bf16.mxu0 0
      %543 = vmatpush1.bf16.msra.mxu0 %v540
      %544 = vmatprep.subr.bf16.mxu0 0
      %545 = vmatpush1.bf16.msra.mxu0 0
      %546 = vmatprep.subr.bf16.mxu0 0
      %547 = vmatpush1.bf16.msra.mxu0 0
      %548 = vmatprep.subr.bf16.mxu0 0
      %549 = vmatpush1.bf16.msra.mxu0 0
      %550 = vmatprep.subr.bf16.mxu0 0
      %551 = vmatpush1.bf16.msra.mxu0 0
      %552 = vmatprep.subr.bf16.mxu0 0
      %553 = vmatpush1.bf16.msra.mxu0 0
      %554 = vmatprep.subr.bf16.mxu0 0
      %555 = vmatpush1.bf16.msra.mxu0 0
      %556 = vmatprep.subr.bf16.mxu0 0
      %557 = vmatpush1.bf16.msra.mxu0 0
      %558 = vmatprep.subr.bf16.mxu0 0
      %559 = vmatpush1.bf16.msra.mxu0 0
      %560 = vmatprep.subr.bf16.mxu0 0
      %561 = vmatpush1.bf16.msra.mxu0 0
      %562 = vmatprep.subr.bf16.mxu0 0
      %563 = vmatpush1.bf16.msra.mxu0 0
      %564 = vmatprep.subr.bf16.mxu0 0
      %565 = vmatpush1.bf16.msra.mxu0 0
      %566 = vmatprep.subr.bf16.mxu0 0
      %567 = vmatpush1.bf16.msra.mxu0 0
      %568 = vmatprep.subr.bf16.mxu0 0
      %569 = vmatpush1.bf16.msra.mxu0 0
      %570 = vmatprep.subr.bf16.mxu0 0
      %571 = vmatpush1.bf16.msra.mxu0 0
      %572 = vmatprep.subr.bf16.mxu0 0
      %573 = vmatpush1.bf16.msra.mxu0 0
      %574 = vmatprep.mubr.bf16.mxu0 0
      %575 = vmatmul.mubr.bf16.gmra.mrb[0].mxu0 %v537
      %v576 = vpop.f32.mrb[0].mxu0
      %v577 = vadd.f32 0.0, %v576
      %v578 = vpop.f32.mrb[0].mxu0
      %v579 = vpop.f32.mrb[0].mxu0
      %v580 = vpop.f32.mrb[0].mxu0
      %581 = vdwg.mxu0
      %v582 = vpack.c.bf16 %v577, %v577
      %v584 = vunpack.c.l.b16 %v582
      %v585 = vpack.c.b16 %v584, %v584
      %586 = vrot.lane.b32.xlu0 %v585, 64
      %v587 = vpop.permute.xlu0 %586
      %vm589 = vcmask 781824
      %590 = vst.msk [vmem:[%s221] sm:$0xf] %vm589, %v587
      %591 = vrot.lane.b32.xlu0 %v344, 32
      %v592 = vpop.permute.xlu0 %591
      %593 = vrot.lane.b32.xlu0 %v349, 32
      %v594 = vpop.permute.xlu0 %593
      %v596 = vsel %vm231, %v592, 0
      %v599 = vsel %vm231, %v594, 0
      %601 = vmatprep.subr.bf16.mxu0 0
      %602 = vmatpush1.bf16.xpose.msra.mxu0 %v599
      %603 = vmatprep.subr.bf16.mxu0 0
      %604 = vmatpush1.bf16.xpose.msra.mxu0 0
      %605 = vmatprep.subr.bf16.mxu0 0
      %606 = vmatpush1.bf16.xpose.msra.mxu0 0
      %607 = vmatprep.subr.bf16.mxu0 0
      %608 = vmatpush1.bf16.xpose.msra.mxu0 0
      %609 = vmatprep.subr.bf16.mxu0 0
      %610 = vmatpush1.bf16.xpose.msra.mxu0 0
      %611 = vmatprep.subr.bf16.mxu0 0
      %612 = vmatpush1.bf16.xpose.msra.mxu0 0
      %613 = vmatprep.subr.bf16.mxu0 0
      %614 = vmatpush1.bf16.xpose.msra.mxu0 0
      %615 = vmatprep.subr.bf16.mxu0 0
      %616 = vmatpush1.bf16.xpose.msra.mxu0 0
      %617 = vmatprep.subr.bf16.mxu0 0
      %618 = vmatpush1.bf16.xpose.msra.mxu0 0
      %619 = vmatprep.subr.bf16.mxu0 0
      %620 = vmatpush1.bf16.xpose.msra.mxu0 0
      %621 = vmatprep.subr.bf16.mxu0 0
      %622 = vmatpush1.bf16.xpose.msra.mxu0 0
      %623 = vmatprep.subr.bf16.mxu0 0
      %624 = vmatpush1.bf16.xpose.msra.mxu0 0
      %625 = vmatprep.subr.bf16.mxu0 0
      %626 = vmatpush1.bf16.xpose.msra.mxu0 0
      %627 = vmatprep.subr.bf16.mxu0 0
      %628 = vmatpush1.bf16.xpose.msra.mxu0 0
      %629 = vmatprep.subr.bf16.mxu0 0
      %630 = vmatpush1.bf16.xpose.msra.mxu0 0
      %631 = vmatprep.subr.bf16.mxu0 0
      %632 = vmatpush1.bf16.xpose.msra.mxu0 0
      %633 = vmatprep.mubr.bf16.mxu0 0
      %634 = vmatmul.mubr.bf16.gmra.mrb[0].mxu0 %v596
      %v635 = vpop.f32.mrb[0].mxu0
      %v636 = vadd.f32 0.0, %v635
      %v637 = vpop.f32.mrb[0].mxu0
      %v638 = vpop.f32.mrb[0].mxu0
      %v639 = vpop.f32.mrb[0].mxu0
      %640 = vdwg.mxu0
      %v641 = vsel %vm230, %v636, -1e+30
      %v642 = vsel %vm279, %v641, -inf
      %643 = vmax.xlane.f32.xlu0 %v642
      %v644 = vpop.xlane.xlu0 %643
      %v645 = vsub.f32 %v641, %v644
      %v646 = vmul.f32 %v645, 1.442695
      %v647 = vpow.pop %v646
      %v648 = vsel %vm279, %v647, 0.0
      %649 = vadd.xlane.f32.xlu0 %v648
      %v650 = vpop.xlane.xlu0 %649
      %v651 = vrcp.pop %v650
      %v652 = vmul.f32 %v647, %v651
      %v653 = vpack.c.bf16 %v652, %v652
      %654 = vrot.lane.b32.xlu0 %v413, 32
      %v655 = vpop.permute.xlu0 %654
      %v657 = vsel %vm279, %v653, 0
      %v660 = vsel %vm295, %v655, 0
      %662 = vmatprep.subr.bf16.mxu0 0
      %663 = vmatpush1.bf16.msra.mxu0 %v660
      %664 = vmatprep.subr.bf16.mxu0 0
      %665 = vmatpush1.bf16.msra.mxu0 0
      %666 = vmatprep.subr.bf16.mxu0 0
      %667 = vmatpush1.bf16.msra.mxu0 0
      %668 = vmatprep.subr.bf16.mxu0 0
      %669 = vmatpush1.bf16.msra.mxu0 0
      %670 = vmatprep.subr.bf16.mxu0 0
      %671 = vmatpush1.bf16.msra.mxu0 0
      %672 = vmatprep.subr.bf16.mxu0 0
      %673 = vmatpush1.bf16.msra.mxu0 0
      %674 = vmatprep.subr.bf16.mxu0 0
      %675 = vmatpush1.bf16.msra.mxu0 0
      %676 = vmatprep.subr.bf16.mxu0 0
      %677 = vmatpush1.bf16.msra.mxu0 0
      %678 = vmatprep.subr.bf16.mxu0 0
      %679 = vmatpush1.bf16.msra.mxu0 0
      %680 = vmatprep.subr.bf16.mxu0 0
      %681 = vmatpush1.bf16.msra.mxu0 0
      %682 = vmatprep.subr.bf16.mxu0 0
      %683 = vmatpush1.bf16.msra.mxu0 0
      %684 = vmatprep.subr.bf16.mxu0 0
      %685 = vmatpush1.bf16.msra.mxu0 0
      %686 = vmatprep.subr.bf16.mxu0 0
      %687 = vmatpush1.bf16.msra.mxu0 0
      %688 = vmatprep.subr.bf16.mxu0 0
      %689 = vmatpush1.bf16.msra.mxu0 0
      %690 = vmatprep.subr.bf16.mxu0 0
      %691 = vmatpush1.bf16.msra.mxu0 0
      %692 = vmatprep.subr.bf16.mxu0 0
      %693 = vmatpush1.bf16.msra.mxu0 0
      %694 = vmatprep.mubr.bf16.mxu0 0
      %695 = vmatmul.mubr.bf16.gmra.mrb[0].mxu0 %v657
      %v696 = vpop.f32.mrb[0].mxu0
      %v697 = vadd.f32 0.0, %v696
      %v698 = vpop.f32.mrb[0].mxu0
      %v699 = vpop.f32.mrb[0].mxu0
      %v700 = vpop.f32.mrb[0].mxu0
      %701 = vdwg.mxu0
      %v702 = vpack.c.bf16 %v697, %v697
      %v704 = vunpack.c.l.b16 %v702
      %v705 = vpack.c.b16 %v704, %v704
      %706 = vrot.lane.b32.xlu0 %v705, 96
      %v707 = vpop.permute.xlu0 %706
      %vm709 = vcmask 1044224
      %710 = vst.msk [vmem:[%s221] sm:$0xf] %vm709, %v707
      %p711 = scmp.lt.s32.totalorder %s21, 1
      %s712 = scalar_select %p711, %s21, 1
      %s713 = smul.addr %s712, 4
      %s714 = scalar_lea.vmem %s4, %s713
      // Predicated region
      $region33: #{transformer_forward.26} parent=31 // pred_check
        %p715 = pneg %p117
      $region34: #{transformer_forward.26} parent=31 // pred_check_branch
        %717 = sbr.rel (%p715) target = $region36
      $region35: #{transformer_forward.26} parent=31 // pred_region
        _
      $region36: #{transformer_forward.26} parent=31 // pred_fallthru
        _
    $region32: #{transformer_forward.26} parent=5 // pred_fallthru
      _
    %p718 = scmp.le.s32.totalorder 2, %s16
    // Predicated region
    $region37: #{transformer_forward.26} parent=5 // pred_check
      %p719 = pneg %p718
    $region38: #{transformer_forward.26} parent=5 // pred_check_branch
      %721 = sbr.rel (%p719) target = $region40
    $region39: #{transformer_forward.26} parent=5 // pred_region
      %s722 = ssub.s32 %s16, 2
      // Predicated region
      $region41: #{transformer_forward.26} parent=39 // pred_check
        %p723 = pneg %p123
      $region42: #{transformer_forward.26} parent=39 // pred_check_branch
        %725 = sbr.rel (%p723) target = $region44
      $region43: #{transformer_forward.26} parent=39 // pred_region
        %p726 = scmp.lt.s32.totalorder %s22, 1
        %s727 = scalar_select %p726, %s22, 1
        %s728 = smul.addr %s727, 4
        %s729 = scalar_lea.vmem %s4, %s728
      $region44: #{transformer_forward.26} parent=39 // pred_fallthru
        _
    $region40: #{transformer_forward.26} parent=5 // pred_fallthru
      _
  $region6: #{transformer_forward.26} parent=0 // loop_footer
    %s20 = sadd.s32 1, %s16
  $region7: #{transformer_forward.26} parent=0 // loop_footer_branch
    %15 = sbr.rel target = $region3
  $region8: #{transformer_forward.26} parent=0 // loop_exit
    _

// kernel: transformer_forward.49
$region0: #{transformer_forward.49}
  #allocation0 [shape = 'u32[]', space=smem, size = 0x4, offset = 0x4, fixed_abs, tag = 'smem constant byte address 0x4 - core index']
  #allocation1 [shape = 'u32[144,128]{1,0:T(1,128)}', space=vmem, size = 0x12000, scoped, tag = 'internal scratch']
  #allocation2 [shape = 'f32[16,128]{1,0:T(8,128)}', space=vmem, size = 0x2000, scoped, tag = 'scratch operand']
  %s0 = inlined_call_operand.vmem [shape: bf16[16,128], index: 0, kind: input, shape index: {}]
  %s1 = inlined_call_operand.vmem [shape: bf16[128,128], index: 1, kind: input, shape index: {}]
  %s2 = inlined_call_operand.vmem [shape: f32[1,128], index: 2, kind: input, shape index: {}]
  %s3 = inlined_call_operand.hbm [shape: f32[16,128], index: 3, kind: output, shape index: {}]
  %s4 = sld [smem:[#allocation0]]
  $region30: #{transformer_forward.49} parent=0
    _
  %s6 = ssub.s32 1, %s4
  %s7 = scalar_select 0, %s6, %s4
  $region1: #{transformer_forward.49} parent=0
    #allocation3 [shape = 'u8[8192]{0}', space=vmem, size = 0x2000, scoped, tag = 'output window, operand 0, single buffered']
    #allocation4 [shape = 's32[1]{0}', space=sflag, size = 0x4, scoped, tag = 'scoped memory for transformer_forward.49']
    %8 = vsyncpa [#allocation4], 0
    // Predicated region
    $region2: #{transformer_forward.49} parent=1 // pred_check
      _
    $region3: #{transformer_forward.49} parent=1 // pred_check_branch
      %10 = sbr.rel (0) target = $region5
    $region4: #{transformer_forward.49} parent=1 // pred_region
      _
    $region5: #{transformer_forward.49} parent=1 // pred_fallthru
      _
    // Predicated region
    $region6: #{transformer_forward.49} parent=1 // pred_check
      _
    $region7: #{transformer_forward.49} parent=1 // pred_check_branch
      %12 = sbr.rel (0) target = $region9
    $region8: #{transformer_forward.49} parent=1 // pred_region
      _
    $region9: #{transformer_forward.49} parent=1 // pred_fallthru
      _
    // Predicated region
    $region10: #{transformer_forward.49} parent=1 // pred_check
      _
    $region11: #{transformer_forward.49} parent=1 // pred_check_branch
      %14 = sbr.rel (0) target = $region13
    $region12: #{transformer_forward.49} parent=1 // pred_region
      _
    $region13: #{transformer_forward.49} parent=1 // pred_fallthru
      _
    %p16 = scmp.eq.s32.totalorder 0, 0
    // Predicated region
    $region14: #{transformer_forward.49} parent=1 // pred_check
      %p17 = pneg %p16
    $region15: #{transformer_forward.49} parent=1 // pred_check_branch
      %19 = sbr.rel (%p17) target = $region17
    $region16: #{transformer_forward.49} parent=1 // pred_region
      %20 = vst [vmem:[#allocation2] sm:$0xff] 0.0
      %21 = vst [vmem:[#allocation2 + $0x8] sm:$0xff] 0.0
    $region17: #{transformer_forward.49} parent=1 // pred_fallthru
      _
    %v22 = vld [vmem:[#allocation2] sm:$0xff]
    %v23 = vld [vmem:[#allocation2 + $0x8] sm:$0xff]
    %v24 = vld [vmem:[%s0] sm:$0xf]
    %v25 = vld [vmem:[%s0 + $0x4] sm:$0xf]
    %v26 = vld [vmem:[%s1] sm:$0xf]
    %v27 = vld [vmem:[%s1 + $0x4] sm:$0xf]
    %v28 = vld [vmem:[%s1 + $0x8] sm:$0xf]
    %v29 = vld [vmem:[%s1 + $0xc] sm:$0xf]
    %v30 = vld [vmem:[%s1 + $0x10] sm:$0xf]
    %v31 = vld [vmem:[%s1 + $0x14] sm:$0xf]
    %v32 = vld [vmem:[%s1 + $0x18] sm:$0xf]
    %v33 = vld [vmem:[%s1 + $0x1c] sm:$0xf]
    %v34 = vld [vmem:[%s1 + $0x20] sm:$0xf]
    %v35 = vld [vmem:[%s1 + $0x24] sm:$0xf]
    %v36 = vld [vmem:[%s1 + $0x28] sm:$0xf]
    %v37 = vld [vmem:[%s1 + $0x2c] sm:$0xf]
    %v38 = vld [vmem:[%s1 + $0x30] sm:$0xf]
    %v39 = vld [vmem:[%s1 + $0x34] sm:$0xf]
    %v40 = vld [vmem:[%s1 + $0x38] sm:$0xf]
    %v41 = vld [vmem:[%s1 + $0x3c] sm:$0xf]
    %v44 = vunpack.c.l.b16 %v24
    %v45 = vunpack.c.l.b16 %v25
    %v46 = vpack.c.b16 %v45, %v44
    %v64 = vunpack.c.l.b16 %v26
    %v65 = vunpack.c.l.b16 %v27
    %v66 = vunpack.c.l.b16 %v28
    %v67 = vunpack.c.l.b16 %v29
    %v68 = vunpack.c.l.b16 %v30
    %v69 = vunpack.c.l.b16 %v31
    %v70 = vunpack.c.l.b16 %v32
    %v71 = vunpack.c.l.b16 %v33
    %v72 = vunpack.c.l.b16 %v34
    %v73 = vunpack.c.l.b16 %v35
    %v74 = vunpack.c.l.b16 %v36
    %v75 = vunpack.c.l.b16 %v37
    %v76 = vunpack.c.l.b16 %v38
    %v77 = vunpack.c.l.b16 %v39
    %v78 = vunpack.c.l.b16 %v40
    %v79 = vunpack.c.l.b16 %v41
    %v80 = vpack.c.b16 %v65, %v64
    %v81 = vpack.c.b16 %v67, %v66
    %v82 = vpack.c.b16 %v69, %v68
    %v83 = vpack.c.b16 %v71, %v70
    %v84 = vpack.c.b16 %v73, %v72
    %v85 = vpack.c.b16 %v75, %v74
    %v86 = vpack.c.b16 %v77, %v76
    %v87 = vpack.c.b16 %v79, %v78
    %96 = vmatprep.subr.bf16.mxu0 0
    %97 = vmatpush1.bf16.msra.mxu0 %v80
    %98 = vmatprep.subr.bf16.mxu0 0
    %99 = vmatpush1.bf16.msra.mxu0 %v81
    %100 = vmatprep.subr.bf16.mxu0 0
    %101 = vmatpush1.bf16.msra.mxu0 %v82
    %102 = vmatprep.subr.bf16.mxu0 0
    %103 = vmatpush1.bf16.msra.mxu0 %v83
    %104 = vmatprep.subr.bf16.mxu0 0
    %105 = vmatpush1.bf16.msra.mxu0 %v84
    %106 = vmatprep.subr.bf16.mxu0 0
    %107 = vmatpush1.bf16.msra.mxu0 %v85
    %108 = vmatprep.subr.bf16.mxu0 0
    %109 = vmatpush1.bf16.msra.mxu0 %v86
    %110 = vmatprep.subr.bf16.mxu0 0
    %111 = vmatpush1.bf16.msra.mxu0 %v87
    %112 = vmatprep.subr.bf16.mxu0 0
    %113 = vmatpush1.bf16.msra.mxu0 0
    %114 = vmatprep.subr.bf16.mxu0 0
    %115 = vmatpush1.bf16.msra.mxu0 0
    %116 = vmatprep.subr.bf16.mxu0 0
    %117 = vmatpush1.bf16.msra.mxu0 0
    %118 = vmatprep.subr.bf16.mxu0 0
    %119 = vmatpush1.bf16.msra.mxu0 0
    %120 = vmatprep.subr.bf16.mxu0 0
    %121 = vmatpush1.bf16.msra.mxu0 0
    %122 = vmatprep.subr.bf16.mxu0 0
    %123 = vmatpush1.bf16.msra.mxu0 0
    %124 = vmatprep.subr.bf16.mxu0 0
    %125 = vmatpush1.bf16.msra.mxu0 0
    %126 = vmatprep.subr.bf16.mxu0 0
    %127 = vmatpush1.bf16.msra.mxu0 0
    %128 = vmatprep.mubr.bf16.mxu0 0
    %129 = vmatmul.mubr.bf16.gmra.mrb[0].mxu0 %v46
    %v130 = vpop.f32.mrb[0].mxu0
    %v131 = vadd.f32 0.0, %v130
    %v132 = vpop.f32.mrb[0].mxu0
    %v133 = vpop.f32.mrb[0].mxu0
    %v134 = vadd.f32 0.0, %v133
    %v135 = vpop.f32.mrb[0].mxu0
    %136 = vdwg.mxu0
    %v137 = vadd.f32 %v22, %v131
    %v138 = vadd.f32 %v23, %v134
    %139 = vst [vmem:[#allocation2] sm:$0xff] %v137
    %140 = vst [vmem:[#allocation2 + $0x8] sm:$0xff] %v138
    // Predicated region
    $region18: #{transformer_forward.49} parent=1 // pred_check
      %p141 = pneg %p16
    $region19: #{transformer_forward.49} parent=1 // pred_check_branch
      %143 = sbr.rel (%p141) target = $region21
    $region20: #{transformer_forward.49} parent=1 // pred_region
      %v144 = vld [vmem:[#allocation2] sm:$0xff]
      %v145 = vld [vmem:[#allocation2 + $0x8] sm:$0xff]
      %v146 = vld [vmem:[%s2] sm:$0x1]
      %v148 = vlaneseq
      %v149 = vshrl.u32 %v148, 7
      %v150 = vsub.s32 0, %v149
      %v151 = vrot.slane %v146, %v150
      %v153 = vadd.f32 %v144, %v151
      %v154 = vadd.f32 %v145, %v151
      %155 = vst [vmem:[#allocation3] sm:$0xff] %v153
      %156 = vst [vmem:[#allocation3 + $0x8] sm:$0xff] %v154
    $region21: #{transformer_forward.49} parent=1 // pred_fallthru
      _
    // Predicated region
    $region22: #{transformer_forward.49} parent=1 // pred_check
      _
    $region23: #{transformer_forward.49} parent=1 // pred_check_branch
      %158 = sbr.rel (0) target = $region25
    $region24: #{transformer_forward.49} parent=1 // pred_region
      %s160 = ssub.s32 256, 256
      %161 = vsyncadd [#allocation4], %s160
      %s162 = sshll.u32 [#allocation3], 4
      %s163 = int_to_ptr.vmem [resolvable:$true] %s162
      %168 = dma.vmem_to_hbm [thread:$0]  %s163, 256, %s3, [#allocation4], 128, 128, 8
    $region25: #{transformer_forward.49} parent=1 // pred_fallthru
      _
    // Predicated region
    $region26: #{transformer_forward.49} parent=1 // pred_check
      _
    $region27: #{transformer_forward.49} parent=1 // pred_check_branch
      %170 = sbr.rel (0) target = $region29
    $region28: #{transformer_forward.49} parent=1 // pred_region
      %171 = dma.done [#allocation4], 256
    $region29: #{transformer_forward.49} parent=1 // pred_fallthru
      _
    %172 = vsyncpa [#allocation4], 1

</llo_original>
